<compile_context>
chip_gen: v7x
topology: tpu7x:2x2x1
jax: 0.10.0
libtpu: 0.0.40
codegen_flags: <defaults>
</compile_context>

<pallas_src>
import jax
import jax.numpy as jnp
import numpy as np
from jax import lax
from jax.experimental import pallas as pl
from jax.experimental.pallas import tpu as pltpu

BN_EPS = 1e-5
VMEM_LIMIT_BYTES = 32 * 1024 * 1024  # fits v7x scoped budget; tiles here are << this


def _round_up(x, m):
    return (x + m - 1) // m * m


# ---------------- Pass A: conv0 (raw h) + BN_0 batch statistics ----------------
def _conv0_kernel(x_ref, w1_ref, h_ref, sum_ref, sq_ref):
    i = pl.program_id(0)
    # (TILE_M, C_in) bf16 @ (C_in, C_mid_p) bf16 -> f32 on the MXU.
    h = jnp.dot(x_ref[...], w1_ref[...], preferred_element_type=jnp.float32)
    h_ref[...] = h

    @pl.when(i == 0)
    def _():
        sum_ref[...] = jnp.zeros_like(sum_ref)
        sq_ref[...] = jnp.zeros_like(sq_ref)

    # Zero-padded rows contribute 0 to both sums (no conv bias), so no mask needed here.
    sum_ref[...] += jnp.sum(h, axis=0, keepdims=True)
    sq_ref[...] += jnp.sum(h * h, axis=0, keepdims=True)


# ------ Pass B: folded BN_0 + ReLU + conv1 (raw y) + BN_1 statistics ------
def _make_conv1_kernel(tile_m, m_real, need_mask):
    def kernel(h_ref, scale1_ref, shift1_ref, w2_ref, y_ref, sum_ref, sq_ref):
        i = pl.program_id(0)
        h = h_ref[...] * scale1_ref[...] + shift1_ref[...]    # folded BN_0
        h = jnp.maximum(h, 0.0)                               # ReLU_0
        y = jnp.dot(h.astype(jnp.bfloat16), w2_ref[...],
                    preferred_element_type=jnp.float32)       # conv1 (bias cancelled by BN_1)
        if need_mask:
            # Padded rows would otherwise contribute relu(shift1) @ w2 to the stats.
            row = i * tile_m + lax.broadcasted_iota(jnp.int32, (tile_m, 1), 0)
            y = jnp.where(row < m_real, y, 0.0)
        y_ref[...] = y

        @pl.when(i == 0)
        def _():
            sum_ref[...] = jnp.zeros_like(sum_ref)
            sq_ref[...] = jnp.zeros_like(sq_ref)

        sum_ref[...] += jnp.sum(y, axis=0, keepdims=True)
        sq_ref[...] += jnp.sum(y * y, axis=0, keepdims=True)

    return kernel


# ------ Pass C: normalize y in place (streaming, megacore-parallel) ------
def _norm_kernel(y_ref, scale2_ref, shift2_ref, o_ref):
    o_ref[...] = y_ref[...] * scale2_ref[...] + shift2_ref[...]


def fcn_head_forward(x_ncdhw, params, *, tile_m=512):
    """x_ncdhw: (N, C_in, D, H, W) float32. Returns (N, C_out, D, H, W) float32."""
    w1, _b1, g1, be1, w2, _b2, g2, be2 = params   # conv biases cancel under training-mode BN
    N, C_in, D, H, W = x_ncdhw.shape
    C_mid = w1.shape[1]
    C_out = w2.shape[1]
    M = N * D * H * W

    # NCDHW -> NDHWC -> (M, C_in), cast to bf16 (convert fuses into the transpose copy).
    x_bf = jnp.transpose(x_ncdhw, (0, 2, 3, 4, 1)).reshape(M, C_in).astype(jnp.bfloat16)

    tm = min(tile_m, _round_up(M, 8))
    M_pad = _round_up(M, tm)
    need_mask = M_pad != M
    if need_mask:
        x_bf = jnp.pad(x_bf, ((0, M_pad - M), (0, 0)))
    grid_m = M_pad // tm

    # Lane-dense intermediates: pad channel dims up to multiples of 128 (sliced back below).
    C_mid_p = _round_up(C_mid, 128)
    C_out_p = _round_up(C_out, 128)
    w1_p = jnp.pad(w1, ((0, 0), (0, C_mid_p - C_mid))).astype(jnp.bfloat16)
    g1_p = jnp.pad(g1, ((0, 0), (0, C_mid_p - C_mid)))
    be1_p = jnp.pad(be1, ((0, 0), (0, C_mid_p - C_mid)))
    w2_p = jnp.pad(w2, ((0, C_mid_p - C_mid), (0, C_out_p - C_out))).astype(jnp.bfloat16)
    g2_p = jnp.pad(g2, ((0, 0), (0, C_out_p - C_out)))
    be2_p = jnp.pad(be2, ((0, 0), (0, C_out_p - C_out)))

    def resident(shape):  # DMA'd once, VMEM-resident across the whole grid
        return pl.BlockSpec(shape, lambda i: (0, 0))

    # ---- Pass A: conv0 -> raw h + BN_0 statistics ----
    h_raw, sum1, sq1 = pl.pallas_call(
        _conv0_kernel,
        out_shape=(jax.ShapeDtypeStruct((M_pad, C_mid_p), jnp.float32),
                   jax.ShapeDtypeStruct((1, C_mid_p), jnp.float32),
                   jax.ShapeDtypeStruct((1, C_mid_p), jnp.float32)),
        grid=(grid_m,),
        in_specs=[pl.BlockSpec((tm, C_in), lambda i: (i, 0)),
                  resident((C_in, C_mid_p))],
        out_specs=(pl.BlockSpec((tm, C_mid_p), lambda i: (i, 0)),
                   resident((1, C_mid_p)),
                   resident((1, C_mid_p))),
        compiler_params=pltpu.CompilerParams(
            dimension_semantics=("arbitrary",),
            vmem_limit_bytes=VMEM_LIMIT_BYTES),
    )(x_bf, w1_p)

    inv_m = 1.0 / float(M)
    mu1 = sum1 * inv_m
    var1 = jnp.maximum(sq1 * inv_m - mu1 * mu1, 0.0)
    scale1 = g1_p * lax.rsqrt(var1 + BN_EPS)          # (1, C_mid_p) f32
    shift1 = be1_p - mu1 * scale1                     # (1, C_mid_p) f32

    # ---- Pass B: BN_0 affine + ReLU + conv1 -> raw y + BN_1 statistics ----
    y_raw, sum2, sq2 = pl.pallas_call(
        _make_conv1_kernel(tm, M, need_mask),
        out_shape=(jax.ShapeDtypeStruct((M_pad, C_out_p), jnp.float32),
                   jax.ShapeDtypeStruct((1, C_out_p), jnp.float32),
                   jax.ShapeDtypeStruct((1, C_out_p), jnp.float32)),
        grid=(grid_m,),
        in_specs=[pl.BlockSpec((tm, C_mid_p), lambda i: (i, 0)),
                  resident((1, C_mid_p)),
                  resident((1, C_mid_p)),
                  resident((C_mid_p, C_out_p))],
        out_specs=(pl.BlockSpec((tm, C_out_p), lambda i: (i, 0)),
                   resident((1, C_out_p)),
                   resident((1, C_out_p))),
        compiler_params=pltpu.CompilerParams(
            dimension_semantics=("arbitrary",),
            vmem_limit_bytes=VMEM_LIMIT_BYTES),
    )(h_raw, scale1, shift1, w2_p)

    mu2 = sum2 * inv_m
    var2 = jnp.maximum(sq2 * inv_m - mu2 * mu2, 0.0)
    scale2 = g2_p * lax.rsqrt(var2 + BN_EPS)          # (1, C_out_p) f32
    shift2 = be2_p - mu2 * scale2                     # (1, C_out_p) f32

    # ---- Pass C: normalize y in place (input_output_aliases) ----
    y = pl.pallas_call(
        _norm_kernel,
        out_shape=jax.ShapeDtypeStruct((M_pad, C_out_p), jnp.float32),
        grid=(grid_m,),
        in_specs=[pl.BlockSpec((tm, C_out_p), lambda i: (i, 0)),
                  resident((1, C_out_p)),
                  resident((1, C_out_p))],
        out_specs=pl.BlockSpec((tm, C_out_p), lambda i: (i, 0)),
        input_output_aliases={0: 0},
        compiler_params=pltpu.CompilerParams(
            dimension_semantics=("parallel",),
            vmem_limit_bytes=VMEM_LIMIT_BYTES),
    )(y_raw, scale2, shift2)

    # Slice away row / lane padding, restore NCDHW.
    y = y[:M, :C_out]
    return jnp.transpose(y.reshape(N, D, H, W, C_out), (0, 4, 1, 2, 3))


def reference_forward(x_ncdhw, params):
    """Pure-JAX reference of the module's forward (training-mode BN, conv biases kept).

    Uses the same bf16 matmul precision as the kernel so the check is apples-to-apples;
    the biases are retained here to demonstrate that dropping them in-kernel is exact.
    """
    w1, b1, g1, be1, w2, b2, g2, be2 = params
    N, C_in, D, H, W = x_ncdhw.shape
    C_out = w2.shape[1]
    x2d = jnp.transpose(x_ncdhw, (0, 2, 3, 4, 1)).reshape(-1, C_in)

    h = jnp.dot(x2d.astype(jnp.bfloat16), w1.astype(jnp.bfloat16),
                preferred_element_type=jnp.float32) + b1
    mu1 = h.mean(0, keepdims=True)
    var1 = ((h - mu1) ** 2).mean(0, keepdims=True)
    h = (h - mu1) * lax.rsqrt(var1 + BN_EPS) * g1 + be1
    h = jnp.maximum(h, 0.0)

    y = jnp.dot(h.astype(jnp.bfloat16), w2.astype(jnp.bfloat16),
                preferred_element_type=jnp.float32) + b2
    mu2 = y.mean(0, keepdims=True)
    var2 = ((y - mu2) ** 2).mean(0, keepdims=True)
    y = (y - mu2) * lax.rsqrt(var2 + BN_EPS) * g2 + be2

    return jnp.transpose(y.reshape(N, D, H, W, C_out), (0, 4, 1, 2, 3))


def make_params(key, c_in, c_mid, c_out):
    """Deterministic synthetic parameters (shapes follow the module __init__)."""
    ks = jax.random.split(key, 8)

    def conv_w(k, ci, co):
        # PyTorch Conv3d weight is (co, ci, 1, 1, 1); stored in matmul form (ci, co).
        bound = 1.0 / np.sqrt(ci)
        return jax.random.uniform(k, (ci, co), jnp.float32, -bound, bound)

    def conv_b(k, ci, co):
        bound = 1.0 / np.sqrt(ci)
        return jax.random.uniform(k, (1, co), jnp.float32, -bound, bound)

    w1 = conv_w(ks[0], c_in, c_mid)
    b1 = conv_b(ks[1], c_in, c_mid)
    g1 = 1.0 + 0.1 * jax.random.normal(ks[2], (1, c_mid), jnp.float32)
    be1 = 0.1 * jax.random.normal(ks[3], (1, c_mid), jnp.float32)

    w2 = conv_w(ks[4], c_mid, c_out)
    b2 = conv_b(ks[5], c_mid, c_out)
    g2 = 1.0 + 0.1 * jax.random.normal(ks[6], (1, c_out), jnp.float32)
    be2 = 0.1 * jax.random.normal(ks[7], (1, c_out), jnp.float32)

    return (w1, b1, g1, be1, w2, b2, g2, be2)


if __name__ == "__main__":
    # Small shapes consistent with the module: FCN_head(in_dim=32, mid_dim=[16], out_dim=64)
    # on NCDHW = (2, 32, 3, 10, 10)  ->  M = 600 rows: exercises multi-tile stats
    # accumulation (2 tiles of 512) and the masked ragged last tile.
    N, C_IN, C_MID, C_OUT, D, H, W = 2, 32, 16, 64, 3, 10, 10

    key = jax.random.PRNGKey(0)
    kx, kp = jax.random.split(key)
    x = jax.random.normal(kx, (N, C_IN, D, H, W), jnp.float32)
    params = make_params(kp, C_IN, C_MID, C_OUT)

    fwd = jax.jit(fcn_head_forward)
    out = jax.block_until_ready(fwd(x, params))
    ref = jax.block_until_ready(reference_forward(x, params))

    assert out.shape == (N, C_OUT, D, H, W), out.shape
    np.testing.assert_allclose(np.asarray(out), np.asarray(ref), rtol=1e-2, atol=1e-2)

    print("KERNEL_OK")
</pallas_src>

<mosaic_0001>
module attributes {stable_mosaic.version = 11 : i64} {
  func.func @_conv0_kernel(%arg0: i32, %arg1: memref<512x32xbf16, #tpu.memory_space<vmem>>, %arg2: memref<32x128xbf16, #tpu.memory_space<vmem>>, %arg3: memref<512x128xf32, #tpu.memory_space<vmem>>, %arg4: memref<1x128xf32, #tpu.memory_space<vmem>>, %arg5: memref<1x128xf32, #tpu.memory_space<vmem>>) attributes {dimension_semantics = [#tpu.dimension_semantics<arbitrary>], iteration_bounds = array<i64: 2>, scalar_prefetch = 0 : i64, scratch_operands = 0 : i64, tpu.core_type = #tpu.core_type<tc>, window_params = [{transform_indices = @transform_0, window_bounds = array<i64: 512, 32>}, {pipeline_mode = #tpu.pipeline_mode<synchronous>, transform_indices = @transform_1, window_bounds = array<i64: 32, 128>}, {transform_indices = @transform_2, window_bounds = array<i64: 512, 128>}, {pipeline_mode = #tpu.pipeline_mode<synchronous>, transform_indices = @transform_3, window_bounds = array<i64: 1, 128>}, {pipeline_mode = #tpu.pipeline_mode<synchronous>, transform_indices = @transform_4, window_bounds = array<i64: 1, 128>}]} {
    %c0 = arith.constant 0 : index
    %c0_0 = arith.constant 0 : index
    %0 = vector.load %arg1[%c0, %c0_0] : memref<512x32xbf16, #tpu.memory_space<vmem>>, vector<512x32xbf16>
    %c0_1 = arith.constant 0 : index
    %c0_2 = arith.constant 0 : index
    %1 = vector.load %arg2[%c0_1, %c0_2] : memref<32x128xbf16, #tpu.memory_space<vmem>>, vector<32x128xbf16>
    %cst = arith.constant dense<0.000000e+00> : vector<512x128xf32>
    %2 = tpu.matmul %0, %1, %cst {dimension_numbers = #tpu.dot_dimension_numbers<[1], [0], [0], [1], [0, 0, 1, 1], [], []>} : vector<512x32xbf16>, vector<32x128xbf16>, vector<512x128xf32> -> vector<512x128xf32>
    %c0_3 = arith.constant 0 : index
    %c0_4 = arith.constant 0 : index
    %3 = vector.load %arg3[%c0_3, %c0_4] : memref<512x128xf32, #tpu.memory_space<vmem>>, vector<512x128xf32>
    tpu.vector_store %arg3[%c0_3, %c0_4], %2 {strides = array<i32>} : memref<512x128xf32, #tpu.memory_space<vmem>>, vector<512x128xf32>,
    %c0_i32 = arith.constant 0 : i32
    %4 = arith.cmpi eq, %arg0, %c0_i32 : i32
    %5 = arith.extui %4 : i1 to i32
    %c0_i32_5 = arith.constant 0 : i32
    %6 = arith.cmpi ne, %5, %c0_i32_5 : i32
    scf.if %6 {
      %cst_16 = arith.constant 0.000000e+00 : f32
      %18 = vector.broadcast %cst_16 : f32 to vector<1x128xf32>
      %c0_17 = arith.constant 0 : index
      %c0_18 = arith.constant 0 : index
      %19 = vector.load %arg4[%c0_17, %c0_18] : memref<1x128xf32, #tpu.memory_space<vmem>>, vector<1x128xf32>
      tpu.vector_store %arg4[%c0_17, %c0_18], %18 {strides = array<i32>} : memref<1x128xf32, #tpu.memory_space<vmem>>, vector<1x128xf32>,
      %cst_19 = arith.constant 0.000000e+00 : f32
      %20 = vector.broadcast %cst_19 : f32 to vector<1x128xf32>
      %c0_20 = arith.constant 0 : index
      %c0_21 = arith.constant 0 : index
      %21 = vector.load %arg5[%c0_20, %c0_21] : memref<1x128xf32, #tpu.memory_space<vmem>>, vector<1x128xf32>
      tpu.vector_store %arg5[%c0_20, %c0_21], %20 {strides = array<i32>} : memref<1x128xf32, #tpu.memory_space<vmem>>, vector<1x128xf32>,
    } else {
    }
    %c0_6 = arith.constant 0 : index
    %c0_7 = arith.constant 0 : index
    %7 = vector.load %arg4[%c0_6, %c0_7] : memref<1x128xf32, #tpu.memory_space<vmem>>, vector<1x128xf32>
    %cst_8 = arith.constant dense<0.000000e+00> : vector<128xf32>
    %8 = vector.multi_reduction <add>, %2, %cst_8 [0] : vector<512x128xf32> to vector<128xf32>
    %9 = vector.shape_cast %8 : vector<128xf32> to vector<1x128xf32>
    %10 = arith.addf %7, %9 : vector<1x128xf32>
    %c0_9 = arith.constant 0 : index
    %c0_10 = arith.constant 0 : index
    %11 = vector.load %arg4[%c0_9, %c0_10] : memref<1x128xf32, #tpu.memory_space<vmem>>, vector<1x128xf32>
    tpu.vector_store %arg4[%c0_9, %c0_10], %10 {strides = array<i32>} : memref<1x128xf32, #tpu.memory_space<vmem>>, vector<1x128xf32>,
    %c0_11 = arith.constant 0 : index
    %c0_12 = arith.constant 0 : index
    %12 = vector.load %arg5[%c0_11, %c0_12] : memref<1x128xf32, #tpu.memory_space<vmem>>, vector<1x128xf32>
    %13 = arith.mulf %2, %2 : vector<512x128xf32>
    %cst_13 = arith.constant dense<0.000000e+00> : vector<128xf32>
    %14 = vector.multi_reduction <add>, %13, %cst_13 [0] : vector<512x128xf32> to vector<128xf32>
    %15 = vector.shape_cast %14 : vector<128xf32> to vector<1x128xf32>
    %16 = arith.addf %12, %15 : vector<1x128xf32>
    %c0_14 = arith.constant 0 : index
    %c0_15 = arith.constant 0 : index
    %17 = vector.load %arg5[%c0_14, %c0_15] : memref<1x128xf32, #tpu.memory_space<vmem>>, vector<1x128xf32>
    tpu.vector_store %arg5[%c0_14, %c0_15], %16 {strides = array<i32>} : memref<1x128xf32, #tpu.memory_space<vmem>>, vector<1x128xf32>,
    return
  }
  func.func @transform_0(%arg0: i32) -> (i32, i32) {
    %c0_i32 = arith.constant 0 : i32
    %c0_i32_0 = arith.constant 0 : i32
    return %arg0, %c0_i32 : i32, i32
  }
  func.func @transform_1(%arg0: i32) -> (i32, i32) {
    %c0_i32 = arith.constant 0 : i32
    %c0_i32_0 = arith.constant 0 : i32
    %c0_i32_1 = arith.constant 0 : i32
    return %c0_i32, %c0_i32_0 : i32, i32
  }
  func.func @transform_2(%arg0: i32) -> (i32, i32) {
    %c0_i32 = arith.constant 0 : i32
    %c0_i32_0 = arith.constant 0 : i32
    return %arg0, %c0_i32 : i32, i32
  }
  func.func @transform_3(%arg0: i32) -> (i32, i32) {
    %c0_i32 = arith.constant 0 : i32
    %c0_i32_0 = arith.constant 0 : i32
    %c0_i32_1 = arith.constant 0 : i32
    return %c0_i32, %c0_i32_0 : i32, i32
  }
  func.func @transform_4(%arg0: i32) -> (i32, i32) {
    %c0_i32 = arith.constant 0 : i32
    %c0_i32_0 = arith.constant 0 : i32
    %c0_i32_1 = arith.constant 0 : i32
    return %c0_i32, %c0_i32_0 : i32, i32
  }
}

module attributes {stable_mosaic.version = 11 : i64} {
  func.func @kernel(%arg0: i32, %arg1: memref<512x128xf32, #tpu.memory_space<vmem>>, %arg2: memref<1x128xf32, #tpu.memory_space<vmem>>, %arg3: memref<1x128xf32, #tpu.memory_space<vmem>>, %arg4: memref<128x128xbf16, #tpu.memory_space<vmem>>, %arg5: memref<512x128xf32, #tpu.memory_space<vmem>>, %arg6: memref<1x128xf32, #tpu.memory_space<vmem>>, %arg7: memref<1x128xf32, #tpu.memory_space<vmem>>) attributes {dimension_semantics = [#tpu.dimension_semantics<arbitrary>], iteration_bounds = array<i64: 2>, scalar_prefetch = 0 : i64, scratch_operands = 0 : i64, tpu.core_type = #tpu.core_type<tc>, window_params = [{transform_indices = @transform_0, window_bounds = array<i64: 512, 128>}, {pipeline_mode = #tpu.pipeline_mode<synchronous>, transform_indices = @transform_1, window_bounds = array<i64: 1, 128>}, {pipeline_mode = #tpu.pipeline_mode<synchronous>, transform_indices = @transform_2, window_bounds = array<i64: 1, 128>}, {pipeline_mode = #tpu.pipeline_mode<synchronous>, transform_indices = @transform_3, window_bounds = array<i64: 128, 128>}, {transform_indices = @transform_4, window_bounds = array<i64: 512, 128>}, {pipeline_mode = #tpu.pipeline_mode<synchronous>, transform_indices = @transform_5, window_bounds = array<i64: 1, 128>}, {pipeline_mode = #tpu.pipeline_mode<synchronous>, transform_indices = @transform_6, window_bounds = array<i64: 1, 128>}]} {
    %c0 = arith.constant 0 : index
    %c0_0 = arith.constant 0 : index
    %0 = vector.load %arg1[%c0, %c0_0] : memref<512x128xf32, #tpu.memory_space<vmem>>, vector<512x128xf32>
    %c0_1 = arith.constant 0 : index
    %c0_2 = arith.constant 0 : index
    %1 = vector.load %arg2[%c0_1, %c0_2] : memref<1x128xf32, #tpu.memory_space<vmem>>, vector<1x128xf32>
    %2 = vector.broadcast %1 : vector<1x128xf32> to vector<512x128xf32>
    %3 = arith.mulf %0, %2 : vector<512x128xf32>
    %c0_3 = arith.constant 0 : index
    %c0_4 = arith.constant 0 : index
    %4 = vector.load %arg3[%c0_3, %c0_4] : memref<1x128xf32, #tpu.memory_space<vmem>>, vector<1x128xf32>
    %5 = vector.broadcast %4 : vector<1x128xf32> to vector<512x128xf32>
    %6 = arith.addf %3, %5 : vector<512x128xf32>
    %cst = arith.constant 0.000000e+00 : f32
    %7 = vector.broadcast %cst : f32 to vector<512x128xf32>
    %8 = arith.maximumf %6, %7 : vector<512x128xf32>
    %9 = arith.truncf %8 : vector<512x128xf32> to vector<512x128xbf16>
    %c0_5 = arith.constant 0 : index
    %c0_6 = arith.constant 0 : index
    %10 = vector.load %arg4[%c0_5, %c0_6] : memref<128x128xbf16, #tpu.memory_space<vmem>>, vector<128x128xbf16>
    %cst_7 = arith.constant dense<0.000000e+00> : vector<512x128xf32>
    %11 = tpu.matmul %9, %10, %cst_7 {dimension_numbers = #tpu.dot_dimension_numbers<[1], [0], [0], [1], [0, 0, 1, 1], [], []>} : vector<512x128xbf16>, vector<128x128xbf16>, vector<512x128xf32> -> vector<512x128xf32>
    %c512_i32 = arith.constant 512 : i32
    %12 = arith.muli %arg0, %c512_i32 : i32
    %13 = tpu.iota {dimensions = array<i32: 0>} : vector<512x1xi32>
    %14 = vector.broadcast %12 : i32 to vector<512x1xi32>
    %15 = arith.addi %14, %13 : vector<512x1xi32>
    %c600_i32 = arith.constant 600 : i32
    %16 = vector.broadcast %c600_i32 : i32 to vector<512x1xi32>
    %17 = arith.cmpi slt, %15, %16 : vector<512x1xi32>
    %cst_8 = arith.constant 0.000000e+00 : f32
    %18 = vector.shape_cast %17 : vector<512x1xi1> to vector<512x1xi1>
    %19 = vector.broadcast %18 : vector<512x1xi1> to vector<512x128xi1>
    %20 = vector.broadcast %cst_8 : f32 to vector<512x128xf32>
    %21 = arith.select %19, %11, %20 : vector<512x128xi1>, vector<512x128xf32>
    %c0_9 = arith.constant 0 : index
    %c0_10 = arith.constant 0 : index
    %22 = vector.load %arg5[%c0_9, %c0_10] : memref<512x128xf32, #tpu.memory_space<vmem>>, vector<512x128xf32>
    tpu.vector_store %arg5[%c0_9, %c0_10], %21 {strides = array<i32>} : memref<512x128xf32, #tpu.memory_space<vmem>>, vector<512x128xf32>,
    %c0_i32 = arith.constant 0 : i32
    %23 = arith.cmpi eq, %arg0, %c0_i32 : i32
    %24 = arith.extui %23 : i1 to i32
    %c0_i32_11 = arith.constant 0 : i32
    %25 = arith.cmpi ne, %24, %c0_i32_11 : i32
    scf.if %25 {
      %cst_22 = arith.constant 0.000000e+00 : f32
      %37 = vector.broadcast %cst_22 : f32 to vector<1x128xf32>
      %c0_23 = arith.constant 0 : index
      %c0_24 = arith.constant 0 : index
      %38 = vector.load %arg6[%c0_23, %c0_24] : memref<1x128xf32, #tpu.memory_space<vmem>>, vector<1x128xf32>
      tpu.vector_store %arg6[%c0_23, %c0_24], %37 {strides = array<i32>} : memref<1x128xf32, #tpu.memory_space<vmem>>, vector<1x128xf32>,
      %cst_25 = arith.constant 0.000000e+00 : f32
      %39 = vector.broadcast %cst_25 : f32 to vector<1x128xf32>
      %c0_26 = arith.constant 0 : index
      %c0_27 = arith.constant 0 : index
      %40 = vector.load %arg7[%c0_26, %c0_27] : memref<1x128xf32, #tpu.memory_space<vmem>>, vector<1x128xf32>
      tpu.vector_store %arg7[%c0_26, %c0_27], %39 {strides = array<i32>} : memref<1x128xf32, #tpu.memory_space<vmem>>, vector<1x128xf32>,
    } else {
    }
    %c0_12 = arith.constant 0 : index
    %c0_13 = arith.constant 0 : index
    %26 = vector.load %arg6[%c0_12, %c0_13] : memref<1x128xf32, #tpu.memory_space<vmem>>, vector<1x128xf32>
    %cst_14 = arith.constant dense<0.000000e+00> : vector<128xf32>
    %27 = vector.multi_reduction <add>, %21, %cst_14 [0] : vector<512x128xf32> to vector<128xf32>
    %28 = vector.shape_cast %27 : vector<128xf32> to vector<1x128xf32>
    %29 = arith.addf %26, %28 : vector<1x128xf32>
    %c0_15 = arith.constant 0 : index
    %c0_16 = arith.constant 0 : index
    %30 = vector.load %arg6[%c0_15, %c0_16] : memref<1x128xf32, #tpu.memory_space<vmem>>, vector<1x128xf32>
    tpu.vector_store %arg6[%c0_15, %c0_16], %29 {strides = array<i32>} : memref<1x128xf32, #tpu.memory_space<vmem>>, vector<1x128xf32>,
    %c0_17 = arith.constant 0 : index
    %c0_18 = arith.constant 0 : index
    %31 = vector.load %arg7[%c0_17, %c0_18] : memref<1x128xf32, #tpu.memory_space<vmem>>, vector<1x128xf32>
    %32 = arith.mulf %21, %21 : vector<512x128xf32>
    %cst_19 = arith.constant dense<0.000000e+00> : vector<128xf32>
    %33 = vector.multi_reduction <add>, %32, %cst_19 [0] : vector<512x128xf32> to vector<128xf32>
    %34 = vector.shape_cast %33 : vector<128xf32> to vector<1x128xf32>
    %35 = arith.addf %31, %34 : vector<1x128xf32>
    %c0_20 = arith.constant 0 : index
    %c0_21 = arith.constant 0 : index
    %36 = vector.load %arg7[%c0_20, %c0_21] : memref<1x128xf32, #tpu.memory_space<vmem>>, vector<1x128xf32>
    tpu.vector_store %arg7[%c0_20, %c0_21], %35 {strides = array<i32>} : memref<1x128xf32, #tpu.memory_space<vmem>>, vector<1x128xf32>,
    return
  }
  func.func @transform_0(%arg0: i32) -> (i32, i32) {
    %c0_i32 = arith.constant 0 : i32
    %c0_i32_0 = arith.constant 0 : i32
    return %arg0, %c0_i32 : i32, i32
  }
  func.func @transform_1(%arg0: i32) -> (i32, i32) {
    %c0_i32 = arith.constant 0 : i32
    %c0_i32_0 = arith.constant 0 : i32
    %c0_i32_1 = arith.constant 0 : i32
    return %c0_i32, %c0_i32_0 : i32, i32
  }
  func.func @transform_2(%arg0: i32) -> (i32, i32) {
    %c0_i32 = arith.constant 0 : i32
    %c0_i32_0 = arith.constant 0 : i32
    %c0_i32_1 = arith.constant 0 : i32
    return %c0_i32, %c0_i32_0 : i32, i32
  }
  func.func @transform_3(%arg0: i32) -> (i32, i32) {
    %c0_i32 = arith.constant 0 : i32
    %c0_i32_0 = arith.constant 0 : i32
    %c0_i32_1 = arith.constant 0 : i32
    return %c0_i32, %c0_i32_0 : i32, i32
  }
  func.func @transform_4(%arg0: i32) -> (i32, i32) {
    %c0_i32 = arith.constant 0 : i32
    %c0_i32_0 = arith.constant 0 : i32
    return %arg0, %c0_i32 : i32, i32
  }
  func.func @transform_5(%arg0: i32) -> (i32, i32) {
    %c0_i32 = arith.constant 0 : i32
    %c0_i32_0 = arith.constant 0 : i32
    %c0_i32_1 = arith.constant 0 : i32
    return %c0_i32, %c0_i32_0 : i32, i32
  }
  func.func @transform_6(%arg0: i32) -> (i32, i32) {
    %c0_i32 = arith.constant 0 : i32
    %c0_i32_0 = arith.constant 0 : i32
    %c0_i32_1 = arith.constant 0 : i32
    return %c0_i32, %c0_i32_0 : i32, i32
  }
}

module attributes {stable_mosaic.version = 11 : i64} {
  func.func @_norm_kernel(%arg0: i32, %arg1: memref<512x128xf32, #tpu.memory_space<vmem>>, %arg2: memref<1x128xf32, #tpu.memory_space<vmem>>, %arg3: memref<1x128xf32, #tpu.memory_space<vmem>>, %arg4: memref<512x128xf32, #tpu.memory_space<vmem>>) attributes {dimension_semantics = [#tpu.dimension_semantics<parallel>], iteration_bounds = array<i64: 2>, scalar_prefetch = 0 : i64, scratch_operands = 0 : i64, tpu.core_type = #tpu.core_type<tc>, window_params = [{transform_indices = @transform_0, window_bounds = array<i64: 512, 128>}, {pipeline_mode = #tpu.pipeline_mode<synchronous>, transform_indices = @transform_1, window_bounds = array<i64: 1, 128>}, {pipeline_mode = #tpu.pipeline_mode<synchronous>, transform_indices = @transform_2, window_bounds = array<i64: 1, 128>}, {transform_indices = @transform_3, window_bounds = array<i64: 512, 128>}]} {
    %c0 = arith.constant 0 : index
    %c0_0 = arith.constant 0 : index
    %0 = vector.load %arg1[%c0, %c0_0] : memref<512x128xf32, #tpu.memory_space<vmem>>, vector<512x128xf32>
    %c0_1 = arith.constant 0 : index
    %c0_2 = arith.constant 0 : index
    %1 = vector.load %arg2[%c0_1, %c0_2] : memref<1x128xf32, #tpu.memory_space<vmem>>, vector<1x128xf32>
    %2 = vector.broadcast %1 : vector<1x128xf32> to vector<512x128xf32>
    %3 = arith.mulf %0, %2 : vector<512x128xf32>
    %c0_3 = arith.constant 0 : index
    %c0_4 = arith.constant 0 : index
    %4 = vector.load %arg3[%c0_3, %c0_4] : memref<1x128xf32, #tpu.memory_space<vmem>>, vector<1x128xf32>
    %5 = vector.broadcast %4 : vector<1x128xf32> to vector<512x128xf32>
    %6 = arith.addf %3, %5 : vector<512x128xf32>
    %c0_5 = arith.constant 0 : index
    %c0_6 = arith.constant 0 : index
    %7 = vector.load %arg4[%c0_5, %c0_6] : memref<512x128xf32, #tpu.memory_space<vmem>>, vector<512x128xf32>
    tpu.vector_store %arg4[%c0_5, %c0_6], %6 {strides = array<i32>} : memref<512x128xf32, #tpu.memory_space<vmem>>, vector<512x128xf32>,
    return
  }
  func.func @transform_0(%arg0: i32) -> (i32, i32) {
    %c0_i32 = arith.constant 0 : i32
    %c0_i32_0 = arith.constant 0 : i32
    return %arg0, %c0_i32 : i32, i32
  }
  func.func @transform_1(%arg0: i32) -> (i32, i32) {
    %c0_i32 = arith.constant 0 : i32
    %c0_i32_0 = arith.constant 0 : i32
    %c0_i32_1 = arith.constant 0 : i32
    return %c0_i32, %c0_i32_0 : i32, i32
  }
  func.func @transform_2(%arg0: i32) -> (i32, i32) {
    %c0_i32 = arith.constant 0 : i32
    %c0_i32_0 = arith.constant 0 : i32
    %c0_i32_1 = arith.constant 0 : i32
    return %c0_i32, %c0_i32_0 : i32, i32
  }
  func.func @transform_3(%arg0: i32) -> (i32, i32) {
    %c0_i32 = arith.constant 0 : i32
    %c0_i32_0 = arith.constant 0 : i32
    return %arg0, %c0_i32 : i32, i32
  }
}

</mosaic_0001>

<llo_original>
// kernel: fcn_head_forward.5
$region0: #{fcn_head_forward.5}
  #allocation0 [shape = 'u32[]', space=smem, size = 0x4, offset = 0x4, fixed_abs, tag = 'smem constant byte address 0x4 - core index']
  #allocation1 [shape = 'u32[144,128]{1,0:T(1,128)}', space=vmem, size = 0x12000, scoped, tag = 'internal scratch']
  %s0 = inlined_call_operand.vmem [shape: f32[1024,128], index: 0, kind: input, shape index: {}, may-alias: {0,3}]
  %s1 = inlined_call_operand.vmem [shape: f32[1,128], index: 1, kind: input, shape index: {}]
  %s2 = inlined_call_operand.vmem [shape: f32[1,128], index: 2, kind: input, shape index: {}]
  %s3 = inlined_call_operand.vmem [shape: f32[1024,128], index: 3, kind: output, shape index: {}, may-alias: {0,3}]
  %s4 = sld [smem:[#allocation0]]
  $region45: #{fcn_head_forward.5} parent=0
    _
  %s6 = ssub.s32 1, %s4
  %s7 = scalar_select 0, %s6, %s4
  loop: start=0, step=1, limit=4
  $region2: #{fcn_head_forward.5} parent=0 // loop_pre_header
    _
  $region3: #{fcn_head_forward.5} parent=0 // loop_header
    %s9 = sphi 0, %s13
    %p10 = scmp.ge.s32.totalorder %s9, 4
    %s19 = sphi 0, %s21
    %s22 = sphi 0, %s19
    %s23 = sphi 0, %s22
    %s39 = sphi 0, %s23
    %s43 = sphi 0, %s43
    %s45 = sphi 0, %s43
    %s46 = sphi 0, %s45
    %s60 = sphi 0, %s46
    %s64 = sphi 0, %s64
    %s66 = sphi 0, %s64
    %s67 = sphi 0, %s66
    %s81 = sphi 0, %s67
    %s87 = sphi 0, %s89
    %s90 = sphi 0, %s87
    %s91 = sphi 0, %s90
    %s107 = sphi 0, %s91
  $region4: #{fcn_head_forward.5} parent=0 // loop_header_branch
    %12 = sbr.rel (%p10) target = $region8
  $region5: #{fcn_head_forward.5} parent=0 // loop_body
    %s14 = ssub.s32 %s9, 1
    %s15 = ssub.s32 %s9, 2
    %s16 = sadd.s32 %s9, 1
    %s17 = ssub.s32 %s9, %s16
    %p18 = scmp.eq.s32.totalorder %s17, 0
    %s20 = sadd.s32 %s19, 1
    %s21 = scalar_select %p18, %s19, %s20
    %p24 = pneg %p18
    %p25 = scmp.eq.s32.totalorder %s9, 1
    %p26 = por %p24, %p25
    %p27 = scmp.ne.s32.totalorder %s19, %s22
    %p28 = scmp.eq.s32.totalorder %s9, 0
    %p29 = por %p27, %p28
    %p30 = scmp.ne.s32.totalorder %s19, %s22
    %p31 = scmp.eq.s32.totalorder %s14, 1
    %p32 = por %p30, %p31
    %p33 = scmp.ne.s32.totalorder %s22, %s23
    %p34 = scmp.eq.s32.totalorder %s14, 0
    %p35 = por %p33, %p34
    %p36 = scmp.ne.s32.totalorder %s22, %s23
    %p37 = scmp.eq.s32.totalorder %s15, 1
    %p38 = por %p36, %p37
    %p40 = scmp.ne.s32.totalorder %s23, %s39
    %p41 = scmp.eq.s32.totalorder %s15, 0
    %p42 = por %p40, %p41
    %s44 = sadd.s32 %s43, 1
    %p47 = scmp.eq.s32.totalorder %s9, 1
    %p48 = scmp.ne.s32.totalorder %s43, %s45
    %p49 = scmp.eq.s32.totalorder %s9, 0
    %p50 = por %p48, %p49
    %p51 = scmp.ne.s32.totalorder %s43, %s45
    %p52 = scmp.eq.s32.totalorder %s14, 1
    %p53 = por %p51, %p52
    %p54 = scmp.ne.s32.totalorder %s45, %s46
    %p55 = scmp.eq.s32.totalorder %s14, 0
    %p56 = por %p54, %p55
    %p57 = scmp.ne.s32.totalorder %s45, %s46
    %p58 = scmp.eq.s32.totalorder %s15, 1
    %p59 = por %p57, %p58
    %p61 = scmp.ne.s32.totalorder %s46, %s60
    %p62 = scmp.eq.s32.totalorder %s15, 0
    %p63 = por %p61, %p62
    %s65 = sadd.s32 %s64, 1
    %p68 = scmp.eq.s32.totalorder %s9, 1
    %p69 = scmp.ne.s32.totalorder %s64, %s66
    %p70 = scmp.eq.s32.totalorder %s9, 0
    %p71 = por %p69, %p70
    %p72 = scmp.ne.s32.totalorder %s64, %s66
    %p73 = scmp.eq.s32.totalorder %s14, 1
    %p74 = por %p72, %p73
    %p75 = scmp.ne.s32.totalorder %s66, %s67
    %p76 = scmp.eq.s32.totalorder %s14, 0
    %p77 = por %p75, %p76
    %p78 = scmp.ne.s32.totalorder %s66, %s67
    %p79 = scmp.eq.s32.totalorder %s15, 1
    %p80 = por %p78, %p79
    %p82 = scmp.ne.s32.totalorder %s67, %s81
    %p83 = scmp.eq.s32.totalorder %s15, 0
    %p84 = por %p82, %p83
    %s85 = ssub.s32 %s9, %s16
    %p86 = scmp.eq.s32.totalorder %s85, 0
    %s88 = sadd.s32 %s87, 1
    %s89 = scalar_select %p86, %s87, %s88
    %p92 = pneg %p86
    %p93 = scmp.eq.s32.totalorder %s9, 1
    %p94 = por %p92, %p93
    %p95 = scmp.ne.s32.totalorder %s87, %s90
    %p96 = scmp.eq.s32.totalorder %s9, 0
    %p97 = por %p95, %p96
    %p98 = scmp.ne.s32.totalorder %s87, %s90
    %p99 = scmp.eq.s32.totalorder %s14, 1
    %p100 = por %p98, %p99
    %p101 = scmp.ne.s32.totalorder %s90, %s91
    %p102 = scmp.eq.s32.totalorder %s14, 0
    %p103 = por %p101, %p102
    %p104 = scmp.ne.s32.totalorder %s90, %s91
    %p105 = scmp.eq.s32.totalorder %s15, 1
    %p106 = por %p104, %p105
    %p108 = scmp.ne.s32.totalorder %s91, %s107
    %p109 = scmp.eq.s32.totalorder %s15, 0
    %p110 = por %p108, %p109
    %p111 = scmp.le.s32.totalorder 1, %s9
    %p112 = scmp.lt.s32.totalorder %s9, 3
    %p113 = pnand %p111, %p112
    %p114 = pneg %p113
    // Predicated region
    $region9: #{fcn_head_forward.5} parent=5 // pred_check
      _
    $region10: #{fcn_head_forward.5} parent=5 // pred_check_branch
      %116 = sbr.rel (%p113) target = $region12
    $region11: #{fcn_head_forward.5} parent=5 // pred_region
      %s117 = ssub.s32 %s9, 1
      // Predicated region
      $region13: #{fcn_head_forward.5} parent=11 // pred_check
        %p118 = pneg %p56
      $region14: #{fcn_head_forward.5} parent=11 // pred_check_branch
        %120 = sbr.rel (%p118) target = $region16
      $region15: #{fcn_head_forward.5} parent=11 // pred_region
        _
      $region16: #{fcn_head_forward.5} parent=11 // pred_fallthru
        _
      // Predicated region
      $region17: #{fcn_head_forward.5} parent=11 // pred_check
        %p121 = pneg %p77
      $region18: #{fcn_head_forward.5} parent=11 // pred_check_branch
        %123 = sbr.rel (%p121) target = $region20
      $region19: #{fcn_head_forward.5} parent=11 // pred_region
        _
      $region20: #{fcn_head_forward.5} parent=11 // pred_fallthru
        _
    $region12: #{fcn_head_forward.5} parent=5 // pred_fallthru
      _
    %p124 = scmp.lt.s32.totalorder %s9, 2
    // Predicated region
    $region21: #{fcn_head_forward.5} parent=5 // pred_check
      %p125 = pneg %p124
    $region22: #{fcn_head_forward.5} parent=5 // pred_check_branch
      %127 = sbr.rel (%p125) target = $region24
    $region23: #{fcn_head_forward.5} parent=5 // pred_region
      // Predicated region
      $region25: #{fcn_head_forward.5} parent=23 // pred_check
        %p128 = pneg %p29
      $region26: #{fcn_head_forward.5} parent=23 // pred_check_branch
        %130 = sbr.rel (%p128) target = $region28
      $region27: #{fcn_head_forward.5} parent=23 // pred_region
        %s131 = smul.u32 64, %s9
        %p132 = scmp.lt.s32.totalorder %s131, 127
        %s133 = scalar_select %p132, %s131, 127
        %s134 = smul.addr %s133, 8
        %s135 = scalar_lea.vmem %s0, %s134
        %s136 = smul.u32 64, %s9
      $region28: #{fcn_head_forward.5} parent=23 // pred_fallthru
        _
    $region24: #{fcn_head_forward.5} parent=5 // pred_fallthru
      _
    %p137 = scmp.le.s32.totalorder 1, %s9
    %p138 = scmp.lt.s32.totalorder %s9, 3
    %p139 = pnand %p137, %p138
    %p140 = pneg %p139
    // Predicated region
    $region29: #{fcn_head_forward.5} parent=5 // pred_check
      _
    $region30: #{fcn_head_forward.5} parent=5 // pred_check_branch
      %142 = sbr.rel (%p139) target = $region32
    $region31: #{fcn_head_forward.5} parent=5 // pred_region
      %s143 = ssub.s32 %s9, 1
      %s144 = smul.u32 64, %s14
      %p145 = scmp.lt.s32.totalorder %s144, 127
      %s146 = scalar_select %p145, %s144, 127
      %s147 = smul.addr %s146, 8
      %s148 = scalar_lea.vmem %s0, %s147
      %p149 = pneg %p35
      %p150 = pneg %p32
      %p151 = pneg %p56
      %p152 = pneg %p53
      %p153 = pneg %p77
      %p154 = pneg %p74
      %p155 = pneg %p103
      %p156 = pneg %p100
      %s157 = smul.u32 64, %s14
      %p158 = scmp.lt.s32.totalorder %s157, 127
      %s159 = scalar_select %p158, %s157, 127
      %s160 = smul.addr %s159, 8
      %s161 = scalar_lea.vmem %s3, %s160
      %s162 = smul.u32 64, %s14
      %p163 = scmp.lt.s32.totalorder %s162, 127
      %s164 = scalar_select %p163, %s162, 127
      %s165 = smul.addr %s164, 8
      %s166 = scalar_lea.vmem %s0, %s165
      %s167 = smul.u32 64, %s14
      %s168 = smul.u32 64, %s14
      %p169 = scmp.lt.s32.totalorder %s168, 127
      %s170 = scalar_select %p169, %s168, 127
      %s171 = smul.addr %s170, 8
      %s172 = scalar_lea.vmem %s3, %s171
      %s173 = smul.u32 64, %s14
      %v174 = vld [vmem:[%s166] sm:$0xff]
      %v175 = vld [vmem:[%s166 + $0x8] sm:$0xff]
      %v176 = vld [vmem:[%s166 + $0x10] sm:$0xff]
      %v177 = vld [vmem:[%s166 + $0x18] sm:$0xff]
      %v178 = vld [vmem:[%s166 + $0x20] sm:$0xff]
      %v179 = vld [vmem:[%s166 + $0x28] sm:$0xff]
      %v180 = vld [vmem:[%s166 + $0x30] sm:$0xff]
      %v181 = vld [vmem:[%s166 + $0x38] sm:$0xff]
      %v182 = vld [vmem:[%s166 + $0x40] sm:$0xff]
      %v183 = vld [vmem:[%s166 + $0x48] sm:$0xff]
      %v184 = vld [vmem:[%s166 + $0x50] sm:$0xff]
      %v185 = vld [vmem:[%s166 + $0x58] sm:$0xff]
      %v186 = vld [vmem:[%s166 + $0x60] sm:$0xff]
      %v187 = vld [vmem:[%s166 + $0x68] sm:$0xff]
      %v188 = vld [vmem:[%s166 + $0x70] sm:$0xff]
      %v189 = vld [vmem:[%s166 + $0x78] sm:$0xff]
      %v190 = vld [vmem:[%s166 + $0x80] sm:$0xff]
      %v191 = vld [vmem:[%s166 + $0x88] sm:$0xff]
      %v192 = vld [vmem:[%s166 + $0x90] sm:$0xff]
      %v193 = vld [vmem:[%s166 + $0x98] sm:$0xff]
      %v194 = vld [vmem:[%s166 + $0xa0] sm:$0xff]
      %v195 = vld [vmem:[%s166 + $0xa8] sm:$0xff]
      %v196 = vld [vmem:[%s166 + $0xb0] sm:$0xff]
      %v197 = vld [vmem:[%s166 + $0xb8] sm:$0xff]
      %v198 = vld [vmem:[%s166 + $0xc0] sm:$0xff]
      %v199 = vld [vmem:[%s166 + $0xc8] sm:$0xff]
      %v200 = vld [vmem:[%s166 + $0xd0] sm:$0xff]
      %v201 = vld [vmem:[%s166 + $0xd8] sm:$0xff]
      %v202 = vld [vmem:[%s166 + $0xe0] sm:$0xff]
      %v203 = vld [vmem:[%s166 + $0xe8] sm:$0xff]
      %v204 = vld [vmem:[%s166 + $0xf0] sm:$0xff]
      %v205 = vld [vmem:[%s166 + $0xf8] sm:$0xff]
      %v206 = vld [vmem:[%s166 + $0x100] sm:$0xff]
      %v207 = vld [vmem:[%s166 + $0x108] sm:$0xff]
      %v208 = vld [vmem:[%s166 + $0x110] sm:$0xff]
      %v209 = vld [vmem:[%s166 + $0x118] sm:$0xff]
      %v210 = vld [vmem:[%s166 + $0x120] sm:$0xff]
      %v211 = vld [vmem:[%s166 + $0x128] sm:$0xff]
      %v212 = vld [vmem:[%s166 + $0x130] sm:$0xff]
      %v213 = vld [vmem:[%s166 + $0x138] sm:$0xff]
      %v214 = vld [vmem:[%s166 + $0x140] sm:$0xff]
      %v215 = vld [vmem:[%s166 + $0x148] sm:$0xff]
      %v216 = vld [vmem:[%s166 + $0x150] sm:$0xff]
      %v217 = vld [vmem:[%s166 + $0x158] sm:$0xff]
      %v218 = vld [vmem:[%s166 + $0x160] sm:$0xff]
      %v219 = vld [vmem:[%s166 + $0x168] sm:$0xff]
      %v220 = vld [vmem:[%s166 + $0x170] sm:$0xff]
      %v221 = vld [vmem:[%s166 + $0x178] sm:$0xff]
      %v222 = vld [vmem:[%s166 + $0x180] sm:$0xff]
      %v223 = vld [vmem:[%s166 + $0x188] sm:$0xff]
      %v224 = vld [vmem:[%s166 + $0x190] sm:$0xff]
      %v225 = vld [vmem:[%s166 + $0x198] sm:$0xff]
      %v226 = vld [vmem:[%s166 + $0x1a0] sm:$0xff]
      %v227 = vld [vmem:[%s166 + $0x1a8] sm:$0xff]
      %v228 = vld [vmem:[%s166 + $0x1b0] sm:$0xff]
      %v229 = vld [vmem:[%s166 + $0x1b8] sm:$0xff]
      %v230 = vld [vmem:[%s166 + $0x1c0] sm:$0xff]
      %v231 = vld [vmem:[%s166 + $0x1c8] sm:$0xff]
      %v232 = vld [vmem:[%s166 + $0x1d0] sm:$0xff]
      %v233 = vld [vmem:[%s166 + $0x1d8] sm:$0xff]
      %v234 = vld [vmem:[%s166 + $0x1e0] sm:$0xff]
      %v235 = vld [vmem:[%s166 + $0x1e8] sm:$0xff]
      %v236 = vld [vmem:[%s166 + $0x1f0] sm:$0xff]
      %v237 = vld [vmem:[%s166 + $0x1f8] sm:$0xff]
      %v238 = vld [vmem:[%s1] sm:$0x1]
      %v240 = vlaneseq
      %v241 = vshrl.u32 %v240, 7
      %v242 = vsub.s32 0, %v241
      %v243 = vrot.slane %v238, %v242
      %v245 = vmul.f32 %v174, %v243
      %v246 = vmul.f32 %v175, %v243
      %v247 = vmul.f32 %v176, %v243
      %v248 = vmul.f32 %v177, %v243
      %v249 = vmul.f32 %v178, %v243
      %v250 = vmul.f32 %v179, %v243
      %v251 = vmul.f32 %v180, %v243
      %v252 = vmul.f32 %v181, %v243
      %v253 = vmul.f32 %v182, %v243
      %v254 = vmul.f32 %v183, %v243
      %v255 = vmul.f32 %v184, %v243
      %v256 = vmul.f32 %v185, %v243
      %v257 = vmul.f32 %v186, %v243
      %v258 = vmul.f32 %v187, %v243
      %v259 = vmul.f32 %v188, %v243
      %v260 = vmul.f32 %v189, %v243
      %v261 = vmul.f32 %v190, %v243
      %v262 = vmul.f32 %v191, %v243
      %v263 = vmul.f32 %v192, %v243
      %v264 = vmul.f32 %v193, %v243
      %v265 = vmul.f32 %v194, %v243
      %v266 = vmul.f32 %v195, %v243
      %v267 = vmul.f32 %v196, %v243
      %v268 = vmul.f32 %v197, %v243
      %v269 = vmul.f32 %v198, %v243
      %v270 = vmul.f32 %v199, %v243
      %v271 = vmul.f32 %v200, %v243
      %v272 = vmul.f32 %v201, %v243
      %v273 = vmul.f32 %v202, %v243
      %v274 = vmul.f32 %v203, %v243
      %v275 = vmul.f32 %v204, %v243
      %v276 = vmul.f32 %v205, %v243
      %v277 = vmul.f32 %v206, %v243
      %v278 = vmul.f32 %v207, %v243
      %v279 = vmul.f32 %v208, %v243
      %v280 = vmul.f32 %v209, %v243
      %v281 = vmul.f32 %v210, %v243
      %v282 = vmul.f32 %v211, %v243
      %v283 = vmul.f32 %v212, %v243
      %v284 = vmul.f32 %v213, %v243
      %v285 = vmul.f32 %v214, %v243
      %v286 = vmul.f32 %v215, %v243
      %v287 = vmul.f32 %v216, %v243
      %v288 = vmul.f32 %v217, %v243
      %v289 = vmul.f32 %v218, %v243
      %v290 = vmul.f32 %v219, %v243
      %v291 = vmul.f32 %v220, %v243
      %v292 = vmul.f32 %v221, %v243
      %v293 = vmul.f32 %v222, %v243
      %v294 = vmul.f32 %v223, %v243
      %v295 = vmul.f32 %v224, %v243
      %v296 = vmul.f32 %v225, %v243
      %v297 = vmul.f32 %v226, %v243
      %v298 = vmul.f32 %v227, %v243
      %v299 = vmul.f32 %v228, %v243
      %v300 = vmul.f32 %v229, %v243
      %v301 = vmul.f32 %v230, %v243
      %v302 = vmul.f32 %v231, %v243
      %v303 = vmul.f32 %v232, %v243
      %v304 = vmul.f32 %v233, %v243
      %v305 = vmul.f32 %v234, %v243
      %v306 = vmul.f32 %v235, %v243
      %v307 = vmul.f32 %v236, %v243
      %v308 = vmul.f32 %v237, %v243
      %v309 = vld [vmem:[%s2] sm:$0x1]
      %v311 = vlaneseq
      %v312 = vshrl.u32 %v311, 7
      %v313 = vsub.s32 0, %v312
      %v314 = vrot.slane %v309, %v313
      %v316 = vadd.f32 %v245, %v314
      %v317 = vadd.f32 %v246, %v314
      %v318 = vadd.f32 %v247, %v314
      %v319 = vadd.f32 %v248, %v314
      %v320 = vadd.f32 %v249, %v314
      %v321 = vadd.f32 %v250, %v314
      %v322 = vadd.f32 %v251, %v314
      %v323 = vadd.f32 %v252, %v314
      %v324 = vadd.f32 %v253, %v314
      %v325 = vadd.f32 %v254, %v314
      %v326 = vadd.f32 %v255, %v314
      %v327 = vadd.f32 %v256, %v314
      %v328 = vadd.f32 %v257, %v314
      %v329 = vadd.f32 %v258, %v314
      %v330 = vadd.f32 %v259, %v314
      %v331 = vadd.f32 %v260, %v314
      %v332 = vadd.f32 %v261, %v314
      %v333 = vadd.f32 %v262, %v314
      %v334 = vadd.f32 %v263, %v314
      %v335 = vadd.f32 %v264, %v314
      %v336 = vadd.f32 %v265, %v314
      %v337 = vadd.f32 %v266, %v314
      %v338 = vadd.f32 %v267, %v314
      %v339 = vadd.f32 %v268, %v314
      %v340 = vadd.f32 %v269, %v314
      %v341 = vadd.f32 %v270, %v314
      %v342 = vadd.f32 %v271, %v314
      %v343 = vadd.f32 %v272, %v314
      %v344 = vadd.f32 %v273, %v314
      %v345 = vadd.f32 %v274, %v314
      %v346 = vadd.f32 %v275, %v314
      %v347 = vadd.f32 %v276, %v314
      %v348 = vadd.f32 %v277, %v314
      %v349 = vadd.f32 %v278, %v314
      %v350 = vadd.f32 %v279, %v314
      %v351 = vadd.f32 %v280, %v314
      %v352 = vadd.f32 %v281, %v314
      %v353 = vadd.f32 %v282, %v314
      %v354 = vadd.f32 %v283, %v314
      %v355 = vadd.f32 %v284, %v314
      %v356 = vadd.f32 %v285, %v314
      %v357 = vadd.f32 %v286, %v314
      %v358 = vadd.f32 %v287, %v314
      %v359 = vadd.f32 %v288, %v314
      %v360 = vadd.f32 %v289, %v314
      %v361 = vadd.f32 %v290, %v314
      %v362 = vadd.f32 %v291, %v314
      %v363 = vadd.f32 %v292, %v314
      %v364 = vadd.f32 %v293, %v314
      %v365 = vadd.f32 %v294, %v314
      %v366 = vadd.f32 %v295, %v314
      %v367 = vadd.f32 %v296, %v314
      %v368 = vadd.f32 %v297, %v314
      %v369 = vadd.f32 %v298, %v314
      %v370 = vadd.f32 %v299, %v314
      %v371 = vadd.f32 %v300, %v314
      %v372 = vadd.f32 %v301, %v314
      %v373 = vadd.f32 %v302, %v314
      %v374 = vadd.f32 %v303, %v314
      %v375 = vadd.f32 %v304, %v314
      %v376 = vadd.f32 %v305, %v314
      %v377 = vadd.f32 %v306, %v314
      %v378 = vadd.f32 %v307, %v314
      %v379 = vadd.f32 %v308, %v314
      %380 = vst [vmem:[%s172] sm:$0xff] %v316
      %381 = vst [vmem:[%s172 + $0x8] sm:$0xff] %v317
      %382 = vst [vmem:[%s172 + $0x10] sm:$0xff] %v318
      %383 = vst [vmem:[%s172 + $0x18] sm:$0xff] %v319
      %384 = vst [vmem:[%s172 + $0x20] sm:$0xff] %v320
      %385 = vst [vmem:[%s172 + $0x28] sm:$0xff] %v321
      %386 = vst [vmem:[%s172 + $0x30] sm:$0xff] %v322
      %387 = vst [vmem:[%s172 + $0x38] sm:$0xff] %v323
      %388 = vst [vmem:[%s172 + $0x40] sm:$0xff] %v324
      %389 = vst [vmem:[%s172 + $0x48] sm:$0xff] %v325
      %390 = vst [vmem:[%s172 + $0x50] sm:$0xff] %v326
      %391 = vst [vmem:[%s172 + $0x58] sm:$0xff] %v327
      %392 = vst [vmem:[%s172 + $0x60] sm:$0xff] %v328
      %393 = vst [vmem:[%s172 + $0x68] sm:$0xff] %v329
      %394 = vst [vmem:[%s172 + $0x70] sm:$0xff] %v330
      %395 = vst [vmem:[%s172 + $0x78] sm:$0xff] %v331
      %396 = vst [vmem:[%s172 + $0x80] sm:$0xff] %v332
      %397 = vst [vmem:[%s172 + $0x88] sm:$0xff] %v333
      %398 = vst [vmem:[%s172 + $0x90] sm:$0xff] %v334
      %399 = vst [vmem:[%s172 + $0x98] sm:$0xff] %v335
      %400 = vst [vmem:[%s172 + $0xa0] sm:$0xff] %v336
      %401 = vst [vmem:[%s172 + $0xa8] sm:$0xff] %v337
      %402 = vst [vmem:[%s172 + $0xb0] sm:$0xff] %v338
      %403 = vst [vmem:[%s172 + $0xb8] sm:$0xff] %v339
      %404 = vst [vmem:[%s172 + $0xc0] sm:$0xff] %v340
      %405 = vst [vmem:[%s172 + $0xc8] sm:$0xff] %v341
      %406 = vst [vmem:[%s172 + $0xd0] sm:$0xff] %v342
      %407 = vst [vmem:[%s172 + $0xd8] sm:$0xff] %v343
      %408 = vst [vmem:[%s172 + $0xe0] sm:$0xff] %v344
      %409 = vst [vmem:[%s172 + $0xe8] sm:$0xff] %v345
      %410 = vst [vmem:[%s172 + $0xf0] sm:$0xff] %v346
      %411 = vst [vmem:[%s172 + $0xf8] sm:$0xff] %v347
      %412 = vst [vmem:[%s172 + $0x100] sm:$0xff] %v348
      %413 = vst [vmem:[%s172 + $0x108] sm:$0xff] %v349
      %414 = vst [vmem:[%s172 + $0x110] sm:$0xff] %v350
      %415 = vst [vmem:[%s172 + $0x118] sm:$0xff] %v351
      %416 = vst [vmem:[%s172 + $0x120] sm:$0xff] %v352
      %417 = vst [vmem:[%s172 + $0x128] sm:$0xff] %v353
      %418 = vst [vmem:[%s172 + $0x130] sm:$0xff] %v354
      %419 = vst [vmem:[%s172 + $0x138] sm:$0xff] %v355
      %420 = vst [vmem:[%s172 + $0x140] sm:$0xff] %v356
      %421 = vst [vmem:[%s172 + $0x148] sm:$0xff] %v357
      %422 = vst [vmem:[%s172 + $0x150] sm:$0xff] %v358
      %423 = vst [vmem:[%s172 + $0x158] sm:$0xff] %v359
      %424 = vst [vmem:[%s172 + $0x160] sm:$0xff] %v360
      %425 = vst [vmem:[%s172 + $0x168] sm:$0xff] %v361
      %426 = vst [vmem:[%s172 + $0x170] sm:$0xff] %v362
      %427 = vst [vmem:[%s172 + $0x178] sm:$0xff] %v363
      %428 = vst [vmem:[%s172 + $0x180] sm:$0xff] %v364
      %429 = vst [vmem:[%s172 + $0x188] sm:$0xff] %v365
      %430 = vst [vmem:[%s172 + $0x190] sm:$0xff] %v366
      %431 = vst [vmem:[%s172 + $0x198] sm:$0xff] %v367
      %432 = vst [vmem:[%s172 + $0x1a0] sm:$0xff] %v368
      %433 = vst [vmem:[%s172 + $0x1a8] sm:$0xff] %v369
      %434 = vst [vmem:[%s172 + $0x1b0] sm:$0xff] %v370
      %435 = vst [vmem:[%s172 + $0x1b8] sm:$0xff] %v371
      %436 = vst [vmem:[%s172 + $0x1c0] sm:$0xff] %v372
      %437 = vst [vmem:[%s172 + $0x1c8] sm:$0xff] %v373
      %438 = vst [vmem:[%s172 + $0x1d0] sm:$0xff] %v374
      %439 = vst [vmem:[%s172 + $0x1d8] sm:$0xff] %v375
      %440 = vst [vmem:[%s172 + $0x1e0] sm:$0xff] %v376
      %441 = vst [vmem:[%s172 + $0x1e8] sm:$0xff] %v377
      %442 = vst [vmem:[%s172 + $0x1f0] sm:$0xff] %v378
      %443 = vst [vmem:[%s172 + $0x1f8] sm:$0xff] %v379
      %s444 = smul.u32 64, %s14
      %p445 = scmp.lt.s32.totalorder %s444, 127
      %s446 = scalar_select %p445, %s444, 127
      %s447 = smul.addr %s446, 8
      %s448 = scalar_lea.vmem %s3, %s447
      // Predicated region
      $region33: #{fcn_head_forward.5} parent=31 // pred_check
        %p449 = pneg %p100
      $region34: #{fcn_head_forward.5} parent=31 // pred_check_branch
        %451 = sbr.rel (%p449) target = $region36
      $region35: #{fcn_head_forward.5} parent=31 // pred_region
        %s452 = smul.u32 64, %s14
      $region36: #{fcn_head_forward.5} parent=31 // pred_fallthru
        _
    $region32: #{fcn_head_forward.5} parent=5 // pred_fallthru
      _
    %p453 = scmp.le.s32.totalorder 2, %s9
    // Predicated region
    $region37: #{fcn_head_forward.5} parent=5 // pred_check
      %p454 = pneg %p453
    $region38: #{fcn_head_forward.5} parent=5 // pred_check_branch
      %456 = sbr.rel (%p454) target = $region40
    $region39: #{fcn_head_forward.5} parent=5 // pred_region
      %s457 = ssub.s32 %s9, 2
      // Predicated region
      $region41: #{fcn_head_forward.5} parent=39 // pred_check
        %p458 = pneg %p106
      $region42: #{fcn_head_forward.5} parent=39 // pred_check_branch
        %460 = sbr.rel (%p458) target = $region44
      $region43: #{fcn_head_forward.5} parent=39 // pred_region
        %s461 = smul.u32 64, %s15
        %p462 = scmp.lt.s32.totalorder %s461, 127
        %s463 = scalar_select %p462, %s461, 127
        %s464 = smul.addr %s463, 8
        %s465 = scalar_lea.vmem %s3, %s464
      $region44: #{fcn_head_forward.5} parent=39 // pred_fallthru
        _
    $region40: #{fcn_head_forward.5} parent=5 // pred_fallthru
      _
  $region6: #{fcn_head_forward.5} parent=0 // loop_footer
    %s13 = sadd.s32 1, %s9
  $region7: #{fcn_head_forward.5} parent=0 // loop_footer_branch
    %8 = sbr.rel target = $region3
  $region8: #{fcn_head_forward.5} parent=0 // loop_exit
    _

// kernel: fcn_head_forward.3
$region0: #{fcn_head_forward.3}
  #allocation0 [shape = 'u32[]', space=smem, size = 0x4, offset = 0x4, fixed_abs, tag = 'smem constant byte address 0x4 - core index']
  #allocation1 [shape = 'u32[144,128]{1,0:T(1,128)}', space=vmem, size = 0x12000, scoped, tag = 'internal scratch']
  %s0 = inlined_call_operand.vmem [shape: bf16[1024,32], index: 0, kind: input, shape index: {}]
  %s1 = inlined_call_operand.vmem [shape: bf16[32,128], index: 1, kind: input, shape index: {}]
  %s2 = inlined_call_operand.vmem [shape: f32[1024,128], index: 2, kind: output, shape index: {0}]
  %s3 = inlined_call_operand.vmem [shape: f32[1,128], index: 3, kind: output, shape index: {1}]
  %s4 = inlined_call_operand.vmem [shape: f32[1,128], index: 4, kind: output, shape index: {2}]
  %5 = xla_tuple %s2, %s3, %s4
  %s6 = sld [smem:[#allocation0]]
  $region61: #{fcn_head_forward.3} parent=0
    _
  %s8 = ssub.s32 1, %s6
  %s9 = scalar_select 0, %s8, %s6
  loop: start=0, step=1, limit=4
  $region2: #{fcn_head_forward.3} parent=0 // loop_pre_header
    _
  $region3: #{fcn_head_forward.3} parent=0 // loop_header
    %s11 = sphi 0, %s15
    %p12 = scmp.ge.s32.totalorder %s11, 4
    %s21 = sphi 0, %s23
    %s24 = sphi 0, %s21
    %s25 = sphi 0, %s24
    %s41 = sphi 0, %s25
    %s45 = sphi 0, %s45
    %s47 = sphi 0, %s45
    %s48 = sphi 0, %s47
    %s62 = sphi 0, %s48
    %s68 = sphi 0, %s70
    %s71 = sphi 0, %s68
    %s72 = sphi 0, %s71
    %s88 = sphi 0, %s72
    %s92 = sphi 0, %s92
    %s94 = sphi 0, %s92
    %s95 = sphi 0, %s94
    %s109 = sphi 0, %s95
    %s113 = sphi 0, %s113
    %s115 = sphi 0, %s113
    %s116 = sphi 0, %s115
    %s130 = sphi 0, %s116
  $region4: #{fcn_head_forward.3} parent=0 // loop_header_branch
    %14 = sbr.rel (%p12) target = $region8
  $region5: #{fcn_head_forward.3} parent=0 // loop_body
    %s16 = ssub.s32 %s11, 1
    %s17 = ssub.s32 %s11, 2
    %s18 = sadd.s32 %s11, 1
    %s19 = ssub.s32 %s11, %s18
    %p20 = scmp.eq.s32.totalorder %s19, 0
    %s22 = sadd.s32 %s21, 1
    %s23 = scalar_select %p20, %s21, %s22
    %p26 = pneg %p20
    %p27 = scmp.eq.s32.totalorder %s11, 1
    %p28 = por %p26, %p27
    %p29 = scmp.ne.s32.totalorder %s21, %s24
    %p30 = scmp.eq.s32.totalorder %s11, 0
    %p31 = por %p29, %p30
    %p32 = scmp.ne.s32.totalorder %s21, %s24
    %p33 = scmp.eq.s32.totalorder %s16, 1
    %p34 = por %p32, %p33
    %p35 = scmp.ne.s32.totalorder %s24, %s25
    %p36 = scmp.eq.s32.totalorder %s16, 0
    %p37 = por %p35, %p36
    %p38 = scmp.ne.s32.totalorder %s24, %s25
    %p39 = scmp.eq.s32.totalorder %s17, 1
    %p40 = por %p38, %p39
    %p42 = scmp.ne.s32.totalorder %s25, %s41
    %p43 = scmp.eq.s32.totalorder %s17, 0
    %p44 = por %p42, %p43
    %s46 = sadd.s32 %s45, 1
    %p49 = scmp.eq.s32.totalorder %s11, 1
    %p50 = scmp.ne.s32.totalorder %s45, %s47
    %p51 = scmp.eq.s32.totalorder %s11, 0
    %p52 = por %p50, %p51
    %p53 = scmp.ne.s32.totalorder %s45, %s47
    %p54 = scmp.eq.s32.totalorder %s16, 1
    %p55 = por %p53, %p54
    %p56 = scmp.ne.s32.totalorder %s47, %s48
    %p57 = scmp.eq.s32.totalorder %s16, 0
    %p58 = por %p56, %p57
    %p59 = scmp.ne.s32.totalorder %s47, %s48
    %p60 = scmp.eq.s32.totalorder %s17, 1
    %p61 = por %p59, %p60
    %p63 = scmp.ne.s32.totalorder %s48, %s62
    %p64 = scmp.eq.s32.totalorder %s17, 0
    %p65 = por %p63, %p64
    %s66 = ssub.s32 %s11, %s18
    %p67 = scmp.eq.s32.totalorder %s66, 0
    %s69 = sadd.s32 %s68, 1
    %s70 = scalar_select %p67, %s68, %s69
    %p73 = pneg %p67
    %p74 = scmp.eq.s32.totalorder %s11, 1
    %p75 = por %p73, %p74
    %p76 = scmp.ne.s32.totalorder %s68, %s71
    %p77 = scmp.eq.s32.totalorder %s11, 0
    %p78 = por %p76, %p77
    %p79 = scmp.ne.s32.totalorder %s68, %s71
    %p80 = scmp.eq.s32.totalorder %s16, 1
    %p81 = por %p79, %p80
    %p82 = scmp.ne.s32.totalorder %s71, %s72
    %p83 = scmp.eq.s32.totalorder %s16, 0
    %p84 = por %p82, %p83
    %p85 = scmp.ne.s32.totalorder %s71, %s72
    %p86 = scmp.eq.s32.totalorder %s17, 1
    %p87 = por %p85, %p86
    %p89 = scmp.ne.s32.totalorder %s72, %s88
    %p90 = scmp.eq.s32.totalorder %s17, 0
    %p91 = por %p89, %p90
    %s93 = sadd.s32 %s92, 1
    %p96 = scmp.eq.s32.totalorder %s11, 1
    %p97 = scmp.ne.s32.totalorder %s92, %s94
    %p98 = scmp.eq.s32.totalorder %s11, 0
    %p99 = por %p97, %p98
    %p100 = scmp.ne.s32.totalorder %s92, %s94
    %p101 = scmp.eq.s32.totalorder %s16, 1
    %p102 = por %p100, %p101
    %p103 = scmp.ne.s32.totalorder %s94, %s95
    %p104 = scmp.eq.s32.totalorder %s16, 0
    %p105 = por %p103, %p104
    %p106 = scmp.ne.s32.totalorder %s94, %s95
    %p107 = scmp.eq.s32.totalorder %s17, 1
    %p108 = por %p106, %p107
    %p110 = scmp.ne.s32.totalorder %s95, %s109
    %p111 = scmp.eq.s32.totalorder %s17, 0
    %p112 = por %p110, %p111
    %s114 = sadd.s32 %s113, 1
    %p117 = scmp.eq.s32.totalorder %s11, 1
    %p118 = scmp.ne.s32.totalorder %s113, %s115
    %p119 = scmp.eq.s32.totalorder %s11, 0
    %p120 = por %p118, %p119
    %p121 = scmp.ne.s32.totalorder %s113, %s115
    %p122 = scmp.eq.s32.totalorder %s16, 1
    %p123 = por %p121, %p122
    %p124 = scmp.ne.s32.totalorder %s115, %s116
    %p125 = scmp.eq.s32.totalorder %s16, 0
    %p126 = por %p124, %p125
    %p127 = scmp.ne.s32.totalorder %s115, %s116
    %p128 = scmp.eq.s32.totalorder %s17, 1
    %p129 = por %p127, %p128
    %p131 = scmp.ne.s32.totalorder %s116, %s130
    %p132 = scmp.eq.s32.totalorder %s17, 0
    %p133 = por %p131, %p132
    %p134 = scmp.le.s32.totalorder 1, %s11
    %p135 = scmp.lt.s32.totalorder %s11, 3
    %p136 = pnand %p134, %p135
    %p137 = pneg %p136
    // Predicated region
    $region9: #{fcn_head_forward.3} parent=5 // pred_check
      _
    $region10: #{fcn_head_forward.3} parent=5 // pred_check_branch
      %139 = sbr.rel (%p136) target = $region12
    $region11: #{fcn_head_forward.3} parent=5 // pred_region
      %s140 = ssub.s32 %s11, 1
      // Predicated region
      $region13: #{fcn_head_forward.3} parent=11 // pred_check
        %p141 = pneg %p58
      $region14: #{fcn_head_forward.3} parent=11 // pred_check_branch
        %143 = sbr.rel (%p141) target = $region16
      $region15: #{fcn_head_forward.3} parent=11 // pred_region
        _
      $region16: #{fcn_head_forward.3} parent=11 // pred_fallthru
        _
    $region12: #{fcn_head_forward.3} parent=5 // pred_fallthru
      _
    %p144 = scmp.lt.s32.totalorder %s11, 2
    // Predicated region
    $region17: #{fcn_head_forward.3} parent=5 // pred_check
      %p145 = pneg %p144
    $region18: #{fcn_head_forward.3} parent=5 // pred_check_branch
      %147 = sbr.rel (%p145) target = $region20
    $region19: #{fcn_head_forward.3} parent=5 // pred_region
      // Predicated region
      $region21: #{fcn_head_forward.3} parent=19 // pred_check
        %p148 = pneg %p31
      $region22: #{fcn_head_forward.3} parent=19 // pred_check_branch
        %150 = sbr.rel (%p148) target = $region24
      $region23: #{fcn_head_forward.3} parent=19 // pred_region
        %s151 = smul.u32 64, %s11
        %p152 = scmp.lt.s32.totalorder %s151, 127
        %s153 = scalar_select %p152, %s151, 127
        %s154 = smul.addr %s153, 4
        %s155 = scalar_lea.vmem %s0, %s154
        %s156 = smul.u32 64, %s11
      $region24: #{fcn_head_forward.3} parent=19 // pred_fallthru
        _
    $region20: #{fcn_head_forward.3} parent=5 // pred_fallthru
      _
    %p157 = scmp.le.s32.totalorder 1, %s11
    %p158 = scmp.lt.s32.totalorder %s11, 3
    %p159 = pnand %p157, %p158
    %p160 = pneg %p159
    // Predicated region
    $region25: #{fcn_head_forward.3} parent=5 // pred_check
      _
    $region26: #{fcn_head_forward.3} parent=5 // pred_check_branch
      %162 = sbr.rel (%p159) target = $region28
    $region27: #{fcn_head_forward.3} parent=5 // pred_region
      %s163 = ssub.s32 %s11, 1
      %s164 = smul.u32 64, %s16
      %p165 = scmp.lt.s32.totalorder %s164, 127
      %s166 = scalar_select %p165, %s164, 127
      %s167 = smul.addr %s166, 4
      %s168 = scalar_lea.vmem %s0, %s167
      %p169 = pneg %p37
      %p170 = pneg %p34
      %p171 = pneg %p58
      %p172 = pneg %p55
      %p173 = pneg %p84
      %p174 = pneg %p81
      %s175 = smul.u32 64, %s16
      %p176 = scmp.lt.s32.totalorder %s175, 127
      %s177 = scalar_select %p176, %s175, 127
      %s178 = smul.addr %s177, 8
      %s179 = scalar_lea.vmem %s2, %s178
      %p180 = pneg %p105
      %p181 = pneg %p102
      %p182 = pneg %p126
      %p183 = pneg %p123
      %s184 = smul.u32 64, %s16
      %p185 = scmp.lt.s32.totalorder %s184, 127
      %s186 = scalar_select %p185, %s184, 127
      %s187 = smul.addr %s186, 4
      %s188 = scalar_lea.vmem %s0, %s187
      %s189 = smul.u32 64, %s16
      %s190 = smul.u32 64, %s16
      %p191 = scmp.lt.s32.totalorder %s190, 127
      %s192 = scalar_select %p191, %s190, 127
      %s193 = smul.addr %s192, 8
      %s194 = scalar_lea.vmem %s2, %s193
      %s195 = smul.u32 64, %s16
      %v197 = vld [vmem:[%s188] sm:$0xf]
      %v198 = vld [vmem:[%s188 + $0x4] sm:$0xf]
      %v199 = vld [vmem:[%s188 + $0x8] sm:$0xf]
      %v200 = vld [vmem:[%s188 + $0xc] sm:$0xf]
      %v201 = vld [vmem:[%s188 + $0x10] sm:$0xf]
      %v202 = vld [vmem:[%s188 + $0x14] sm:$0xf]
      %v203 = vld [vmem:[%s188 + $0x18] sm:$0xf]
      %v204 = vld [vmem:[%s188 + $0x1c] sm:$0xf]
      %v205 = vld [vmem:[%s188 + $0x20] sm:$0xf]
      %v206 = vld [vmem:[%s188 + $0x24] sm:$0xf]
      %v207 = vld [vmem:[%s188 + $0x28] sm:$0xf]
      %v208 = vld [vmem:[%s188 + $0x2c] sm:$0xf]
      %v209 = vld [vmem:[%s188 + $0x30] sm:$0xf]
      %v210 = vld [vmem:[%s188 + $0x34] sm:$0xf]
      %v211 = vld [vmem:[%s188 + $0x38] sm:$0xf]
      %v212 = vld [vmem:[%s188 + $0x3c] sm:$0xf]
      %v213 = vld [vmem:[%s188 + $0x40] sm:$0xf]
      %v214 = vld [vmem:[%s188 + $0x44] sm:$0xf]
      %v215 = vld [vmem:[%s188 + $0x48] sm:$0xf]
      %v216 = vld [vmem:[%s188 + $0x4c] sm:$0xf]
      %v217 = vld [vmem:[%s188 + $0x50] sm:$0xf]
      %v218 = vld [vmem:[%s188 + $0x54] sm:$0xf]
      %v219 = vld [vmem:[%s188 + $0x58] sm:$0xf]
      %v220 = vld [vmem:[%s188 + $0x5c] sm:$0xf]
      %v221 = vld [vmem:[%s188 + $0x60] sm:$0xf]
      %v222 = vld [vmem:[%s188 + $0x64] sm:$0xf]
      %v223 = vld [vmem:[%s188 + $0x68] sm:$0xf]
      %v224 = vld [vmem:[%s188 + $0x6c] sm:$0xf]
      %v225 = vld [vmem:[%s188 + $0x70] sm:$0xf]
      %v226 = vld [vmem:[%s188 + $0x74] sm:$0xf]
      %v227 = vld [vmem:[%s188 + $0x78] sm:$0xf]
      %v228 = vld [vmem:[%s188 + $0x7c] sm:$0xf]
      %v229 = vld [vmem:[%s188 + $0x80] sm:$0xf]
      %v230 = vld [vmem:[%s188 + $0x84] sm:$0xf]
      %v231 = vld [vmem:[%s188 + $0x88] sm:$0xf]
      %v232 = vld [vmem:[%s188 + $0x8c] sm:$0xf]
      %v233 = vld [vmem:[%s188 + $0x90] sm:$0xf]
      %v234 = vld [vmem:[%s188 + $0x94] sm:$0xf]
      %v235 = vld [vmem:[%s188 + $0x98] sm:$0xf]
      %v236 = vld [vmem:[%s188 + $0x9c] sm:$0xf]
      %v237 = vld [vmem:[%s188 + $0xa0] sm:$0xf]
      %v238 = vld [vmem:[%s188 + $0xa4] sm:$0xf]
      %v239 = vld [vmem:[%s188 + $0xa8] sm:$0xf]
      %v240 = vld [vmem:[%s188 + $0xac] sm:$0xf]
      %v241 = vld [vmem:[%s188 + $0xb0] sm:$0xf]
      %v242 = vld [vmem:[%s188 + $0xb4] sm:$0xf]
      %v243 = vld [vmem:[%s188 + $0xb8] sm:$0xf]
      %v244 = vld [vmem:[%s188 + $0xbc] sm:$0xf]
      %v245 = vld [vmem:[%s188 + $0xc0] sm:$0xf]
      %v246 = vld [vmem:[%s188 + $0xc4] sm:$0xf]
      %v247 = vld [vmem:[%s188 + $0xc8] sm:$0xf]
      %v248 = vld [vmem:[%s188 + $0xcc] sm:$0xf]
      %v249 = vld [vmem:[%s188 + $0xd0] sm:$0xf]
      %v250 = vld [vmem:[%s188 + $0xd4] sm:$0xf]
      %v251 = vld [vmem:[%s188 + $0xd8] sm:$0xf]
      %v252 = vld [vmem:[%s188 + $0xdc] sm:$0xf]
      %v253 = vld [vmem:[%s188 + $0xe0] sm:$0xf]
      %v254 = vld [vmem:[%s188 + $0xe4] sm:$0xf]
      %v255 = vld [vmem:[%s188 + $0xe8] sm:$0xf]
      %v256 = vld [vmem:[%s188 + $0xec] sm:$0xf]
      %v257 = vld [vmem:[%s188 + $0xf0] sm:$0xf]
      %v258 = vld [vmem:[%s188 + $0xf4] sm:$0xf]
      %v259 = vld [vmem:[%s188 + $0xf8] sm:$0xf]
      %v260 = vld [vmem:[%s188 + $0xfc] sm:$0xf]
      %v261 = vld [vmem:[%s1] sm:$0xf]
      %v262 = vld [vmem:[%s1 + $0x4] sm:$0xf]
      %v263 = vld [vmem:[%s1 + $0x8] sm:$0xf]
      %v264 = vld [vmem:[%s1 + $0xc] sm:$0xf]
      %v329 = vunpack.c.l.b16 %v197
      %v330 = vunpack.c.l.b16 %v198
      %v331 = vunpack.c.l.b16 %v199
      %v332 = vunpack.c.l.b16 %v200
      %v333 = vunpack.c.l.b16 %v201
      %v334 = vunpack.c.l.b16 %v202
      %v335 = vunpack.c.l.b16 %v203
      %v336 = vunpack.c.l.b16 %v204
      %v337 = vunpack.c.l.b16 %v205
      %v338 = vunpack.c.l.b16 %v206
      %v339 = vunpack.c.l.b16 %v207
      %v340 = vunpack.c.l.b16 %v208
      %v341 = vunpack.c.l.b16 %v209
      %v342 = vunpack.c.l.b16 %v210
      %v343 = vunpack.c.l.b16 %v211
      %v344 = vunpack.c.l.b16 %v212
      %v345 = vunpack.c.l.b16 %v213
      %v346 = vunpack.c.l.b16 %v214
      %v347 = vunpack.c.l.b16 %v215
      %v348 = vunpack.c.l.b16 %v216
      %v349 = vunpack.c.l.b16 %v217
      %v350 = vunpack.c.l.b16 %v218
      %v351 = vunpack.c.l.b16 %v219
      %v352 = vunpack.c.l.b16 %v220
      %v353 = vunpack.c.l.b16 %v221
      %v354 = vunpack.c.l.b16 %v222
      %v355 = vunpack.c.l.b16 %v223
      %v356 = vunpack.c.l.b16 %v224
      %v357 = vunpack.c.l.b16 %v225
      %v358 = vunpack.c.l.b16 %v226
      %v359 = vunpack.c.l.b16 %v227
      %v360 = vunpack.c.l.b16 %v228
      %v361 = vunpack.c.l.b16 %v229
      %v362 = vunpack.c.l.b16 %v230
      %v363 = vunpack.c.l.b16 %v231
      %v364 = vunpack.c.l.b16 %v232
      %v365 = vunpack.c.l.b16 %v233
      %v366 = vunpack.c.l.b16 %v234
      %v367 = vunpack.c.l.b16 %v235
      %v368 = vunpack.c.l.b16 %v236
      %v369 = vunpack.c.l.b16 %v237
      %v370 = vunpack.c.l.b16 %v238
      %v371 = vunpack.c.l.b16 %v239
      %v372 = vunpack.c.l.b16 %v240
      %v373 = vunpack.c.l.b16 %v241
      %v374 = vunpack.c.l.b16 %v242
      %v375 = vunpack.c.l.b16 %v243
      %v376 = vunpack.c.l.b16 %v244
      %v377 = vunpack.c.l.b16 %v245
      %v378 = vunpack.c.l.b16 %v246
      %v379 = vunpack.c.l.b16 %v247
      %v380 = vunpack.c.l.b16 %v248
      %v381 = vunpack.c.l.b16 %v249
      %v382 = vunpack.c.l.b16 %v250
      %v383 = vunpack.c.l.b16 %v251
      %v384 = vunpack.c.l.b16 %v252
      %v385 = vunpack.c.l.b16 %v253
      %v386 = vunpack.c.l.b16 %v254
      %v387 = vunpack.c.l.b16 %v255
      %v388 = vunpack.c.l.b16 %v256
      %v389 = vunpack.c.l.b16 %v257
      %v390 = vunpack.c.l.b16 %v258
      %v391 = vunpack.c.l.b16 %v259
      %v392 = vunpack.c.l.b16 %v260
      %v393 = vpack.c.b16 %v330, %v329
      %v394 = vpack.c.b16 %v332, %v331
      %v395 = vpack.c.b16 %v334, %v333
      %v396 = vpack.c.b16 %v336, %v335
      %v397 = vpack.c.b16 %v338, %v337
      %v398 = vpack.c.b16 %v340, %v339
      %v399 = vpack.c.b16 %v342, %v341
      %v400 = vpack.c.b16 %v344, %v343
      %v401 = vpack.c.b16 %v346, %v345
      %v402 = vpack.c.b16 %v348, %v347
      %v403 = vpack.c.b16 %v350, %v349
      %v404 = vpack.c.b16 %v352, %v351
      %v405 = vpack.c.b16 %v354, %v353
      %v406 = vpack.c.b16 %v356, %v355
      %v407 = vpack.c.b16 %v358, %v357
      %v408 = vpack.c.b16 %v360, %v359
      %v409 = vpack.c.b16 %v362, %v361
      %v410 = vpack.c.b16 %v364, %v363
      %v411 = vpack.c.b16 %v366, %v365
      %v412 = vpack.c.b16 %v368, %v367
      %v413 = vpack.c.b16 %v370, %v369
      %v414 = vpack.c.b16 %v372, %v371
      %v415 = vpack.c.b16 %v374, %v373
      %v416 = vpack.c.b16 %v376, %v375
      %v417 = vpack.c.b16 %v378, %v377
      %v418 = vpack.c.b16 %v380, %v379
      %v419 = vpack.c.b16 %v382, %v381
      %v420 = vpack.c.b16 %v384, %v383
      %v421 = vpack.c.b16 %v386, %v385
      %v422 = vpack.c.b16 %v388, %v387
      %v423 = vpack.c.b16 %v390, %v389
      %v424 = vpack.c.b16 %v392, %v391
      %v429 = vunpack.c.l.b16 %v261
      %v430 = vunpack.c.l.b16 %v262
      %v431 = vunpack.c.l.b16 %v263
      %v432 = vunpack.c.l.b16 %v264
      %v433 = vpack.c.b16 %v430, %v429
      %v434 = vpack.c.b16 %v432, %v431
      %vm437 = vcmask 261120
      %v439 = vsel %vm437, %v393, 0
      %v442 = vsel %vm437, %v394, 0
      %v445 = vsel %vm437, %v395, 0
      %v448 = vsel %vm437, %v396, 0
      %v451 = vsel %vm437, %v397, 0
      %v454 = vsel %vm437, %v398, 0
      %v457 = vsel %vm437, %v399, 0
      %v460 = vsel %vm437, %v400, 0
      %v463 = vsel %vm437, %v401, 0
      %v466 = vsel %vm437, %v402, 0
      %v469 = vsel %vm437, %v403, 0
      %v472 = vsel %vm437, %v404, 0
      %v475 = vsel %vm437, %v405, 0
      %v478 = vsel %vm437, %v406, 0
      %v481 = vsel %vm437, %v407, 0
      %v484 = vsel %vm437, %v408, 0
      %v487 = vsel %vm437, %v409, 0
      %v490 = vsel %vm437, %v410, 0
      %v493 = vsel %vm437, %v411, 0
      %v496 = vsel %vm437, %v412, 0
      %v499 = vsel %vm437, %v413, 0
      %v502 = vsel %vm437, %v414, 0
      %v505 = vsel %vm437, %v415, 0
      %v508 = vsel %vm437, %v416, 0
      %v511 = vsel %vm437, %v417, 0
      %v514 = vsel %vm437, %v418, 0
      %v517 = vsel %vm437, %v419, 0
      %v520 = vsel %vm437, %v420, 0
      %v523 = vsel %vm437, %v421, 0
      %v526 = vsel %vm437, %v422, 0
      %v529 = vsel %vm437, %v423, 0
      %v532 = vsel %vm437, %v424, 0
      %534 = vmatprep.subr.bf16.mxu0 0
      %535 = vmatpush1.bf16.msra.mxu0 %v433
      %536 = vmatprep.subr.bf16.mxu0 0
      %537 = vmatpush1.bf16.msra.mxu0 %v434
      %538 = vmatprep.subr.bf16.mxu0 0
      %539 = vmatpush1.bf16.msra.mxu0 0
      %540 = vmatprep.subr.bf16.mxu0 0
      %541 = vmatpush1.bf16.msra.mxu0 0
      %542 = vmatprep.subr.bf16.mxu0 0
      %543 = vmatpush1.bf16.msra.mxu0 0
      %544 = vmatprep.subr.bf16.mxu0 0
      %545 = vmatpush1.bf16.msra.mxu0 0
      %546 = vmatprep.subr.bf16.mxu0 0
      %547 = vmatpush1.bf16.msra.mxu0 0
      %548 = vmatprep.subr.bf16.mxu0 0
      %549 = vmatpush1.bf16.msra.mxu0 0
      %550 = vmatprep.subr.bf16.mxu0 0
      %551 = vmatpush1.bf16.msra.mxu0 0
      %552 = vmatprep.subr.bf16.mxu0 0
      %553 = vmatpush1.bf16.msra.mxu0 0
      %554 = vmatprep.subr.bf16.mxu0 0
      %555 = vmatpush1.bf16.msra.mxu0 0
      %556 = vmatprep.subr.bf16.mxu0 0
      %557 = vmatpush1.bf16.msra.mxu0 0
      %558 = vmatprep.subr.bf16.mxu0 0
      %559 = vmatpush1.bf16.msra.mxu0 0
      %560 = vmatprep.subr.bf16.mxu0 0
      %561 = vmatpush1.bf16.msra.mxu0 0
      %562 = vmatprep.subr.bf16.mxu0 0
      %563 = vmatpush1.bf16.msra.mxu0 0
      %564 = vmatprep.subr.bf16.mxu0 0
      %565 = vmatpush1.bf16.msra.mxu0 0
      %566 = vmatprep.mubr.bf16.mxu0 0
      %567 = vmatmul.mubr.bf16.gmra.mrb[0].mxu0 %v439
      %v568 = vpop.f32.mrb[0].mxu0
      %v569 = vadd.f32 0.0, %v568
      %v570 = vpop.f32.mrb[0].mxu0
      %v571 = vpop.f32.mrb[0].mxu0
      %v572 = vadd.f32 0.0, %v571
      %v573 = vpop.f32.mrb[0].mxu0
      %574 = vmatprep.mubr.bf16.mxu0 0
      %575 = vmatmul.mubr.bf16.gmra.mrb[0].mxu0 %v442
      %v576 = vpop.f32.mrb[0].mxu0
      %v577 = vadd.f32 0.0, %v576
      %v578 = vpop.f32.mrb[0].mxu0
      %v579 = vpop.f32.mrb[0].mxu0
      %v580 = vadd.f32 0.0, %v579
      %v581 = vpop.f32.mrb[0].mxu0
      %582 = vmatprep.mubr.bf16.mxu0 0
      %583 = vmatmul.mubr.bf16.gmra.mrb[0].mxu0 %v445
      %v584 = vpop.f32.mrb[0].mxu0
      %v585 = vadd.f32 0.0, %v584
      %v586 = vpop.f32.mrb[0].mxu0
      %v587 = vpop.f32.mrb[0].mxu0
      %v588 = vadd.f32 0.0, %v587
      %v589 = vpop.f32.mrb[0].mxu0
      %590 = vmatprep.mubr.bf16.mxu0 0
      %591 = vmatmul.mubr.bf16.gmra.mrb[0].mxu0 %v448
      %v592 = vpop.f32.mrb[0].mxu0
      %v593 = vadd.f32 0.0, %v592
      %v594 = vpop.f32.mrb[0].mxu0
      %v595 = vpop.f32.mrb[0].mxu0
      %v596 = vadd.f32 0.0, %v595
      %v597 = vpop.f32.mrb[0].mxu0
      %598 = vmatprep.mubr.bf16.mxu0 0
      %599 = vmatmul.mubr.bf16.gmra.mrb[0].mxu0 %v451
      %v600 = vpop.f32.mrb[0].mxu0
      %v601 = vadd.f32 0.0, %v600
      %v602 = vpop.f32.mrb[0].mxu0
      %v603 = vpop.f32.mrb[0].mxu0
      %v604 = vadd.f32 0.0, %v603
      %v605 = vpop.f32.mrb[0].mxu0
      %606 = vmatprep.mubr.bf16.mxu0 0
      %607 = vmatmul.mubr.bf16.gmra.mrb[0].mxu0 %v454
      %v608 = vpop.f32.mrb[0].mxu0
      %v609 = vadd.f32 0.0, %v608
      %v610 = vpop.f32.mrb[0].mxu0
      %v611 = vpop.f32.mrb[0].mxu0
      %v612 = vadd.f32 0.0, %v611
      %v613 = vpop.f32.mrb[0].mxu0
      %614 = vmatprep.mubr.bf16.mxu0 0
      %615 = vmatmul.mubr.bf16.gmra.mrb[0].mxu0 %v457
      %v616 = vpop.f32.mrb[0].mxu0
      %v617 = vadd.f32 0.0, %v616
      %v618 = vpop.f32.mrb[0].mxu0
      %v619 = vpop.f32.mrb[0].mxu0
      %v620 = vadd.f32 0.0, %v619
      %v621 = vpop.f32.mrb[0].mxu0
      %622 = vmatprep.mubr.bf16.mxu0 0
      %623 = vmatmul.mubr.bf16.gmra.mrb[0].mxu0 %v460
      %v624 = vpop.f32.mrb[0].mxu0
      %v625 = vadd.f32 0.0, %v624
      %v626 = vpop.f32.mrb[0].mxu0
      %v627 = vpop.f32.mrb[0].mxu0
      %v628 = vadd.f32 0.0, %v627
      %v629 = vpop.f32.mrb[0].mxu0
      %630 = vmatprep.mubr.bf16.mxu0 0
      %631 = vmatmul.mubr.bf16.gmra.mrb[0].mxu0 %v463
      %v632 = vpop.f32.mrb[0].mxu0
      %v633 = vadd.f32 0.0, %v632
      %v634 = vpop.f32.mrb[0].mxu0
      %v635 = vpop.f32.mrb[0].mxu0
      %v636 = vadd.f32 0.0, %v635
      %v637 = vpop.f32.mrb[0].mxu0
      %638 = vmatprep.mubr.bf16.mxu0 0
      %639 = vmatmul.mubr.bf16.gmra.mrb[0].mxu0 %v466
      %v640 = vpop.f32.mrb[0].mxu0
      %v641 = vadd.f32 0.0, %v640
      %v642 = vpop.f32.mrb[0].mxu0
      %v643 = vpop.f32.mrb[0].mxu0
      %v644 = vadd.f32 0.0, %v643
      %v645 = vpop.f32.mrb[0].mxu0
      %646 = vmatprep.mubr.bf16.mxu0 0
      %647 = vmatmul.mubr.bf16.gmra.mrb[0].mxu0 %v469
      %v648 = vpop.f32.mrb[0].mxu0
      %v649 = vadd.f32 0.0, %v648
      %v650 = vpop.f32.mrb[0].mxu0
      %v651 = vpop.f32.mrb[0].mxu0
      %v652 = vadd.f32 0.0, %v651
      %v653 = vpop.f32.mrb[0].mxu0
      %654 = vmatprep.mubr.bf16.mxu0 0
      %655 = vmatmul.mubr.bf16.gmra.mrb[0].mxu0 %v472
      %v656 = vpop.f32.mrb[0].mxu0
      %v657 = vadd.f32 0.0, %v656
      %v658 = vpop.f32.mrb[0].mxu0
      %v659 = vpop.f32.mrb[0].mxu0
      %v660 = vadd.f32 0.0, %v659
      %v661 = vpop.f32.mrb[0].mxu0
      %662 = vmatprep.mubr.bf16.mxu0 0
      %663 = vmatmul.mubr.bf16.gmra.mrb[0].mxu0 %v475
      %v664 = vpop.f32.mrb[0].mxu0
      %v665 = vadd.f32 0.0, %v664
      %v666 = vpop.f32.mrb[0].mxu0
      %v667 = vpop.f32.mrb[0].mxu0
      %v668 = vadd.f32 0.0, %v667
      %v669 = vpop.f32.mrb[0].mxu0
      %670 = vmatprep.mubr.bf16.mxu0 0
      %671 = vmatmul.mubr.bf16.gmra.mrb[0].mxu0 %v478
      %v672 = vpop.f32.mrb[0].mxu0
      %v673 = vadd.f32 0.0, %v672
      %v674 = vpop.f32.mrb[0].mxu0
      %v675 = vpop.f32.mrb[0].mxu0
      %v676 = vadd.f32 0.0, %v675
      %v677 = vpop.f32.mrb[0].mxu0
      %678 = vmatprep.mubr.bf16.mxu0 0
      %679 = vmatmul.mubr.bf16.gmra.mrb[0].mxu0 %v481
      %v680 = vpop.f32.mrb[0].mxu0
      %v681 = vadd.f32 0.0, %v680
      %v682 = vpop.f32.mrb[0].mxu0
      %v683 = vpop.f32.mrb[0].mxu0
      %v684 = vadd.f32 0.0, %v683
      %v685 = vpop.f32.mrb[0].mxu0
      %686 = vmatprep.mubr.bf16.mxu0 0
      %687 = vmatmul.mubr.bf16.gmra.mrb[0].mxu0 %v484
      %v688 = vpop.f32.mrb[0].mxu0
      %v689 = vadd.f32 0.0, %v688
      %v690 = vpop.f32.mrb[0].mxu0
      %v691 = vpop.f32.mrb[0].mxu0
      %v692 = vadd.f32 0.0, %v691
      %v693 = vpop.f32.mrb[0].mxu0
      %694 = vmatprep.mubr.bf16.mxu0 0
      %695 = vmatmul.mubr.bf16.gmra.mrb[0].mxu0 %v487
      %v696 = vpop.f32.mrb[0].mxu0
      %v697 = vadd.f32 0.0, %v696
      %v698 = vpop.f32.mrb[0].mxu0
      %v699 = vpop.f32.mrb[0].mxu0
      %v700 = vadd.f32 0.0, %v699
      %v701 = vpop.f32.mrb[0].mxu0
      %702 = vmatprep.mubr.bf16.mxu0 0
      %703 = vmatmul.mubr.bf16.gmra.mrb[0].mxu0 %v490
      %v704 = vpop.f32.mrb[0].mxu0
      %v705 = vadd.f32 0.0, %v704
      %v706 = vpop.f32.mrb[0].mxu0
      %v707 = vpop.f32.mrb[0].mxu0
      %v708 = vadd.f32 0.0, %v707
      %v709 = vpop.f32.mrb[0].mxu0
      %710 = vmatprep.mubr.bf16.mxu0 0
      %711 = vmatmul.mubr.bf16.gmra.mrb[0].mxu0 %v493
      %v712 = vpop.f32.mrb[0].mxu0
      %v713 = vadd.f32 0.0, %v712
      %v714 = vpop.f32.mrb[0].mxu0
      %v715 = vpop.f32.mrb[0].mxu0
      %v716 = vadd.f32 0.0, %v715
      %v717 = vpop.f32.mrb[0].mxu0
      %718 = vmatprep.mubr.bf16.mxu0 0
      %719 = vmatmul.mubr.bf16.gmra.mrb[0].mxu0 %v496
      %v720 = vpop.f32.mrb[0].mxu0
      %v721 = vadd.f32 0.0, %v720
      %v722 = vpop.f32.mrb[0].mxu0
      %v723 = vpop.f32.mrb[0].mxu0
      %v724 = vadd.f32 0.0, %v723
      %v725 = vpop.f32.mrb[0].mxu0
      %726 = vmatprep.mubr.bf16.mxu0 0
      %727 = vmatmul.mubr.bf16.gmra.mrb[0].mxu0 %v499
      %v728 = vpop.f32.mrb[0].mxu0
      %v729 = vadd.f32 0.0, %v728
      %v730 = vpop.f32.mrb[0].mxu0
      %v731 = vpop.f32.mrb[0].mxu0
      %v732 = vadd.f32 0.0, %v731
      %v733 = vpop.f32.mrb[0].mxu0
      %734 = vmatprep.mubr.bf16.mxu0 0
      %735 = vmatmul.mubr.bf16.gmra.mrb[0].mxu0 %v502
      %v736 = vpop.f32.mrb[0].mxu0
      %v737 = vadd.f32 0.0, %v736
      %v738 = vpop.f32.mrb[0].mxu0
      %v739 = vpop.f32.mrb[0].mxu0
      %v740 = vadd.f32 0.0, %v739
      %v741 = vpop.f32.mrb[0].mxu0
      %742 = vmatprep.mubr.bf16.mxu0 0
      %743 = vmatmul.mubr.bf16.gmra.mrb[0].mxu0 %v505
      %v744 = vpop.f32.mrb[0].mxu0
      %v745 = vadd.f32 0.0, %v744
      %v746 = vpop.f32.mrb[0].mxu0
      %v747 = vpop.f32.mrb[0].mxu0
      %v748 = vadd.f32 0.0, %v747
      %v749 = vpop.f32.mrb[0].mxu0
      %750 = vmatprep.mubr.bf16.mxu0 0
      %751 = vmatmul.mubr.bf16.gmra.mrb[0].mxu0 %v508
      %v752 = vpop.f32.mrb[0].mxu0
      %v753 = vadd.f32 0.0, %v752
      %v754 = vpop.f32.mrb[0].mxu0
      %v755 = vpop.f32.mrb[0].mxu0
      %v756 = vadd.f32 0.0, %v755
      %v757 = vpop.f32.mrb[0].mxu0
      %758 = vmatprep.mubr.bf16.mxu0 0
      %759 = vmatmul.mubr.bf16.gmra.mrb[0].mxu0 %v511
      %v760 = vpop.f32.mrb[0].mxu0
      %v761 = vadd.f32 0.0, %v760
      %v762 = vpop.f32.mrb[0].mxu0
      %v763 = vpop.f32.mrb[0].mxu0
      %v764 = vadd.f32 0.0, %v763
      %v765 = vpop.f32.mrb[0].mxu0
      %766 = vmatprep.mubr.bf16.mxu0 0
      %767 = vmatmul.mubr.bf16.gmra.mrb[0].mxu0 %v514
      %v768 = vpop.f32.mrb[0].mxu0
      %v769 = vadd.f32 0.0, %v768
      %v770 = vpop.f32.mrb[0].mxu0
      %v771 = vpop.f32.mrb[0].mxu0
      %v772 = vadd.f32 0.0, %v771
      %v773 = vpop.f32.mrb[0].mxu0
      %774 = vmatprep.mubr.bf16.mxu0 0
      %775 = vmatmul.mubr.bf16.gmra.mrb[0].mxu0 %v517
      %v776 = vpop.f32.mrb[0].mxu0
      %v777 = vadd.f32 0.0, %v776
      %v778 = vpop.f32.mrb[0].mxu0
      %v779 = vpop.f32.mrb[0].mxu0
      %v780 = vadd.f32 0.0, %v779
      %v781 = vpop.f32.mrb[0].mxu0
      %782 = vmatprep.mubr.bf16.mxu0 0
      %783 = vmatmul.mubr.bf16.gmra.mrb[0].mxu0 %v520
      %v784 = vpop.f32.mrb[0].mxu0
      %v785 = vadd.f32 0.0, %v784
      %v786 = vpop.f32.mrb[0].mxu0
      %v787 = vpop.f32.mrb[0].mxu0
      %v788 = vadd.f32 0.0, %v787
      %v789 = vpop.f32.mrb[0].mxu0
      %790 = vmatprep.mubr.bf16.mxu0 0
      %791 = vmatmul.mubr.bf16.gmra.mrb[0].mxu0 %v523
      %v792 = vpop.f32.mrb[0].mxu0
      %v793 = vadd.f32 0.0, %v792
      %v794 = vpop.f32.mrb[0].mxu0
      %v795 = vpop.f32.mrb[0].mxu0
      %v796 = vadd.f32 0.0, %v795
      %v797 = vpop.f32.mrb[0].mxu0
      %798 = vmatprep.mubr.bf16.mxu0 0
      %799 = vmatmul.mubr.bf16.gmra.mrb[0].mxu0 %v526
      %v800 = vpop.f32.mrb[0].mxu0
      %v801 = vadd.f32 0.0, %v800
      %v802 = vpop.f32.mrb[0].mxu0
      %v803 = vpop.f32.mrb[0].mxu0
      %v804 = vadd.f32 0.0, %v803
      %v805 = vpop.f32.mrb[0].mxu0
      %806 = vmatprep.mubr.bf16.mxu0 0
      %807 = vmatmul.mubr.bf16.gmra.mrb[0].mxu0 %v529
      %v808 = vpop.f32.mrb[0].mxu0
      %v809 = vadd.f32 0.0, %v808
      %v810 = vpop.f32.mrb[0].mxu0
      %v811 = vpop.f32.mrb[0].mxu0
      %v812 = vadd.f32 0.0, %v811
      %v813 = vpop.f32.mrb[0].mxu0
      %814 = vmatprep.mubr.bf16.mxu0 0
      %815 = vmatmul.mubr.bf16.gmra.mrb[0].mxu0 %v532
      %v816 = vpop.f32.mrb[0].mxu0
      %v817 = vadd.f32 0.0, %v816
      %v818 = vpop.f32.mrb[0].mxu0
      %v819 = vpop.f32.mrb[0].mxu0
      %v820 = vadd.f32 0.0, %v819
      %v821 = vpop.f32.mrb[0].mxu0
      %822 = vdwg.mxu0
      %823 = vst [vmem:[%s194] sm:$0xff] %v569
      %824 = vst [vmem:[%s194 + $0x8] sm:$0xff] %v572
      %825 = vst [vmem:[%s194 + $0x10] sm:$0xff] %v577
      %826 = vst [vmem:[%s194 + $0x18] sm:$0xff] %v580
      %827 = vst [vmem:[%s194 + $0x20] sm:$0xff] %v585
      %828 = vst [vmem:[%s194 + $0x28] sm:$0xff] %v588
      %829 = vst [vmem:[%s194 + $0x30] sm:$0xff] %v593
      %830 = vst [vmem:[%s194 + $0x38] sm:$0xff] %v596
      %831 = vst [vmem:[%s194 + $0x40] sm:$0xff] %v601
      %832 = vst [vmem:[%s194 + $0x48] sm:$0xff] %v604
      %833 = vst [vmem:[%s194 + $0x50] sm:$0xff] %v609
      %834 = vst [vmem:[%s194 + $0x58] sm:$0xff] %v612
      %835 = vst [vmem:[%s194 + $0x60] sm:$0xff] %v617
      %836 = vst [vmem:[%s194 + $0x68] sm:$0xff] %v620
      %837 = vst [vmem:[%s194 + $0x70] sm:$0xff] %v625
      %838 = vst [vmem:[%s194 + $0x78] sm:$0xff] %v628
      %839 = vst [vmem:[%s194 + $0x80] sm:$0xff] %v633
      %840 = vst [vmem:[%s194 + $0x88] sm:$0xff] %v636
      %841 = vst [vmem:[%s194 + $0x90] sm:$0xff] %v641
      %842 = vst [vmem:[%s194 + $0x98] sm:$0xff] %v644
      %843 = vst [vmem:[%s194 + $0xa0] sm:$0xff] %v649
      %844 = vst [vmem:[%s194 + $0xa8] sm:$0xff] %v652
      %845 = vst [vmem:[%s194 + $0xb0] sm:$0xff] %v657
      %846 = vst [vmem:[%s194 + $0xb8] sm:$0xff] %v660
      %847 = vst [vmem:[%s194 + $0xc0] sm:$0xff] %v665
      %848 = vst [vmem:[%s194 + $0xc8] sm:$0xff] %v668
      %849 = vst [vmem:[%s194 + $0xd0] sm:$0xff] %v673
      %850 = vst [vmem:[%s194 + $0xd8] sm:$0xff] %v676
      %851 = vst [vmem:[%s194 + $0xe0] sm:$0xff] %v681
      %852 = vst [vmem:[%s194 + $0xe8] sm:$0xff] %v684
      %853 = vst [vmem:[%s194 + $0xf0] sm:$0xff] %v689
      %854 = vst [vmem:[%s194 + $0xf8] sm:$0xff] %v692
      %855 = vst [vmem:[%s194 + $0x100] sm:$0xff] %v697
      %856 = vst [vmem:[%s194 + $0x108] sm:$0xff] %v700
      %857 = vst [vmem:[%s194 + $0x110] sm:$0xff] %v705
      %858 = vst [vmem:[%s194 + $0x118] sm:$0xff] %v708
      %859 = vst [vmem:[%s194 + $0x120] sm:$0xff] %v713
      %860 = vst [vmem:[%s194 + $0x128] sm:$0xff] %v716
      %861 = vst [vmem:[%s194 + $0x130] sm:$0xff] %v721
      %862 = vst [vmem:[%s194 + $0x138] sm:$0xff] %v724
      %863 = vst [vmem:[%s194 + $0x140] sm:$0xff] %v729
      %864 = vst [vmem:[%s194 + $0x148] sm:$0xff] %v732
      %865 = vst [vmem:[%s194 + $0x150] sm:$0xff] %v737
      %866 = vst [vmem:[%s194 + $0x158] sm:$0xff] %v740
      %867 = vst [vmem:[%s194 + $0x160] sm:$0xff] %v745
      %868 = vst [vmem:[%s194 + $0x168] sm:$0xff] %v748
      %869 = vst [vmem:[%s194 + $0x170] sm:$0xff] %v753
      %870 = vst [vmem:[%s194 + $0x178] sm:$0xff] %v756
      %871 = vst [vmem:[%s194 + $0x180] sm:$0xff] %v761
      %872 = vst [vmem:[%s194 + $0x188] sm:$0xff] %v764
      %873 = vst [vmem:[%s194 + $0x190] sm:$0xff] %v769
      %874 = vst [vmem:[%s194 + $0x198] sm:$0xff] %v772
      %875 = vst [vmem:[%s194 + $0x1a0] sm:$0xff] %v777
      %876 = vst [vmem:[%s194 + $0x1a8] sm:$0xff] %v780
      %877 = vst [vmem:[%s194 + $0x1b0] sm:$0xff] %v785
      %878 = vst [vmem:[%s194 + $0x1b8] sm:$0xff] %v788
      %879 = vst [vmem:[%s194 + $0x1c0] sm:$0xff] %v793
      %880 = vst [vmem:[%s194 + $0x1c8] sm:$0xff] %v796
      %881 = vst [vmem:[%s194 + $0x1d0] sm:$0xff] %v801
      %882 = vst [vmem:[%s194 + $0x1d8] sm:$0xff] %v804
      %883 = vst [vmem:[%s194 + $0x1e0] sm:$0xff] %v809
      %884 = vst [vmem:[%s194 + $0x1e8] sm:$0xff] %v812
      %885 = vst [vmem:[%s194 + $0x1f0] sm:$0xff] %v817
      %886 = vst [vmem:[%s194 + $0x1f8] sm:$0xff] %v820
      %p887 = scmp.eq.s32.totalorder %s16, 0
      // Predicated region
      $region29: #{fcn_head_forward.3} parent=27 // pred_check
        %p888 = pneg %p887
      $region30: #{fcn_head_forward.3} parent=27 // pred_check_branch
        %890 = sbr.rel (%p888) target = $region32
      $region31: #{fcn_head_forward.3} parent=27 // pred_region
        %891 = vst [vmem:[%s3] sm:$0x1] 0.0
        %892 = vst [vmem:[%s4] sm:$0x1] 0.0
      $region32: #{fcn_head_forward.3} parent=27 // pred_fallthru
        _
      %v893 = vld [vmem:[%s3] sm:$0x1]
      %v894 = vadd.f32 %v569, %v572
      %v895 = vadd.f32 %v894, %v577
      %v896 = vadd.f32 %v895, %v580
      %v897 = vadd.f32 %v896, %v585
      %v898 = vadd.f32 %v897, %v588
      %v899 = vadd.f32 %v898, %v593
      %v900 = vadd.f32 %v899, %v596
      %v901 = vadd.f32 %v900, %v601
      %v902 = vadd.f32 %v901, %v604
      %v903 = vadd.f32 %v902, %v609
      %v904 = vadd.f32 %v903, %v612
      %v905 = vadd.f32 %v904, %v617
      %v906 = vadd.f32 %v905, %v620
      %v907 = vadd.f32 %v906, %v625
      %v908 = vadd.f32 %v907, %v628
      %v909 = vadd.f32 %v908, %v633
      %v910 = vadd.f32 %v909, %v636
      %v911 = vadd.f32 %v910, %v641
      %v912 = vadd.f32 %v911, %v644
      %v913 = vadd.f32 %v912, %v649
      %v914 = vadd.f32 %v913, %v652
      %v915 = vadd.f32 %v914, %v657
      %v916 = vadd.f32 %v915, %v660
      %v917 = vadd.f32 %v916, %v665
      %v918 = vadd.f32 %v917, %v668
      %v919 = vadd.f32 %v918, %v673
      %v920 = vadd.f32 %v919, %v676
      %v921 = vadd.f32 %v920, %v681
      %v922 = vadd.f32 %v921, %v684
      %v923 = vadd.f32 %v922, %v689
      %v924 = vadd.f32 %v923, %v692
      %v925 = vadd.f32 %v924, %v697
      %v926 = vadd.f32 %v925, %v700
      %v927 = vadd.f32 %v926, %v705
      %v928 = vadd.f32 %v927, %v708
      %v929 = vadd.f32 %v928, %v713
      %v930 = vadd.f32 %v929, %v716
      %v931 = vadd.f32 %v930, %v721
      %v932 = vadd.f32 %v931, %v724
      %v933 = vadd.f32 %v932, %v729
      %v934 = vadd.f32 %v933, %v732
      %v935 = vadd.f32 %v934, %v737
      %v936 = vadd.f32 %v935, %v740
      %v937 = vadd.f32 %v936, %v745
      %v938 = vadd.f32 %v937, %v748
      %v939 = vadd.f32 %v938, %v753
      %v940 = vadd.f32 %v939, %v756
      %v941 = vadd.f32 %v940, %v761
      %v942 = vadd.f32 %v941, %v764
      %v943 = vadd.f32 %v942, %v769
      %v944 = vadd.f32 %v943, %v772
      %v945 = vadd.f32 %v944, %v777
      %v946 = vadd.f32 %v945, %v780
      %v947 = vadd.f32 %v946, %v785
      %v948 = vadd.f32 %v947, %v788
      %v949 = vadd.f32 %v948, %v793
      %v950 = vadd.f32 %v949, %v796
      %v951 = vadd.f32 %v950, %v801
      %v952 = vadd.f32 %v951, %v804
      %v953 = vadd.f32 %v952, %v809
      %v954 = vadd.f32 %v953, %v812
      %v955 = vadd.f32 %v954, %v817
      %v956 = vadd.f32 %v955, %v820
      %v957 = vrot.slane %v956, 4
      %v958 = vadd.f32 %v956, %v957
      %v959 = vrot.slane %v958, 2
      %v960 = vadd.f32 %v958, %v959
      %v961 = vrot.slane %v960, 1
      %v962 = vadd.f32 %v960, %v961
      %v963 = vadd.f32 %v893, %v962
      %964 = vst [vmem:[%s3] sm:$0x1] %v963
      %v965 = vld [vmem:[%s4] sm:$0x1]
      %v966 = vmul.f32 %v569, %v569
      %v967 = vmul.f32 %v572, %v572
      %v968 = vmul.f32 %v577, %v577
      %v969 = vmul.f32 %v580, %v580
      %v970 = vmul.f32 %v585, %v585
      %v971 = vmul.f32 %v588, %v588
      %v972 = vmul.f32 %v593, %v593
      %v973 = vmul.f32 %v596, %v596
      %v974 = vmul.f32 %v601, %v601
      %v975 = vmul.f32 %v604, %v604
      %v976 = vmul.f32 %v609, %v609
      %v977 = vmul.f32 %v612, %v612
      %v978 = vmul.f32 %v617, %v617
      %v979 = vmul.f32 %v620, %v620
      %v980 = vmul.f32 %v625, %v625
      %v981 = vmul.f32 %v628, %v628
      %v982 = vmul.f32 %v633, %v633
      %v983 = vmul.f32 %v636, %v636
      %v984 = vmul.f32 %v641, %v641
      %v985 = vmul.f32 %v644, %v644
      %v986 = vmul.f32 %v649, %v649
      %v987 = vmul.f32 %v652, %v652
      %v988 = vmul.f32 %v657, %v657
      %v989 = vmul.f32 %v660, %v660
      %v990 = vmul.f32 %v665, %v665
      %v991 = vmul.f32 %v668, %v668
      %v992 = vmul.f32 %v673, %v673
      %v993 = vmul.f32 %v676, %v676
      %v994 = vmul.f32 %v681, %v681
      %v995 = vmul.f32 %v684, %v684
      %v996 = vmul.f32 %v689, %v689
      %v997 = vmul.f32 %v692, %v692
      %v998 = vmul.f32 %v697, %v697
      %v999 = vmul.f32 %v700, %v700
      %v1000 = vmul.f32 %v705, %v705
      %v1001 = vmul.f32 %v708, %v708
      %v1002 = vmul.f32 %v713, %v713
      %v1003 = vmul.f32 %v716, %v716
      %v1004 = vmul.f32 %v721, %v721
      %v1005 = vmul.f32 %v724, %v724
      %v1006 = vmul.f32 %v729, %v729
      %v1007 = vmul.f32 %v732, %v732
      %v1008 = vmul.f32 %v737, %v737
      %v1009 = vmul.f32 %v740, %v740
      %v1010 = vmul.f32 %v745, %v745
      %v1011 = vmul.f32 %v748, %v748
      %v1012 = vmul.f32 %v753, %v753
      %v1013 = vmul.f32 %v756, %v756
      %v1014 = vmul.f32 %v761, %v761
      %v1015 = vmul.f32 %v764, %v764
      %v1016 = vmul.f32 %v769, %v769
      %v1017 = vmul.f32 %v772, %v772
      %v1018 = vmul.f32 %v777, %v777
      %v1019 = vmul.f32 %v780, %v780
      %v1020 = vmul.f32 %v785, %v785
      %v1021 = vmul.f32 %v788, %v788
      %v1022 = vmul.f32 %v793, %v793
      %v1023 = vmul.f32 %v796, %v796
      %v1024 = vmul.f32 %v801, %v801
      %v1025 = vmul.f32 %v804, %v804
      %v1026 = vmul.f32 %v809, %v809
      %v1027 = vmul.f32 %v812, %v812
      %v1028 = vmul.f32 %v817, %v817
      %v1029 = vmul.f32 %v820, %v820
      %v1030 = vadd.f32 %v966, %v967
      %v1031 = vadd.f32 %v1030, %v968
      %v1032 = vadd.f32 %v1031, %v969
      %v1033 = vadd.f32 %v1032, %v970
      %v1034 = vadd.f32 %v1033, %v971
      %v1035 = vadd.f32 %v1034, %v972
      %v1036 = vadd.f32 %v1035, %v973
      %v1037 = vadd.f32 %v1036, %v974
      %v1038 = vadd.f32 %v1037, %v975
      %v1039 = vadd.f32 %v1038, %v976
      %v1040 = vadd.f32 %v1039, %v977
      %v1041 = vadd.f32 %v1040, %v978
      %v1042 = vadd.f32 %v1041, %v979
      %v1043 = vadd.f32 %v1042, %v980
      %v1044 = vadd.f32 %v1043, %v981
      %v1045 = vadd.f32 %v1044, %v982
      %v1046 = vadd.f32 %v1045, %v983
      %v1047 = vadd.f32 %v1046, %v984
      %v1048 = vadd.f32 %v1047, %v985
      %v1049 = vadd.f32 %v1048, %v986
      %v1050 = vadd.f32 %v1049, %v987
      %v1051 = vadd.f32 %v1050, %v988
      %v1052 = vadd.f32 %v1051, %v989
      %v1053 = vadd.f32 %v1052, %v990
      %v1054 = vadd.f32 %v1053, %v991
      %v1055 = vadd.f32 %v1054, %v992
      %v1056 = vadd.f32 %v1055, %v993
      %v1057 = vadd.f32 %v1056, %v994
      %v1058 = vadd.f32 %v1057, %v995
      %v1059 = vadd.f32 %v1058, %v996
      %v1060 = vadd.f32 %v1059, %v997
      %v1061 = vadd.f32 %v1060, %v998
      %v1062 = vadd.f32 %v1061, %v999
      %v1063 = vadd.f32 %v1062, %v1000
      %v1064 = vadd.f32 %v1063, %v1001
      %v1065 = vadd.f32 %v1064, %v1002
      %v1066 = vadd.f32 %v1065, %v1003
      %v1067 = vadd.f32 %v1066, %v1004
      %v1068 = vadd.f32 %v1067, %v1005
      %v1069 = vadd.f32 %v1068, %v1006
      %v1070 = vadd.f32 %v1069, %v1007
      %v1071 = vadd.f32 %v1070, %v1008
      %v1072 = vadd.f32 %v1071, %v1009
      %v1073 = vadd.f32 %v1072, %v1010
      %v1074 = vadd.f32 %v1073, %v1011
      %v1075 = vadd.f32 %v1074, %v1012
      %v1076 = vadd.f32 %v1075, %v1013
      %v1077 = vadd.f32 %v1076, %v1014
      %v1078 = vadd.f32 %v1077, %v1015
      %v1079 = vadd.f32 %v1078, %v1016
      %v1080 = vadd.f32 %v1079, %v1017
      %v1081 = vadd.f32 %v1080, %v1018
      %v1082 = vadd.f32 %v1081, %v1019
      %v1083 = vadd.f32 %v1082, %v1020
      %v1084 = vadd.f32 %v1083, %v1021
      %v1085 = vadd.f32 %v1084, %v1022
      %v1086 = vadd.f32 %v1085, %v1023
      %v1087 = vadd.f32 %v1086, %v1024
      %v1088 = vadd.f32 %v1087, %v1025
      %v1089 = vadd.f32 %v1088, %v1026
      %v1090 = vadd.f32 %v1089, %v1027
      %v1091 = vadd.f32 %v1090, %v1028
      %v1092 = vadd.f32 %v1091, %v1029
      %v1093 = vrot.slane %v1092, 4
      %v1094 = vadd.f32 %v1092, %v1093
      %v1095 = vrot.slane %v1094, 2
      %v1096 = vadd.f32 %v1094, %v1095
      %v1097 = vrot.slane %v1096, 1
      %v1098 = vadd.f32 %v1096, %v1097
      %v1099 = vadd.f32 %v965, %v1098
      %1100 = vst [vmem:[%s4] sm:$0x1] %v1099
      %s1101 = smul.u32 64, %s16
      %p1102 = scmp.lt.s32.totalorder %s1101, 127
      %s1103 = scalar_select %p1102, %s1101, 127
      %s1104 = smul.addr %s1103, 8
      %s1105 = scalar_lea.vmem %s2, %s1104
      // Predicated region
      $region33: #{fcn_head_forward.3} parent=27 // pred_check
        %p1106 = pneg %p81
      $region34: #{fcn_head_forward.3} parent=27 // pred_check_branch
        %1108 = sbr.rel (%p1106) target = $region36
      $region35: #{fcn_head_forward.3} parent=27 // pred_region
        %s1109 = smul.u32 64, %s16
      $region36: #{fcn_head_forward.3} parent=27 // pred_fallthru
        _
      // Predicated region
      $region37: #{fcn_head_forward.3} parent=27 // pred_check
        %p1110 = pneg %p102
      $region38: #{fcn_head_forward.3} parent=27 // pred_check_branch
        %1112 = sbr.rel (%p1110) target = $region40
      $region39: #{fcn_head_forward.3} parent=27 // pred_region
        _
      $region40: #{fcn_head_forward.3} parent=27 // pred_fallthru
        _
      // Predicated region
      $region41: #{fcn_head_forward.3} parent=27 // pred_check
        %p1113 = pneg %p123
      $region42: #{fcn_head_forward.3} parent=27 // pred_check_branch
        %1115 = sbr.rel (%p1113) target = $region44
      $region43: #{fcn_head_forward.3} parent=27 // pred_region
        _
      $region44: #{fcn_head_forward.3} parent=27 // pred_fallthru
        _
      // Predicated region
      $region45: #{fcn_head_forward.3} parent=27 // pred_check
        %p1116 = pneg %p102
      $region46: #{fcn_head_forward.3} parent=27 // pred_check_branch
        %1118 = sbr.rel (%p1116) target = $region48
      $region47: #{fcn_head_forward.3} parent=27 // pred_region
        _
      $region48: #{fcn_head_forward.3} parent=27 // pred_fallthru
        _
      // Predicated region
      $region49: #{fcn_head_forward.3} parent=27 // pred_check
        %p1119 = pneg %p123
      $region50: #{fcn_head_forward.3} parent=27 // pred_check_branch
        %1121 = sbr.rel (%p1119) target = $region52
      $region51: #{fcn_head_forward.3} parent=27 // pred_region
        _
      $region52: #{fcn_head_forward.3} parent=27 // pred_fallthru
        _
    $region28: #{fcn_head_forward.3} parent=5 // pred_fallthru
      _
    %p1122 = scmp.le.s32.totalorder 2, %s11
    // Predicated region
    $region53: #{fcn_head_forward.3} parent=5 // pred_check
      %p1123 = pneg %p1122
    $region54: #{fcn_head_forward.3} parent=5 // pred_check_branch
      %1125 = sbr.rel (%p1123) target = $region56
    $region55: #{fcn_head_forward.3} parent=5 // pred_region
      %s1126 = ssub.s32 %s11, 2
      // Predicated region
      $region57: #{fcn_head_forward.3} parent=55 // pred_check
        %p1127 = pneg %p87
      $region58: #{fcn_head_forward.3} parent=55 // pred_check_branch
        %1129 = sbr.rel (%p1127) target = $region60
      $region59: #{fcn_head_forward.3} parent=55 // pred_region
        %s1130 = smul.u32 64, %s17
        %p1131 = scmp.lt.s32.totalorder %s1130, 127
        %s1132 = scalar_select %p1131, %s1130, 127
        %s1133 = smul.addr %s1132, 8
        %s1134 = scalar_lea.vmem %s2, %s1133
      $region60: #{fcn_head_forward.3} parent=55 // pred_fallthru
        _
    $region56: #{fcn_head_forward.3} parent=5 // pred_fallthru
      _
  $region6: #{fcn_head_forward.3} parent=0 // loop_footer
    %s15 = sadd.s32 1, %s11
  $region7: #{fcn_head_forward.3} parent=0 // loop_footer_branch
    %10 = sbr.rel target = $region3
  $region8: #{fcn_head_forward.3} parent=0 // loop_exit
    _

// kernel: fcn_head_forward.4
$region0: #{fcn_head_forward.4}
  #allocation0 [shape = 'u32[]', space=smem, size = 0x4, offset = 0x4, fixed_abs, tag = 'smem constant byte address 0x4 - core index']
  #allocation1 [shape = 'u32[144,128]{1,0:T(1,128)}', space=vmem, size = 0x12000, scoped, tag = 'internal scratch']
  %s0 = inlined_call_operand.vmem [shape: f32[1024,128], index: 0, kind: input, shape index: {}]
  %s1 = inlined_call_operand.vmem [shape: f32[1,128], index: 1, kind: input, shape index: {}]
  %s2 = inlined_call_operand.vmem [shape: f32[1,128], index: 2, kind: input, shape index: {}]
  %s3 = inlined_call_operand.vmem [shape: bf16[128,128], index: 3, kind: input, shape index: {}]
  %s4 = inlined_call_operand.vmem [shape: f32[1024,128], index: 4, kind: output, shape index: {0}]
  %s5 = inlined_call_operand.vmem [shape: f32[1,128], index: 5, kind: output, shape index: {1}]
  %s6 = inlined_call_operand.vmem [shape: f32[1,128], index: 6, kind: output, shape index: {2}]
  %7 = xla_tuple %s4, %s5, %s6
  %s8 = sld [smem:[#allocation0]]
  $region69: #{fcn_head_forward.4} parent=0
    _
  %s10 = ssub.s32 1, %s8
  %s11 = scalar_select 0, %s10, %s8
  loop: start=0, step=1, limit=4
  $region2: #{fcn_head_forward.4} parent=0 // loop_pre_header
    _
  $region3: #{fcn_head_forward.4} parent=0 // loop_header
    %s13 = sphi 0, %s17
    %p14 = scmp.ge.s32.totalorder %s13, 4
    %s23 = sphi 0, %s25
    %s26 = sphi 0, %s23
    %s27 = sphi 0, %s26
    %s43 = sphi 0, %s27
    %s47 = sphi 0, %s47
    %s49 = sphi 0, %s47
    %s50 = sphi 0, %s49
    %s64 = sphi 0, %s50
    %s68 = sphi 0, %s68
    %s70 = sphi 0, %s68
    %s71 = sphi 0, %s70
    %s85 = sphi 0, %s71
    %s89 = sphi 0, %s89
    %s91 = sphi 0, %s89
    %s92 = sphi 0, %s91
    %s106 = sphi 0, %s92
    %s112 = sphi 0, %s114
    %s115 = sphi 0, %s112
    %s116 = sphi 0, %s115
    %s132 = sphi 0, %s116
    %s136 = sphi 0, %s136
    %s138 = sphi 0, %s136
    %s139 = sphi 0, %s138
    %s153 = sphi 0, %s139
    %s157 = sphi 0, %s157
    %s159 = sphi 0, %s157
    %s160 = sphi 0, %s159
    %s174 = sphi 0, %s160
  $region4: #{fcn_head_forward.4} parent=0 // loop_header_branch
    %16 = sbr.rel (%p14) target = $region8
  $region5: #{fcn_head_forward.4} parent=0 // loop_body
    %s18 = ssub.s32 %s13, 1
    %s19 = ssub.s32 %s13, 2
    %s20 = sadd.s32 %s13, 1
    %s21 = ssub.s32 %s13, %s20
    %p22 = scmp.eq.s32.totalorder %s21, 0
    %s24 = sadd.s32 %s23, 1
    %s25 = scalar_select %p22, %s23, %s24
    %p28 = pneg %p22
    %p29 = scmp.eq.s32.totalorder %s13, 1
    %p30 = por %p28, %p29
    %p31 = scmp.ne.s32.totalorder %s23, %s26
    %p32 = scmp.eq.s32.totalorder %s13, 0
    %p33 = por %p31, %p32
    %p34 = scmp.ne.s32.totalorder %s23, %s26
    %p35 = scmp.eq.s32.totalorder %s18, 1
    %p36 = por %p34, %p35
    %p37 = scmp.ne.s32.totalorder %s26, %s27
    %p38 = scmp.eq.s32.totalorder %s18, 0
    %p39 = por %p37, %p38
    %p40 = scmp.ne.s32.totalorder %s26, %s27
    %p41 = scmp.eq.s32.totalorder %s19, 1
    %p42 = por %p40, %p41
    %p44 = scmp.ne.s32.totalorder %s27, %s43
    %p45 = scmp.eq.s32.totalorder %s19, 0
    %p46 = por %p44, %p45
    %s48 = sadd.s32 %s47, 1
    %p51 = scmp.eq.s32.totalorder %s13, 1
    %p52 = scmp.ne.s32.totalorder %s47, %s49
    %p53 = scmp.eq.s32.totalorder %s13, 0
    %p54 = por %p52, %p53
    %p55 = scmp.ne.s32.totalorder %s47, %s49
    %p56 = scmp.eq.s32.totalorder %s18, 1
    %p57 = por %p55, %p56
    %p58 = scmp.ne.s32.totalorder %s49, %s50
    %p59 = scmp.eq.s32.totalorder %s18, 0
    %p60 = por %p58, %p59
    %p61 = scmp.ne.s32.totalorder %s49, %s50
    %p62 = scmp.eq.s32.totalorder %s19, 1
    %p63 = por %p61, %p62
    %p65 = scmp.ne.s32.totalorder %s50, %s64
    %p66 = scmp.eq.s32.totalorder %s19, 0
    %p67 = por %p65, %p66
    %s69 = sadd.s32 %s68, 1
    %p72 = scmp.eq.s32.totalorder %s13, 1
    %p73 = scmp.ne.s32.totalorder %s68, %s70
    %p74 = scmp.eq.s32.totalorder %s13, 0
    %p75 = por %p73, %p74
    %p76 = scmp.ne.s32.totalorder %s68, %s70
    %p77 = scmp.eq.s32.totalorder %s18, 1
    %p78 = por %p76, %p77
    %p79 = scmp.ne.s32.totalorder %s70, %s71
    %p80 = scmp.eq.s32.totalorder %s18, 0
    %p81 = por %p79, %p80
    %p82 = scmp.ne.s32.totalorder %s70, %s71
    %p83 = scmp.eq.s32.totalorder %s19, 1
    %p84 = por %p82, %p83
    %p86 = scmp.ne.s32.totalorder %s71, %s85
    %p87 = scmp.eq.s32.totalorder %s19, 0
    %p88 = por %p86, %p87
    %s90 = sadd.s32 %s89, 1
    %p93 = scmp.eq.s32.totalorder %s13, 1
    %p94 = scmp.ne.s32.totalorder %s89, %s91
    %p95 = scmp.eq.s32.totalorder %s13, 0
    %p96 = por %p94, %p95
    %p97 = scmp.ne.s32.totalorder %s89, %s91
    %p98 = scmp.eq.s32.totalorder %s18, 1
    %p99 = por %p97, %p98
    %p100 = scmp.ne.s32.totalorder %s91, %s92
    %p101 = scmp.eq.s32.totalorder %s18, 0
    %p102 = por %p100, %p101
    %p103 = scmp.ne.s32.totalorder %s91, %s92
    %p104 = scmp.eq.s32.totalorder %s19, 1
    %p105 = por %p103, %p104
    %p107 = scmp.ne.s32.totalorder %s92, %s106
    %p108 = scmp.eq.s32.totalorder %s19, 0
    %p109 = por %p107, %p108
    %s110 = ssub.s32 %s13, %s20
    %p111 = scmp.eq.s32.totalorder %s110, 0
    %s113 = sadd.s32 %s112, 1
    %s114 = scalar_select %p111, %s112, %s113
    %p117 = pneg %p111
    %p118 = scmp.eq.s32.totalorder %s13, 1
    %p119 = por %p117, %p118
    %p120 = scmp.ne.s32.totalorder %s112, %s115
    %p121 = scmp.eq.s32.totalorder %s13, 0
    %p122 = por %p120, %p121
    %p123 = scmp.ne.s32.totalorder %s112, %s115
    %p124 = scmp.eq.s32.totalorder %s18, 1
    %p125 = por %p123, %p124
    %p126 = scmp.ne.s32.totalorder %s115, %s116
    %p127 = scmp.eq.s32.totalorder %s18, 0
    %p128 = por %p126, %p127
    %p129 = scmp.ne.s32.totalorder %s115, %s116
    %p130 = scmp.eq.s32.totalorder %s19, 1
    %p131 = por %p129, %p130
    %p133 = scmp.ne.s32.totalorder %s116, %s132
    %p134 = scmp.eq.s32.totalorder %s19, 0
    %p135 = por %p133, %p134
    %s137 = sadd.s32 %s136, 1
    %p140 = scmp.eq.s32.totalorder %s13, 1
    %p141 = scmp.ne.s32.totalorder %s136, %s138
    %p142 = scmp.eq.s32.totalorder %s13, 0
    %p143 = por %p141, %p142
    %p144 = scmp.ne.s32.totalorder %s136, %s138
    %p145 = scmp.eq.s32.totalorder %s18, 1
    %p146 = por %p144, %p145
    %p147 = scmp.ne.s32.totalorder %s138, %s139
    %p148 = scmp.eq.s32.totalorder %s18, 0
    %p149 = por %p147, %p148
    %p150 = scmp.ne.s32.totalorder %s138, %s139
    %p151 = scmp.eq.s32.totalorder %s19, 1
    %p152 = por %p150, %p151
    %p154 = scmp.ne.s32.totalorder %s139, %s153
    %p155 = scmp.eq.s32.totalorder %s19, 0
    %p156 = por %p154, %p155
    %s158 = sadd.s32 %s157, 1
    %p161 = scmp.eq.s32.totalorder %s13, 1
    %p162 = scmp.ne.s32.totalorder %s157, %s159
    %p163 = scmp.eq.s32.totalorder %s13, 0
    %p164 = por %p162, %p163
    %p165 = scmp.ne.s32.totalorder %s157, %s159
    %p166 = scmp.eq.s32.totalorder %s18, 1
    %p167 = por %p165, %p166
    %p168 = scmp.ne.s32.totalorder %s159, %s160
    %p169 = scmp.eq.s32.totalorder %s18, 0
    %p170 = por %p168, %p169
    %p171 = scmp.ne.s32.totalorder %s159, %s160
    %p172 = scmp.eq.s32.totalorder %s19, 1
    %p173 = por %p171, %p172
    %p175 = scmp.ne.s32.totalorder %s160, %s174
    %p176 = scmp.eq.s32.totalorder %s19, 0
    %p177 = por %p175, %p176
    %p178 = scmp.le.s32.totalorder 1, %s13
    %p179 = scmp.lt.s32.totalorder %s13, 3
    %p180 = pnand %p178, %p179
    %p181 = pneg %p180
    // Predicated region
    $region9: #{fcn_head_forward.4} parent=5 // pred_check
      _
    $region10: #{fcn_head_forward.4} parent=5 // pred_check_branch
      %183 = sbr.rel (%p180) target = $region12
    $region11: #{fcn_head_forward.4} parent=5 // pred_region
      %s184 = ssub.s32 %s13, 1
      // Predicated region
      $region13: #{fcn_head_forward.4} parent=11 // pred_check
        %p185 = pneg %p60
      $region14: #{fcn_head_forward.4} parent=11 // pred_check_branch
        %187 = sbr.rel (%p185) target = $region16
      $region15: #{fcn_head_forward.4} parent=11 // pred_region
        _
      $region16: #{fcn_head_forward.4} parent=11 // pred_fallthru
        _
      // Predicated region
      $region17: #{fcn_head_forward.4} parent=11 // pred_check
        %p188 = pneg %p81
      $region18: #{fcn_head_forward.4} parent=11 // pred_check_branch
        %190 = sbr.rel (%p188) target = $region20
      $region19: #{fcn_head_forward.4} parent=11 // pred_region
        _
      $region20: #{fcn_head_forward.4} parent=11 // pred_fallthru
        _
      // Predicated region
      $region21: #{fcn_head_forward.4} parent=11 // pred_check
        %p191 = pneg %p102
      $region22: #{fcn_head_forward.4} parent=11 // pred_check_branch
        %193 = sbr.rel (%p191) target = $region24
      $region23: #{fcn_head_forward.4} parent=11 // pred_region
        _
      $region24: #{fcn_head_forward.4} parent=11 // pred_fallthru
        _
    $region12: #{fcn_head_forward.4} parent=5 // pred_fallthru
      _
    %p194 = scmp.lt.s32.totalorder %s13, 2
    // Predicated region
    $region25: #{fcn_head_forward.4} parent=5 // pred_check
      %p195 = pneg %p194
    $region26: #{fcn_head_forward.4} parent=5 // pred_check_branch
      %197 = sbr.rel (%p195) target = $region28
    $region27: #{fcn_head_forward.4} parent=5 // pred_region
      // Predicated region
      $region29: #{fcn_head_forward.4} parent=27 // pred_check
        %p198 = pneg %p33
      $region30: #{fcn_head_forward.4} parent=27 // pred_check_branch
        %200 = sbr.rel (%p198) target = $region32
      $region31: #{fcn_head_forward.4} parent=27 // pred_region
        %s201 = smul.u32 64, %s13
        %p202 = scmp.lt.s32.totalorder %s201, 127
        %s203 = scalar_select %p202, %s201, 127
        %s204 = smul.addr %s203, 8
        %s205 = scalar_lea.vmem %s0, %s204
        %s206 = smul.u32 64, %s13
      $region32: #{fcn_head_forward.4} parent=27 // pred_fallthru
        _
    $region28: #{fcn_head_forward.4} parent=5 // pred_fallthru
      _
    %p207 = scmp.le.s32.totalorder 1, %s13
    %p208 = scmp.lt.s32.totalorder %s13, 3
    %p209 = pnand %p207, %p208
    %p210 = pneg %p209
    // Predicated region
    $region33: #{fcn_head_forward.4} parent=5 // pred_check
      _
    $region34: #{fcn_head_forward.4} parent=5 // pred_check_branch
      %212 = sbr.rel (%p209) target = $region36
    $region35: #{fcn_head_forward.4} parent=5 // pred_region
      %s213 = ssub.s32 %s13, 1
      %s214 = smul.u32 64, %s18
      %p215 = scmp.lt.s32.totalorder %s214, 127
      %s216 = scalar_select %p215, %s214, 127
      %s217 = smul.addr %s216, 8
      %s218 = scalar_lea.vmem %s0, %s217
      %p219 = pneg %p39
      %p220 = pneg %p36
      %p221 = pneg %p60
      %p222 = pneg %p57
      %p223 = pneg %p81
      %p224 = pneg %p78
      %p225 = pneg %p102
      %p226 = pneg %p99
      %p227 = pneg %p128
      %p228 = pneg %p125
      %s229 = smul.u32 64, %s18
      %p230 = scmp.lt.s32.totalorder %s229, 127
      %s231 = scalar_select %p230, %s229, 127
      %s232 = smul.addr %s231, 8
      %s233 = scalar_lea.vmem %s4, %s232
      %p234 = pneg %p149
      %p235 = pneg %p146
      %p236 = pneg %p170
      %p237 = pneg %p167
      %s238 = smul.u32 64, %s18
      %p239 = scmp.lt.s32.totalorder %s238, 127
      %s240 = scalar_select %p239, %s238, 127
      %s241 = smul.addr %s240, 8
      %s242 = scalar_lea.vmem %s0, %s241
      %s243 = smul.u32 64, %s18
      %s244 = smul.u32 64, %s18
      %p245 = scmp.lt.s32.totalorder %s244, 127
      %s246 = scalar_select %p245, %s244, 127
      %s247 = smul.addr %s246, 8
      %s248 = scalar_lea.vmem %s4, %s247
      %s249 = smul.u32 64, %s18
      %v251 = vld [vmem:[%s242] sm:$0xff]
      %v252 = vld [vmem:[%s242 + $0x8] sm:$0xff]
      %v253 = vld [vmem:[%s242 + $0x10] sm:$0xff]
      %v254 = vld [vmem:[%s242 + $0x18] sm:$0xff]
      %v255 = vld [vmem:[%s242 + $0x20] sm:$0xff]
      %v256 = vld [vmem:[%s242 + $0x28] sm:$0xff]
      %v257 = vld [vmem:[%s242 + $0x30] sm:$0xff]
      %v258 = vld [vmem:[%s242 + $0x38] sm:$0xff]
      %v259 = vld [vmem:[%s242 + $0x40] sm:$0xff]
      %v260 = vld [vmem:[%s242 + $0x48] sm:$0xff]
      %v261 = vld [vmem:[%s242 + $0x50] sm:$0xff]
      %v262 = vld [vmem:[%s242 + $0x58] sm:$0xff]
      %v263 = vld [vmem:[%s242 + $0x60] sm:$0xff]
      %v264 = vld [vmem:[%s242 + $0x68] sm:$0xff]
      %v265 = vld [vmem:[%s242 + $0x70] sm:$0xff]
      %v266 = vld [vmem:[%s242 + $0x78] sm:$0xff]
      %v267 = vld [vmem:[%s242 + $0x80] sm:$0xff]
      %v268 = vld [vmem:[%s242 + $0x88] sm:$0xff]
      %v269 = vld [vmem:[%s242 + $0x90] sm:$0xff]
      %v270 = vld [vmem:[%s242 + $0x98] sm:$0xff]
      %v271 = vld [vmem:[%s242 + $0xa0] sm:$0xff]
      %v272 = vld [vmem:[%s242 + $0xa8] sm:$0xff]
      %v273 = vld [vmem:[%s242 + $0xb0] sm:$0xff]
      %v274 = vld [vmem:[%s242 + $0xb8] sm:$0xff]
      %v275 = vld [vmem:[%s242 + $0xc0] sm:$0xff]
      %v276 = vld [vmem:[%s242 + $0xc8] sm:$0xff]
      %v277 = vld [vmem:[%s242 + $0xd0] sm:$0xff]
      %v278 = vld [vmem:[%s242 + $0xd8] sm:$0xff]
      %v279 = vld [vmem:[%s242 + $0xe0] sm:$0xff]
      %v280 = vld [vmem:[%s242 + $0xe8] sm:$0xff]
      %v281 = vld [vmem:[%s242 + $0xf0] sm:$0xff]
      %v282 = vld [vmem:[%s242 + $0xf8] sm:$0xff]
      %v283 = vld [vmem:[%s242 + $0x100] sm:$0xff]
      %v284 = vld [vmem:[%s242 + $0x108] sm:$0xff]
      %v285 = vld [vmem:[%s242 + $0x110] sm:$0xff]
      %v286 = vld [vmem:[%s242 + $0x118] sm:$0xff]
      %v287 = vld [vmem:[%s242 + $0x120] sm:$0xff]
      %v288 = vld [vmem:[%s242 + $0x128] sm:$0xff]
      %v289 = vld [vmem:[%s242 + $0x130] sm:$0xff]
      %v290 = vld [vmem:[%s242 + $0x138] sm:$0xff]
      %v291 = vld [vmem:[%s242 + $0x140] sm:$0xff]
      %v292 = vld [vmem:[%s242 + $0x148] sm:$0xff]
      %v293 = vld [vmem:[%s242 + $0x150] sm:$0xff]
      %v294 = vld [vmem:[%s242 + $0x158] sm:$0xff]
      %v295 = vld [vmem:[%s242 + $0x160] sm:$0xff]
      %v296 = vld [vmem:[%s242 + $0x168] sm:$0xff]
      %v297 = vld [vmem:[%s242 + $0x170] sm:$0xff]
      %v298 = vld [vmem:[%s242 + $0x178] sm:$0xff]
      %v299 = vld [vmem:[%s242 + $0x180] sm:$0xff]
      %v300 = vld [vmem:[%s242 + $0x188] sm:$0xff]
      %v301 = vld [vmem:[%s242 + $0x190] sm:$0xff]
      %v302 = vld [vmem:[%s242 + $0x198] sm:$0xff]
      %v303 = vld [vmem:[%s242 + $0x1a0] sm:$0xff]
      %v304 = vld [vmem:[%s242 + $0x1a8] sm:$0xff]
      %v305 = vld [vmem:[%s242 + $0x1b0] sm:$0xff]
      %v306 = vld [vmem:[%s242 + $0x1b8] sm:$0xff]
      %v307 = vld [vmem:[%s242 + $0x1c0] sm:$0xff]
      %v308 = vld [vmem:[%s242 + $0x1c8] sm:$0xff]
      %v309 = vld [vmem:[%s242 + $0x1d0] sm:$0xff]
      %v310 = vld [vmem:[%s242 + $0x1d8] sm:$0xff]
      %v311 = vld [vmem:[%s242 + $0x1e0] sm:$0xff]
      %v312 = vld [vmem:[%s242 + $0x1e8] sm:$0xff]
      %v313 = vld [vmem:[%s242 + $0x1f0] sm:$0xff]
      %v314 = vld [vmem:[%s242 + $0x1f8] sm:$0xff]
      %v315 = vld [vmem:[%s1] sm:$0x1]
      %v317 = vlaneseq
      %v318 = vshrl.u32 %v317, 7
      %v319 = vsub.s32 0, %v318
      %v320 = vrot.slane %v315, %v319
      %v322 = vmul.f32 %v251, %v320
      %v323 = vmul.f32 %v252, %v320
      %v324 = vmul.f32 %v253, %v320
      %v325 = vmul.f32 %v254, %v320
      %v326 = vmul.f32 %v255, %v320
      %v327 = vmul.f32 %v256, %v320
      %v328 = vmul.f32 %v257, %v320
      %v329 = vmul.f32 %v258, %v320
      %v330 = vmul.f32 %v259, %v320
      %v331 = vmul.f32 %v260, %v320
      %v332 = vmul.f32 %v261, %v320
      %v333 = vmul.f32 %v262, %v320
      %v334 = vmul.f32 %v263, %v320
      %v335 = vmul.f32 %v264, %v320
      %v336 = vmul.f32 %v265, %v320
      %v337 = vmul.f32 %v266, %v320
      %v338 = vmul.f32 %v267, %v320
      %v339 = vmul.f32 %v268, %v320
      %v340 = vmul.f32 %v269, %v320
      %v341 = vmul.f32 %v270, %v320
      %v342 = vmul.f32 %v271, %v320
      %v343 = vmul.f32 %v272, %v320
      %v344 = vmul.f32 %v273, %v320
      %v345 = vmul.f32 %v274, %v320
      %v346 = vmul.f32 %v275, %v320
      %v347 = vmul.f32 %v276, %v320
      %v348 = vmul.f32 %v277, %v320
      %v349 = vmul.f32 %v278, %v320
      %v350 = vmul.f32 %v279, %v320
      %v351 = vmul.f32 %v280, %v320
      %v352 = vmul.f32 %v281, %v320
      %v353 = vmul.f32 %v282, %v320
      %v354 = vmul.f32 %v283, %v320
      %v355 = vmul.f32 %v284, %v320
      %v356 = vmul.f32 %v285, %v320
      %v357 = vmul.f32 %v286, %v320
      %v358 = vmul.f32 %v287, %v320
      %v359 = vmul.f32 %v288, %v320
      %v360 = vmul.f32 %v289, %v320
      %v361 = vmul.f32 %v290, %v320
      %v362 = vmul.f32 %v291, %v320
      %v363 = vmul.f32 %v292, %v320
      %v364 = vmul.f32 %v293, %v320
      %v365 = vmul.f32 %v294, %v320
      %v366 = vmul.f32 %v295, %v320
      %v367 = vmul.f32 %v296, %v320
      %v368 = vmul.f32 %v297, %v320
      %v369 = vmul.f32 %v298, %v320
      %v370 = vmul.f32 %v299, %v320
      %v371 = vmul.f32 %v300, %v320
      %v372 = vmul.f32 %v301, %v320
      %v373 = vmul.f32 %v302, %v320
      %v374 = vmul.f32 %v303, %v320
      %v375 = vmul.f32 %v304, %v320
      %v376 = vmul.f32 %v305, %v320
      %v377 = vmul.f32 %v306, %v320
      %v378 = vmul.f32 %v307, %v320
      %v379 = vmul.f32 %v308, %v320
      %v380 = vmul.f32 %v309, %v320
      %v381 = vmul.f32 %v310, %v320
      %v382 = vmul.f32 %v311, %v320
      %v383 = vmul.f32 %v312, %v320
      %v384 = vmul.f32 %v313, %v320
      %v385 = vmul.f32 %v314, %v320
      %v386 = vld [vmem:[%s2] sm:$0x1]
      %v388 = vlaneseq
      %v389 = vshrl.u32 %v388, 7
      %v390 = vsub.s32 0, %v389
      %v391 = vrot.slane %v386, %v390
      %v393 = vadd.f32 %v322, %v391
      %v394 = vadd.f32 %v323, %v391
      %v395 = vadd.f32 %v324, %v391
      %v396 = vadd.f32 %v325, %v391
      %v397 = vadd.f32 %v326, %v391
      %v398 = vadd.f32 %v327, %v391
      %v399 = vadd.f32 %v328, %v391
      %v400 = vadd.f32 %v329, %v391
      %v401 = vadd.f32 %v330, %v391
      %v402 = vadd.f32 %v331, %v391
      %v403 = vadd.f32 %v332, %v391
      %v404 = vadd.f32 %v333, %v391
      %v405 = vadd.f32 %v334, %v391
      %v406 = vadd.f32 %v335, %v391
      %v407 = vadd.f32 %v336, %v391
      %v408 = vadd.f32 %v337, %v391
      %v409 = vadd.f32 %v338, %v391
      %v410 = vadd.f32 %v339, %v391
      %v411 = vadd.f32 %v340, %v391
      %v412 = vadd.f32 %v341, %v391
      %v413 = vadd.f32 %v342, %v391
      %v414 = vadd.f32 %v343, %v391
      %v415 = vadd.f32 %v344, %v391
      %v416 = vadd.f32 %v345, %v391
      %v417 = vadd.f32 %v346, %v391
      %v418 = vadd.f32 %v347, %v391
      %v419 = vadd.f32 %v348, %v391
      %v420 = vadd.f32 %v349, %v391
      %v421 = vadd.f32 %v350, %v391
      %v422 = vadd.f32 %v351, %v391
      %v423 = vadd.f32 %v352, %v391
      %v424 = vadd.f32 %v353, %v391
      %v425 = vadd.f32 %v354, %v391
      %v426 = vadd.f32 %v355, %v391
      %v427 = vadd.f32 %v356, %v391
      %v428 = vadd.f32 %v357, %v391
      %v429 = vadd.f32 %v358, %v391
      %v430 = vadd.f32 %v359, %v391
      %v431 = vadd.f32 %v360, %v391
      %v432 = vadd.f32 %v361, %v391
      %v433 = vadd.f32 %v362, %v391
      %v434 = vadd.f32 %v363, %v391
      %v435 = vadd.f32 %v364, %v391
      %v436 = vadd.f32 %v365, %v391
      %v437 = vadd.f32 %v366, %v391
      %v438 = vadd.f32 %v367, %v391
      %v439 = vadd.f32 %v368, %v391
      %v440 = vadd.f32 %v369, %v391
      %v441 = vadd.f32 %v370, %v391
      %v442 = vadd.f32 %v371, %v391
      %v443 = vadd.f32 %v372, %v391
      %v444 = vadd.f32 %v373, %v391
      %v445 = vadd.f32 %v374, %v391
      %v446 = vadd.f32 %v375, %v391
      %v447 = vadd.f32 %v376, %v391
      %v448 = vadd.f32 %v377, %v391
      %v449 = vadd.f32 %v378, %v391
      %v450 = vadd.f32 %v379, %v391
      %v451 = vadd.f32 %v380, %v391
      %v452 = vadd.f32 %v381, %v391
      %v453 = vadd.f32 %v382, %v391
      %v454 = vadd.f32 %v383, %v391
      %v455 = vadd.f32 %v384, %v391
      %v456 = vadd.f32 %v385, %v391
      %v457 = vmax.f32 %v393, 0.0
      %v458 = vmax.f32 %v394, 0.0
      %v459 = vmax.f32 %v395, 0.0
      %v460 = vmax.f32 %v396, 0.0
      %v461 = vmax.f32 %v397, 0.0
      %v462 = vmax.f32 %v398, 0.0
      %v463 = vmax.f32 %v399, 0.0
      %v464 = vmax.f32 %v400, 0.0
      %v465 = vmax.f32 %v401, 0.0
      %v466 = vmax.f32 %v402, 0.0
      %v467 = vmax.f32 %v403, 0.0
      %v468 = vmax.f32 %v404, 0.0
      %v469 = vmax.f32 %v405, 0.0
      %v470 = vmax.f32 %v406, 0.0
      %v471 = vmax.f32 %v407, 0.0
      %v472 = vmax.f32 %v408, 0.0
      %v473 = vmax.f32 %v409, 0.0
      %v474 = vmax.f32 %v410, 0.0
      %v475 = vmax.f32 %v411, 0.0
      %v476 = vmax.f32 %v412, 0.0
      %v477 = vmax.f32 %v413, 0.0
      %v478 = vmax.f32 %v414, 0.0
      %v479 = vmax.f32 %v415, 0.0
      %v480 = vmax.f32 %v416, 0.0
      %v481 = vmax.f32 %v417, 0.0
      %v482 = vmax.f32 %v418, 0.0
      %v483 = vmax.f32 %v419, 0.0
      %v484 = vmax.f32 %v420, 0.0
      %v485 = vmax.f32 %v421, 0.0
      %v486 = vmax.f32 %v422, 0.0
      %v487 = vmax.f32 %v423, 0.0
      %v488 = vmax.f32 %v424, 0.0
      %v489 = vmax.f32 %v425, 0.0
      %v490 = vmax.f32 %v426, 0.0
      %v491 = vmax.f32 %v427, 0.0
      %v492 = vmax.f32 %v428, 0.0
      %v493 = vmax.f32 %v429, 0.0
      %v494 = vmax.f32 %v430, 0.0
      %v495 = vmax.f32 %v431, 0.0
      %v496 = vmax.f32 %v432, 0.0
      %v497 = vmax.f32 %v433, 0.0
      %v498 = vmax.f32 %v434, 0.0
      %v499 = vmax.f32 %v435, 0.0
      %v500 = vmax.f32 %v436, 0.0
      %v501 = vmax.f32 %v437, 0.0
      %v502 = vmax.f32 %v438, 0.0
      %v503 = vmax.f32 %v439, 0.0
      %v504 = vmax.f32 %v440, 0.0
      %v505 = vmax.f32 %v441, 0.0
      %v506 = vmax.f32 %v442, 0.0
      %v507 = vmax.f32 %v443, 0.0
      %v508 = vmax.f32 %v444, 0.0
      %v509 = vmax.f32 %v445, 0.0
      %v510 = vmax.f32 %v446, 0.0
      %v511 = vmax.f32 %v447, 0.0
      %v512 = vmax.f32 %v448, 0.0
      %v513 = vmax.f32 %v449, 0.0
      %v514 = vmax.f32 %v450, 0.0
      %v515 = vmax.f32 %v451, 0.0
      %v516 = vmax.f32 %v452, 0.0
      %v517 = vmax.f32 %v453, 0.0
      %v518 = vmax.f32 %v454, 0.0
      %v519 = vmax.f32 %v455, 0.0
      %v520 = vmax.f32 %v456, 0.0
      %v521 = vpack.c.bf16 %v458, %v457
      %v522 = vpack.c.bf16 %v460, %v459
      %v523 = vpack.c.bf16 %v462, %v461
      %v524 = vpack.c.bf16 %v464, %v463
      %v525 = vpack.c.bf16 %v466, %v465
      %v526 = vpack.c.bf16 %v468, %v467
      %v527 = vpack.c.bf16 %v470, %v469
      %v528 = vpack.c.bf16 %v472, %v471
      %v529 = vpack.c.bf16 %v474, %v473
      %v530 = vpack.c.bf16 %v476, %v475
      %v531 = vpack.c.bf16 %v478, %v477
      %v532 = vpack.c.bf16 %v480, %v479
      %v533 = vpack.c.bf16 %v482, %v481
      %v534 = vpack.c.bf16 %v484, %v483
      %v535 = vpack.c.bf16 %v486, %v485
      %v536 = vpack.c.bf16 %v488, %v487
      %v537 = vpack.c.bf16 %v490, %v489
      %v538 = vpack.c.bf16 %v492, %v491
      %v539 = vpack.c.bf16 %v494, %v493
      %v540 = vpack.c.bf16 %v496, %v495
      %v541 = vpack.c.bf16 %v498, %v497
      %v542 = vpack.c.bf16 %v500, %v499
      %v543 = vpack.c.bf16 %v502, %v501
      %v544 = vpack.c.bf16 %v504, %v503
      %v545 = vpack.c.bf16 %v506, %v505
      %v546 = vpack.c.bf16 %v508, %v507
      %v547 = vpack.c.bf16 %v510, %v509
      %v548 = vpack.c.bf16 %v512, %v511
      %v549 = vpack.c.bf16 %v514, %v513
      %v550 = vpack.c.bf16 %v516, %v515
      %v551 = vpack.c.bf16 %v518, %v517
      %v552 = vpack.c.bf16 %v520, %v519
      %v553 = vld [vmem:[%s3] sm:$0xf]
      %v554 = vld [vmem:[%s3 + $0x4] sm:$0xf]
      %v555 = vld [vmem:[%s3 + $0x8] sm:$0xf]
      %v556 = vld [vmem:[%s3 + $0xc] sm:$0xf]
      %v557 = vld [vmem:[%s3 + $0x10] sm:$0xf]
      %v558 = vld [vmem:[%s3 + $0x14] sm:$0xf]
      %v559 = vld [vmem:[%s3 + $0x18] sm:$0xf]
      %v560 = vld [vmem:[%s3 + $0x1c] sm:$0xf]
      %v561 = vld [vmem:[%s3 + $0x20] sm:$0xf]
      %v562 = vld [vmem:[%s3 + $0x24] sm:$0xf]
      %v563 = vld [vmem:[%s3 + $0x28] sm:$0xf]
      %v564 = vld [vmem:[%s3 + $0x2c] sm:$0xf]
      %v565 = vld [vmem:[%s3 + $0x30] sm:$0xf]
      %v566 = vld [vmem:[%s3 + $0x34] sm:$0xf]
      %v567 = vld [vmem:[%s3 + $0x38] sm:$0xf]
      %v568 = vld [vmem:[%s3 + $0x3c] sm:$0xf]
      %v585 = vunpack.c.l.b16 %v553
      %v586 = vunpack.c.l.b16 %v554
      %v587 = vunpack.c.l.b16 %v555
      %v588 = vunpack.c.l.b16 %v556
      %v589 = vunpack.c.l.b16 %v557
      %v590 = vunpack.c.l.b16 %v558
      %v591 = vunpack.c.l.b16 %v559
      %v592 = vunpack.c.l.b16 %v560
      %v593 = vunpack.c.l.b16 %v561
      %v594 = vunpack.c.l.b16 %v562
      %v595 = vunpack.c.l.b16 %v563
      %v596 = vunpack.c.l.b16 %v564
      %v597 = vunpack.c.l.b16 %v565
      %v598 = vunpack.c.l.b16 %v566
      %v599 = vunpack.c.l.b16 %v567
      %v600 = vunpack.c.l.b16 %v568
      %v601 = vpack.c.b16 %v586, %v585
      %v602 = vpack.c.b16 %v588, %v587
      %v603 = vpack.c.b16 %v590, %v589
      %v604 = vpack.c.b16 %v592, %v591
      %v605 = vpack.c.b16 %v594, %v593
      %v606 = vpack.c.b16 %v596, %v595
      %v607 = vpack.c.b16 %v598, %v597
      %v608 = vpack.c.b16 %v600, %v599
      %617 = vmatprep.subr.bf16.mxu0 0
      %618 = vmatpush1.bf16.msra.mxu0 %v601
      %619 = vmatprep.subr.bf16.mxu0 0
      %620 = vmatpush1.bf16.msra.mxu0 %v602
      %621 = vmatprep.subr.bf16.mxu0 0
      %622 = vmatpush1.bf16.msra.mxu0 %v603
      %623 = vmatprep.subr.bf16.mxu0 0
      %624 = vmatpush1.bf16.msra.mxu0 %v604
      %625 = vmatprep.subr.bf16.mxu0 0
      %626 = vmatpush1.bf16.msra.mxu0 %v605
      %627 = vmatprep.subr.bf16.mxu0 0
      %628 = vmatpush1.bf16.msra.mxu0 %v606
      %629 = vmatprep.subr.bf16.mxu0 0
      %630 = vmatpush1.bf16.msra.mxu0 %v607
      %631 = vmatprep.subr.bf16.mxu0 0
      %632 = vmatpush1.bf16.msra.mxu0 %v608
      %633 = vmatprep.subr.bf16.mxu0 0
      %634 = vmatpush1.bf16.msra.mxu0 0
      %635 = vmatprep.subr.bf16.mxu0 0
      %636 = vmatpush1.bf16.msra.mxu0 0
      %637 = vmatprep.subr.bf16.mxu0 0
      %638 = vmatpush1.bf16.msra.mxu0 0
      %639 = vmatprep.subr.bf16.mxu0 0
      %640 = vmatpush1.bf16.msra.mxu0 0
      %641 = vmatprep.subr.bf16.mxu0 0
      %642 = vmatpush1.bf16.msra.mxu0 0
      %643 = vmatprep.subr.bf16.mxu0 0
      %644 = vmatpush1.bf16.msra.mxu0 0
      %645 = vmatprep.subr.bf16.mxu0 0
      %646 = vmatpush1.bf16.msra.mxu0 0
      %647 = vmatprep.subr.bf16.mxu0 0
      %648 = vmatpush1.bf16.msra.mxu0 0
      %649 = vmatprep.mubr.bf16.mxu0 0
      %650 = vmatmul.mubr.bf16.gmra.mrb[0].mxu0 %v521
      %v651 = vpop.f32.mrb[0].mxu0
      %v652 = vadd.f32 0.0, %v651
      %v653 = vpop.f32.mrb[0].mxu0
      %v654 = vpop.f32.mrb[0].mxu0
      %v655 = vadd.f32 0.0, %v654
      %v656 = vpop.f32.mrb[0].mxu0
      %657 = vmatprep.mubr.bf16.mxu0 0
      %658 = vmatmul.mubr.bf16.gmra.mrb[0].mxu0 %v522
      %v659 = vpop.f32.mrb[0].mxu0
      %v660 = vadd.f32 0.0, %v659
      %v661 = vpop.f32.mrb[0].mxu0
      %v662 = vpop.f32.mrb[0].mxu0
      %v663 = vadd.f32 0.0, %v662
      %v664 = vpop.f32.mrb[0].mxu0
      %665 = vmatprep.mubr.bf16.mxu0 0
      %666 = vmatmul.mubr.bf16.gmra.mrb[0].mxu0 %v523
      %v667 = vpop.f32.mrb[0].mxu0
      %v668 = vadd.f32 0.0, %v667
      %v669 = vpop.f32.mrb[0].mxu0
      %v670 = vpop.f32.mrb[0].mxu0
      %v671 = vadd.f32 0.0, %v670
      %v672 = vpop.f32.mrb[0].mxu0
      %673 = vmatprep.mubr.bf16.mxu0 0
      %674 = vmatmul.mubr.bf16.gmra.mrb[0].mxu0 %v524
      %v675 = vpop.f32.mrb[0].mxu0
      %v676 = vadd.f32 0.0, %v675
      %v677 = vpop.f32.mrb[0].mxu0
      %v678 = vpop.f32.mrb[0].mxu0
      %v679 = vadd.f32 0.0, %v678
      %v680 = vpop.f32.mrb[0].mxu0
      %681 = vmatprep.mubr.bf16.mxu0 0
      %682 = vmatmul.mubr.bf16.gmra.mrb[0].mxu0 %v525
      %v683 = vpop.f32.mrb[0].mxu0
      %v684 = vadd.f32 0.0, %v683
      %v685 = vpop.f32.mrb[0].mxu0
      %v686 = vpop.f32.mrb[0].mxu0
      %v687 = vadd.f32 0.0, %v686
      %v688 = vpop.f32.mrb[0].mxu0
      %689 = vmatprep.mubr.bf16.mxu0 0
      %690 = vmatmul.mubr.bf16.gmra.mrb[0].mxu0 %v526
      %v691 = vpop.f32.mrb[0].mxu0
      %v692 = vadd.f32 0.0, %v691
      %v693 = vpop.f32.mrb[0].mxu0
      %v694 = vpop.f32.mrb[0].mxu0
      %v695 = vadd.f32 0.0, %v694
      %v696 = vpop.f32.mrb[0].mxu0
      %697 = vmatprep.mubr.bf16.mxu0 0
      %698 = vmatmul.mubr.bf16.gmra.mrb[0].mxu0 %v527
      %v699 = vpop.f32.mrb[0].mxu0
      %v700 = vadd.f32 0.0, %v699
      %v701 = vpop.f32.mrb[0].mxu0
      %v702 = vpop.f32.mrb[0].mxu0
      %v703 = vadd.f32 0.0, %v702
      %v704 = vpop.f32.mrb[0].mxu0
      %705 = vmatprep.mubr.bf16.mxu0 0
      %706 = vmatmul.mubr.bf16.gmra.mrb[0].mxu0 %v528
      %v707 = vpop.f32.mrb[0].mxu0
      %v708 = vadd.f32 0.0, %v707
      %v709 = vpop.f32.mrb[0].mxu0
      %v710 = vpop.f32.mrb[0].mxu0
      %v711 = vadd.f32 0.0, %v710
      %v712 = vpop.f32.mrb[0].mxu0
      %713 = vmatprep.mubr.bf16.mxu0 0
      %714 = vmatmul.mubr.bf16.gmra.mrb[0].mxu0 %v529
      %v715 = vpop.f32.mrb[0].mxu0
      %v716 = vadd.f32 0.0, %v715
      %v717 = vpop.f32.mrb[0].mxu0
      %v718 = vpop.f32.mrb[0].mxu0
      %v719 = vadd.f32 0.0, %v718
      %v720 = vpop.f32.mrb[0].mxu0
      %721 = vmatprep.mubr.bf16.mxu0 0
      %722 = vmatmul.mubr.bf16.gmra.mrb[0].mxu0 %v530
      %v723 = vpop.f32.mrb[0].mxu0
      %v724 = vadd.f32 0.0, %v723
      %v725 = vpop.f32.mrb[0].mxu0
      %v726 = vpop.f32.mrb[0].mxu0
      %v727 = vadd.f32 0.0, %v726
      %v728 = vpop.f32.mrb[0].mxu0
      %729 = vmatprep.mubr.bf16.mxu0 0
      %730 = vmatmul.mubr.bf16.gmra.mrb[0].mxu0 %v531
      %v731 = vpop.f32.mrb[0].mxu0
      %v732 = vadd.f32 0.0, %v731
      %v733 = vpop.f32.mrb[0].mxu0
      %v734 = vpop.f32.mrb[0].mxu0
      %v735 = vadd.f32 0.0, %v734
      %v736 = vpop.f32.mrb[0].mxu0
      %737 = vmatprep.mubr.bf16.mxu0 0
      %738 = vmatmul.mubr.bf16.gmra.mrb[0].mxu0 %v532
      %v739 = vpop.f32.mrb[0].mxu0
      %v740 = vadd.f32 0.0, %v739
      %v741 = vpop.f32.mrb[0].mxu0
      %v742 = vpop.f32.mrb[0].mxu0
      %v743 = vadd.f32 0.0, %v742
      %v744 = vpop.f32.mrb[0].mxu0
      %745 = vmatprep.mubr.bf16.mxu0 0
      %746 = vmatmul.mubr.bf16.gmra.mrb[0].mxu0 %v533
      %v747 = vpop.f32.mrb[0].mxu0
      %v748 = vadd.f32 0.0, %v747
      %v749 = vpop.f32.mrb[0].mxu0
      %v750 = vpop.f32.mrb[0].mxu0
      %v751 = vadd.f32 0.0, %v750
      %v752 = vpop.f32.mrb[0].mxu0
      %753 = vmatprep.mubr.bf16.mxu0 0
      %754 = vmatmul.mubr.bf16.gmra.mrb[0].mxu0 %v534
      %v755 = vpop.f32.mrb[0].mxu0
      %v756 = vadd.f32 0.0, %v755
      %v757 = vpop.f32.mrb[0].mxu0
      %v758 = vpop.f32.mrb[0].mxu0
      %v759 = vadd.f32 0.0, %v758
      %v760 = vpop.f32.mrb[0].mxu0
      %761 = vmatprep.mubr.bf16.mxu0 0
      %762 = vmatmul.mubr.bf16.gmra.mrb[0].mxu0 %v535
      %v763 = vpop.f32.mrb[0].mxu0
      %v764 = vadd.f32 0.0, %v763
      %v765 = vpop.f32.mrb[0].mxu0
      %v766 = vpop.f32.mrb[0].mxu0
      %v767 = vadd.f32 0.0, %v766
      %v768 = vpop.f32.mrb[0].mxu0
      %769 = vmatprep.mubr.bf16.mxu0 0
      %770 = vmatmul.mubr.bf16.gmra.mrb[0].mxu0 %v536
      %v771 = vpop.f32.mrb[0].mxu0
      %v772 = vadd.f32 0.0, %v771
      %v773 = vpop.f32.mrb[0].mxu0
      %v774 = vpop.f32.mrb[0].mxu0
      %v775 = vadd.f32 0.0, %v774
      %v776 = vpop.f32.mrb[0].mxu0
      %777 = vmatprep.mubr.bf16.mxu0 0
      %778 = vmatmul.mubr.bf16.gmra.mrb[0].mxu0 %v537
      %v779 = vpop.f32.mrb[0].mxu0
      %v780 = vadd.f32 0.0, %v779
      %v781 = vpop.f32.mrb[0].mxu0
      %v782 = vpop.f32.mrb[0].mxu0
      %v783 = vadd.f32 0.0, %v782
      %v784 = vpop.f32.mrb[0].mxu0
      %785 = vmatprep.mubr.bf16.mxu0 0
      %786 = vmatmul.mubr.bf16.gmra.mrb[0].mxu0 %v538
      %v787 = vpop.f32.mrb[0].mxu0
      %v788 = vadd.f32 0.0, %v787
      %v789 = vpop.f32.mrb[0].mxu0
      %v790 = vpop.f32.mrb[0].mxu0
      %v791 = vadd.f32 0.0, %v790
      %v792 = vpop.f32.mrb[0].mxu0
      %793 = vmatprep.mubr.bf16.mxu0 0
      %794 = vmatmul.mubr.bf16.gmra.mrb[0].mxu0 %v539
      %v795 = vpop.f32.mrb[0].mxu0
      %v796 = vadd.f32 0.0, %v795
      %v797 = vpop.f32.mrb[0].mxu0
      %v798 = vpop.f32.mrb[0].mxu0
      %v799 = vadd.f32 0.0, %v798
      %v800 = vpop.f32.mrb[0].mxu0
      %801 = vmatprep.mubr.bf16.mxu0 0
      %802 = vmatmul.mubr.bf16.gmra.mrb[0].mxu0 %v540
      %v803 = vpop.f32.mrb[0].mxu0
      %v804 = vadd.f32 0.0, %v803
      %v805 = vpop.f32.mrb[0].mxu0
      %v806 = vpop.f32.mrb[0].mxu0
      %v807 = vadd.f32 0.0, %v806
      %v808 = vpop.f32.mrb[0].mxu0
      %809 = vmatprep.mubr.bf16.mxu0 0
      %810 = vmatmul.mubr.bf16.gmra.mrb[0].mxu0 %v541
      %v811 = vpop.f32.mrb[0].mxu0
      %v812 = vadd.f32 0.0, %v811
      %v813 = vpop.f32.mrb[0].mxu0
      %v814 = vpop.f32.mrb[0].mxu0
      %v815 = vadd.f32 0.0, %v814
      %v816 = vpop.f32.mrb[0].mxu0
      %817 = vmatprep.mubr.bf16.mxu0 0
      %818 = vmatmul.mubr.bf16.gmra.mrb[0].mxu0 %v542
      %v819 = vpop.f32.mrb[0].mxu0
      %v820 = vadd.f32 0.0, %v819
      %v821 = vpop.f32.mrb[0].mxu0
      %v822 = vpop.f32.mrb[0].mxu0
      %v823 = vadd.f32 0.0, %v822
      %v824 = vpop.f32.mrb[0].mxu0
      %825 = vmatprep.mubr.bf16.mxu0 0
      %826 = vmatmul.mubr.bf16.gmra.mrb[0].mxu0 %v543
      %v827 = vpop.f32.mrb[0].mxu0
      %v828 = vadd.f32 0.0, %v827
      %v829 = vpop.f32.mrb[0].mxu0
      %v830 = vpop.f32.mrb[0].mxu0
      %v831 = vadd.f32 0.0, %v830
      %v832 = vpop.f32.mrb[0].mxu0
      %833 = vmatprep.mubr.bf16.mxu0 0
      %834 = vmatmul.mubr.bf16.gmra.mrb[0].mxu0 %v544
      %v835 = vpop.f32.mrb[0].mxu0
      %v836 = vadd.f32 0.0, %v835
      %v837 = vpop.f32.mrb[0].mxu0
      %v838 = vpop.f32.mrb[0].mxu0
      %v839 = vadd.f32 0.0, %v838
      %v840 = vpop.f32.mrb[0].mxu0
      %841 = vmatprep.mubr.bf16.mxu0 0
      %842 = vmatmul.mubr.bf16.gmra.mrb[0].mxu0 %v545
      %v843 = vpop.f32.mrb[0].mxu0
      %v844 = vadd.f32 0.0, %v843
      %v845 = vpop.f32.mrb[0].mxu0
      %v846 = vpop.f32.mrb[0].mxu0
      %v847 = vadd.f32 0.0, %v846
      %v848 = vpop.f32.mrb[0].mxu0
      %849 = vmatprep.mubr.bf16.mxu0 0
      %850 = vmatmul.mubr.bf16.gmra.mrb[0].mxu0 %v546
      %v851 = vpop.f32.mrb[0].mxu0
      %v852 = vadd.f32 0.0, %v851
      %v853 = vpop.f32.mrb[0].mxu0
      %v854 = vpop.f32.mrb[0].mxu0
      %v855 = vadd.f32 0.0, %v854
      %v856 = vpop.f32.mrb[0].mxu0
      %857 = vmatprep.mubr.bf16.mxu0 0
      %858 = vmatmul.mubr.bf16.gmra.mrb[0].mxu0 %v547
      %v859 = vpop.f32.mrb[0].mxu0
      %v860 = vadd.f32 0.0, %v859
      %v861 = vpop.f32.mrb[0].mxu0
      %v862 = vpop.f32.mrb[0].mxu0
      %v863 = vadd.f32 0.0, %v862
      %v864 = vpop.f32.mrb[0].mxu0
      %865 = vmatprep.mubr.bf16.mxu0 0
      %866 = vmatmul.mubr.bf16.gmra.mrb[0].mxu0 %v548
      %v867 = vpop.f32.mrb[0].mxu0
      %v868 = vadd.f32 0.0, %v867
      %v869 = vpop.f32.mrb[0].mxu0
      %v870 = vpop.f32.mrb[0].mxu0
      %v871 = vadd.f32 0.0, %v870
      %v872 = vpop.f32.mrb[0].mxu0
      %873 = vmatprep.mubr.bf16.mxu0 0
      %874 = vmatmul.mubr.bf16.gmra.mrb[0].mxu0 %v549
      %v875 = vpop.f32.mrb[0].mxu0
      %v876 = vadd.f32 0.0, %v875
      %v877 = vpop.f32.mrb[0].mxu0
      %v878 = vpop.f32.mrb[0].mxu0
      %v879 = vadd.f32 0.0, %v878
      %v880 = vpop.f32.mrb[0].mxu0
      %881 = vmatprep.mubr.bf16.mxu0 0
      %882 = vmatmul.mubr.bf16.gmra.mrb[0].mxu0 %v550
      %v883 = vpop.f32.mrb[0].mxu0
      %v884 = vadd.f32 0.0, %v883
      %v885 = vpop.f32.mrb[0].mxu0
      %v886 = vpop.f32.mrb[0].mxu0
      %v887 = vadd.f32 0.0, %v886
      %v888 = vpop.f32.mrb[0].mxu0
      %889 = vmatprep.mubr.bf16.mxu0 0
      %890 = vmatmul.mubr.bf16.gmra.mrb[0].mxu0 %v551
      %v891 = vpop.f32.mrb[0].mxu0
      %v892 = vadd.f32 0.0, %v891
      %v893 = vpop.f32.mrb[0].mxu0
      %v894 = vpop.f32.mrb[0].mxu0
      %v895 = vadd.f32 0.0, %v894
      %v896 = vpop.f32.mrb[0].mxu0
      %897 = vmatprep.mubr.bf16.mxu0 0
      %898 = vmatmul.mubr.bf16.gmra.mrb[0].mxu0 %v552
      %v899 = vpop.f32.mrb[0].mxu0
      %v900 = vadd.f32 0.0, %v899
      %v901 = vpop.f32.mrb[0].mxu0
      %v902 = vpop.f32.mrb[0].mxu0
      %v903 = vadd.f32 0.0, %v902
      %v904 = vpop.f32.mrb[0].mxu0
      %905 = vdwg.mxu0
      %s906 = smul.u32 %s18, 512
      %v907 = vlaneseq
      %v908 = vshrl.u32 %v907, 7
      %v909 = vadd.s32 %v908, 8
      %v910 = vadd.s32 %v908, 16
      %v911 = vadd.s32 %v908, 24
      %v912 = vadd.s32 %v908, 32
      %v913 = vadd.s32 %v908, 40
      %v914 = vadd.s32 %v908, 48
      %v915 = vadd.s32 %v908, 56
      %v916 = vadd.s32 %v908, 64
      %v917 = vadd.s32 %v908, 72
      %v918 = vadd.s32 %v908, 80
      %v919 = vadd.s32 %v908, 88
      %v920 = vadd.s32 %v908, 96
      %v921 = vadd.s32 %v908, 104
      %v922 = vadd.s32 %v908, 112
      %v923 = vadd.s32 %v908, 120
      %v924 = vadd.s32 %v908, 128
      %v925 = vadd.s32 %v908, 136
      %v926 = vadd.s32 %v908, 144
      %v927 = vadd.s32 %v908, 152
      %v928 = vadd.s32 %v908, 160
      %v929 = vadd.s32 %v908, 168
      %v930 = vadd.s32 %v908, 176
      %v931 = vadd.s32 %v908, 184
      %v932 = vadd.s32 %v908, 192
      %v933 = vadd.s32 %v908, 200
      %v934 = vadd.s32 %v908, 208
      %v935 = vadd.s32 %v908, 216
      %v936 = vadd.s32 %v908, 224
      %v937 = vadd.s32 %v908, 232
      %v938 = vadd.s32 %v908, 240
      %v939 = vadd.s32 %v908, 248
      %v940 = vadd.s32 %v908, 256
      %v941 = vadd.s32 %v908, 264
      %v942 = vadd.s32 %v908, 272
      %v943 = vadd.s32 %v908, 280
      %v944 = vadd.s32 %v908, 288
      %v945 = vadd.s32 %v908, 296
      %v946 = vadd.s32 %v908, 304
      %v947 = vadd.s32 %v908, 312
      %v948 = vadd.s32 %v908, 320
      %v949 = vadd.s32 %v908, 328
      %v950 = vadd.s32 %v908, 336
      %v951 = vadd.s32 %v908, 344
      %v952 = vadd.s32 %v908, 352
      %v953 = vadd.s32 %v908, 360
      %v954 = vadd.s32 %v908, 368
      %v955 = vadd.s32 %v908, 376
      %v956 = vadd.s32 %v908, 384
      %v957 = vadd.s32 %v908, 392
      %v958 = vadd.s32 %v908, 400
      %v959 = vadd.s32 %v908, 408
      %v960 = vadd.s32 %v908, 416
      %v961 = vadd.s32 %v908, 424
      %v962 = vadd.s32 %v908, 432
      %v963 = vadd.s32 %v908, 440
      %v964 = vadd.s32 %v908, 448
      %v965 = vadd.s32 %v908, 456
      %v966 = vadd.s32 %v908, 464
      %v967 = vadd.s32 %v908, 472
      %v968 = vadd.s32 %v908, 480
      %v969 = vadd.s32 %v908, 488
      %v970 = vadd.s32 %v908, 496
      %v971 = vadd.s32 %v908, 504
      %v972 = vstv %s906
      %v973 = vadd.s32 %v972, %v908
      %v974 = vadd.s32 %v972, %v909
      %v975 = vadd.s32 %v972, %v910
      %v976 = vadd.s32 %v972, %v911
      %v977 = vadd.s32 %v972, %v912
      %v978 = vadd.s32 %v972, %v913
      %v979 = vadd.s32 %v972, %v914
      %v980 = vadd.s32 %v972, %v915
      %v981 = vadd.s32 %v972, %v916
      %v982 = vadd.s32 %v972, %v917
      %v983 = vadd.s32 %v972, %v918
      %v984 = vadd.s32 %v972, %v919
      %v985 = vadd.s32 %v972, %v920
      %v986 = vadd.s32 %v972, %v921
      %v987 = vadd.s32 %v972, %v922
      %v988 = vadd.s32 %v972, %v923
      %v989 = vadd.s32 %v972, %v924
      %v990 = vadd.s32 %v972, %v925
      %v991 = vadd.s32 %v972, %v926
      %v992 = vadd.s32 %v972, %v927
      %v993 = vadd.s32 %v972, %v928
      %v994 = vadd.s32 %v972, %v929
      %v995 = vadd.s32 %v972, %v930
      %v996 = vadd.s32 %v972, %v931
      %v997 = vadd.s32 %v972, %v932
      %v998 = vadd.s32 %v972, %v933
      %v999 = vadd.s32 %v972, %v934
      %v1000 = vadd.s32 %v972, %v935
      %v1001 = vadd.s32 %v972, %v936
      %v1002 = vadd.s32 %v972, %v937
      %v1003 = vadd.s32 %v972, %v938
      %v1004 = vadd.s32 %v972, %v939
      %v1005 = vadd.s32 %v972, %v940
      %v1006 = vadd.s32 %v972, %v941
      %v1007 = vadd.s32 %v972, %v942
      %v1008 = vadd.s32 %v972, %v943
      %v1009 = vadd.s32 %v972, %v944
      %v1010 = vadd.s32 %v972, %v945
      %v1011 = vadd.s32 %v972, %v946
      %v1012 = vadd.s32 %v972, %v947
      %v1013 = vadd.s32 %v972, %v948
      %v1014 = vadd.s32 %v972, %v949
      %v1015 = vadd.s32 %v972, %v950
      %v1016 = vadd.s32 %v972, %v951
      %v1017 = vadd.s32 %v972, %v952
      %v1018 = vadd.s32 %v972, %v953
      %v1019 = vadd.s32 %v972, %v954
      %v1020 = vadd.s32 %v972, %v955
      %v1021 = vadd.s32 %v972, %v956
      %v1022 = vadd.s32 %v972, %v957
      %v1023 = vadd.s32 %v972, %v958
      %v1024 = vadd.s32 %v972, %v959
      %v1025 = vadd.s32 %v972, %v960
      %v1026 = vadd.s32 %v972, %v961
      %v1027 = vadd.s32 %v972, %v962
      %v1028 = vadd.s32 %v972, %v963
      %v1029 = vadd.s32 %v972, %v964
      %v1030 = vadd.s32 %v972, %v965
      %v1031 = vadd.s32 %v972, %v966
      %v1032 = vadd.s32 %v972, %v967
      %v1033 = vadd.s32 %v972, %v968
      %v1034 = vadd.s32 %v972, %v969
      %v1035 = vadd.s32 %v972, %v970
      %v1036 = vadd.s32 %v972, %v971
      %vm1037 = vcmp.lt.s32.totalorder %v973, 600
      %vm1038 = vcmp.lt.s32.totalorder %v974, 600
      %vm1039 = vcmp.lt.s32.totalorder %v975, 600
      %vm1040 = vcmp.lt.s32.totalorder %v976, 600
      %vm1041 = vcmp.lt.s32.totalorder %v977, 600
      %vm1042 = vcmp.lt.s32.totalorder %v978, 600
      %vm1043 = vcmp.lt.s32.totalorder %v979, 600
      %vm1044 = vcmp.lt.s32.totalorder %v980, 600
      %vm1045 = vcmp.lt.s32.totalorder %v981, 600
      %vm1046 = vcmp.lt.s32.totalorder %v982, 600
      %vm1047 = vcmp.lt.s32.totalorder %v983, 600
      %vm1048 = vcmp.lt.s32.totalorder %v984, 600
      %vm1049 = vcmp.lt.s32.totalorder %v985, 600
      %vm1050 = vcmp.lt.s32.totalorder %v986, 600
      %vm1051 = vcmp.lt.s32.totalorder %v987, 600
      %vm1052 = vcmp.lt.s32.totalorder %v988, 600
      %vm1053 = vcmp.lt.s32.totalorder %v989, 600
      %vm1054 = vcmp.lt.s32.totalorder %v990, 600
      %vm1055 = vcmp.lt.s32.totalorder %v991, 600
      %vm1056 = vcmp.lt.s32.totalorder %v992, 600
      %vm1057 = vcmp.lt.s32.totalorder %v993, 600
      %vm1058 = vcmp.lt.s32.totalorder %v994, 600
      %vm1059 = vcmp.lt.s32.totalorder %v995, 600
      %vm1060 = vcmp.lt.s32.totalorder %v996, 600
      %vm1061 = vcmp.lt.s32.totalorder %v997, 600
      %vm1062 = vcmp.lt.s32.totalorder %v998, 600
      %vm1063 = vcmp.lt.s32.totalorder %v999, 600
      %vm1064 = vcmp.lt.s32.totalorder %v1000, 600
      %vm1065 = vcmp.lt.s32.totalorder %v1001, 600
      %vm1066 = vcmp.lt.s32.totalorder %v1002, 600
      %vm1067 = vcmp.lt.s32.totalorder %v1003, 600
      %vm1068 = vcmp.lt.s32.totalorder %v1004, 600
      %vm1069 = vcmp.lt.s32.totalorder %v1005, 600
      %vm1070 = vcmp.lt.s32.totalorder %v1006, 600
      %vm1071 = vcmp.lt.s32.totalorder %v1007, 600
      %vm1072 = vcmp.lt.s32.totalorder %v1008, 600
      %vm1073 = vcmp.lt.s32.totalorder %v1009, 600
      %vm1074 = vcmp.lt.s32.totalorder %v1010, 600
      %vm1075 = vcmp.lt.s32.totalorder %v1011, 600
      %vm1076 = vcmp.lt.s32.totalorder %v1012, 600
      %vm1077 = vcmp.lt.s32.totalorder %v1013, 600
      %vm1078 = vcmp.lt.s32.totalorder %v1014, 600
      %vm1079 = vcmp.lt.s32.totalorder %v1015, 600
      %vm1080 = vcmp.lt.s32.totalorder %v1016, 600
      %vm1081 = vcmp.lt.s32.totalorder %v1017, 600
      %vm1082 = vcmp.lt.s32.totalorder %v1018, 600
      %vm1083 = vcmp.lt.s32.totalorder %v1019, 600
      %vm1084 = vcmp.lt.s32.totalorder %v1020, 600
      %vm1085 = vcmp.lt.s32.totalorder %v1021, 600
      %vm1086 = vcmp.lt.s32.totalorder %v1022, 600
      %vm1087 = vcmp.lt.s32.totalorder %v1023, 600
      %vm1088 = vcmp.lt.s32.totalorder %v1024, 600
      %vm1089 = vcmp.lt.s32.totalorder %v1025, 600
      %vm1090 = vcmp.lt.s32.totalorder %v1026, 600
      %vm1091 = vcmp.lt.s32.totalorder %v1027, 600
      %vm1092 = vcmp.lt.s32.totalorder %v1028, 600
      %vm1093 = vcmp.lt.s32.totalorder %v1029, 600
      %vm1094 = vcmp.lt.s32.totalorder %v1030, 600
      %vm1095 = vcmp.lt.s32.totalorder %v1031, 600
      %vm1096 = vcmp.lt.s32.totalorder %v1032, 600
      %vm1097 = vcmp.lt.s32.totalorder %v1033, 600
      %vm1098 = vcmp.lt.s32.totalorder %v1034, 600
      %vm1099 = vcmp.lt.s32.totalorder %v1035, 600
      %vm1100 = vcmp.lt.s32.totalorder %v1036, 600
      %v1101 = vsel %vm1037, 1, 0
      %v1102 = vsel %vm1038, 1, 0
      %v1103 = vsel %vm1039, 1, 0
      %v1104 = vsel %vm1040, 1, 0
      %v1105 = vsel %vm1041, 1, 0
      %v1106 = vsel %vm1042, 1, 0
      %v1107 = vsel %vm1043, 1, 0
      %v1108 = vsel %vm1044, 1, 0
      %v1109 = vsel %vm1045, 1, 0
      %v1110 = vsel %vm1046, 1, 0
      %v1111 = vsel %vm1047, 1, 0
      %v1112 = vsel %vm1048, 1, 0
      %v1113 = vsel %vm1049, 1, 0
      %v1114 = vsel %vm1050, 1, 0
      %v1115 = vsel %vm1051, 1, 0
      %v1116 = vsel %vm1052, 1, 0
      %v1117 = vsel %vm1053, 1, 0
      %v1118 = vsel %vm1054, 1, 0
      %v1119 = vsel %vm1055, 1, 0
      %v1120 = vsel %vm1056, 1, 0
      %v1121 = vsel %vm1057, 1, 0
      %v1122 = vsel %vm1058, 1, 0
      %v1123 = vsel %vm1059, 1, 0
      %v1124 = vsel %vm1060, 1, 0
      %v1125 = vsel %vm1061, 1, 0
      %v1126 = vsel %vm1062, 1, 0
      %v1127 = vsel %vm1063, 1, 0
      %v1128 = vsel %vm1064, 1, 0
      %v1129 = vsel %vm1065, 1, 0
      %v1130 = vsel %vm1066, 1, 0
      %v1131 = vsel %vm1067, 1, 0
      %v1132 = vsel %vm1068, 1, 0
      %v1133 = vsel %vm1069, 1, 0
      %v1134 = vsel %vm1070, 1, 0
      %v1135 = vsel %vm1071, 1, 0
      %v1136 = vsel %vm1072, 1, 0
      %v1137 = vsel %vm1073, 1, 0
      %v1138 = vsel %vm1074, 1, 0
      %v1139 = vsel %vm1075, 1, 0
      %v1140 = vsel %vm1076, 1, 0
      %v1141 = vsel %vm1077, 1, 0
      %v1142 = vsel %vm1078, 1, 0
      %v1143 = vsel %vm1079, 1, 0
      %v1144 = vsel %vm1080, 1, 0
      %v1145 = vsel %vm1081, 1, 0
      %v1146 = vsel %vm1082, 1, 0
      %v1147 = vsel %vm1083, 1, 0
      %v1148 = vsel %vm1084, 1, 0
      %v1149 = vsel %vm1085, 1, 0
      %v1150 = vsel %vm1086, 1, 0
      %v1151 = vsel %vm1087, 1, 0
      %v1152 = vsel %vm1088, 1, 0
      %v1153 = vsel %vm1089, 1, 0
      %v1154 = vsel %vm1090, 1, 0
      %v1155 = vsel %vm1091, 1, 0
      %v1156 = vsel %vm1092, 1, 0
      %v1157 = vsel %vm1093, 1, 0
      %v1158 = vsel %vm1094, 1, 0
      %v1159 = vsel %vm1095, 1, 0
      %v1160 = vsel %vm1096, 1, 0
      %v1161 = vsel %vm1097, 1, 0
      %v1162 = vsel %vm1098, 1, 0
      %v1163 = vsel %vm1099, 1, 0
      %v1164 = vsel %vm1100, 1, 0
      %vm1165 = vcmp.eq.s32.totalorder %v1101, 1
      %vm1166 = vcmp.eq.s32.totalorder %v1102, 1
      %vm1167 = vcmp.eq.s32.totalorder %v1103, 1
      %vm1168 = vcmp.eq.s32.totalorder %v1104, 1
      %vm1169 = vcmp.eq.s32.totalorder %v1105, 1
      %vm1170 = vcmp.eq.s32.totalorder %v1106, 1
      %vm1171 = vcmp.eq.s32.totalorder %v1107, 1
      %vm1172 = vcmp.eq.s32.totalorder %v1108, 1
      %vm1173 = vcmp.eq.s32.totalorder %v1109, 1
      %vm1174 = vcmp.eq.s32.totalorder %v1110, 1
      %vm1175 = vcmp.eq.s32.totalorder %v1111, 1
      %vm1176 = vcmp.eq.s32.totalorder %v1112, 1
      %vm1177 = vcmp.eq.s32.totalorder %v1113, 1
      %vm1178 = vcmp.eq.s32.totalorder %v1114, 1
      %vm1179 = vcmp.eq.s32.totalorder %v1115, 1
      %vm1180 = vcmp.eq.s32.totalorder %v1116, 1
      %vm1181 = vcmp.eq.s32.totalorder %v1117, 1
      %vm1182 = vcmp.eq.s32.totalorder %v1118, 1
      %vm1183 = vcmp.eq.s32.totalorder %v1119, 1
      %vm1184 = vcmp.eq.s32.totalorder %v1120, 1
      %vm1185 = vcmp.eq.s32.totalorder %v1121, 1
      %vm1186 = vcmp.eq.s32.totalorder %v1122, 1
      %vm1187 = vcmp.eq.s32.totalorder %v1123, 1
      %vm1188 = vcmp.eq.s32.totalorder %v1124, 1
      %vm1189 = vcmp.eq.s32.totalorder %v1125, 1
      %vm1190 = vcmp.eq.s32.totalorder %v1126, 1
      %vm1191 = vcmp.eq.s32.totalorder %v1127, 1
      %vm1192 = vcmp.eq.s32.totalorder %v1128, 1
      %vm1193 = vcmp.eq.s32.totalorder %v1129, 1
      %vm1194 = vcmp.eq.s32.totalorder %v1130, 1
      %vm1195 = vcmp.eq.s32.totalorder %v1131, 1
      %vm1196 = vcmp.eq.s32.totalorder %v1132, 1
      %vm1197 = vcmp.eq.s32.totalorder %v1133, 1
      %vm1198 = vcmp.eq.s32.totalorder %v1134, 1
      %vm1199 = vcmp.eq.s32.totalorder %v1135, 1
      %vm1200 = vcmp.eq.s32.totalorder %v1136, 1
      %vm1201 = vcmp.eq.s32.totalorder %v1137, 1
      %vm1202 = vcmp.eq.s32.totalorder %v1138, 1
      %vm1203 = vcmp.eq.s32.totalorder %v1139, 1
      %vm1204 = vcmp.eq.s32.totalorder %v1140, 1
      %vm1205 = vcmp.eq.s32.totalorder %v1141, 1
      %vm1206 = vcmp.eq.s32.totalorder %v1142, 1
      %vm1207 = vcmp.eq.s32.totalorder %v1143, 1
      %vm1208 = vcmp.eq.s32.totalorder %v1144, 1
      %vm1209 = vcmp.eq.s32.totalorder %v1145, 1
      %vm1210 = vcmp.eq.s32.totalorder %v1146, 1
      %vm1211 = vcmp.eq.s32.totalorder %v1147, 1
      %vm1212 = vcmp.eq.s32.totalorder %v1148, 1
      %vm1213 = vcmp.eq.s32.totalorder %v1149, 1
      %vm1214 = vcmp.eq.s32.totalorder %v1150, 1
      %vm1215 = vcmp.eq.s32.totalorder %v1151, 1
      %vm1216 = vcmp.eq.s32.totalorder %v1152, 1
      %vm1217 = vcmp.eq.s32.totalorder %v1153, 1
      %vm1218 = vcmp.eq.s32.totalorder %v1154, 1
      %vm1219 = vcmp.eq.s32.totalorder %v1155, 1
      %vm1220 = vcmp.eq.s32.totalorder %v1156, 1
      %vm1221 = vcmp.eq.s32.totalorder %v1157, 1
      %vm1222 = vcmp.eq.s32.totalorder %v1158, 1
      %vm1223 = vcmp.eq.s32.totalorder %v1159, 1
      %vm1224 = vcmp.eq.s32.totalorder %v1160, 1
      %vm1225 = vcmp.eq.s32.totalorder %v1161, 1
      %vm1226 = vcmp.eq.s32.totalorder %v1162, 1
      %vm1227 = vcmp.eq.s32.totalorder %v1163, 1
      %vm1228 = vcmp.eq.s32.totalorder %v1164, 1
      %v1229 = vsel %vm1165, %v652, 0.0
      %v1230 = vsel %vm1166, %v655, 0.0
      %v1231 = vsel %vm1167, %v660, 0.0
      %v1232 = vsel %vm1168, %v663, 0.0
      %v1233 = vsel %vm1169, %v668, 0.0
      %v1234 = vsel %vm1170, %v671, 0.0
      %v1235 = vsel %vm1171, %v676, 0.0
      %v1236 = vsel %vm1172, %v679, 0.0
      %v1237 = vsel %vm1173, %v684, 0.0
      %v1238 = vsel %vm1174, %v687, 0.0
      %v1239 = vsel %vm1175, %v692, 0.0
      %v1240 = vsel %vm1176, %v695, 0.0
      %v1241 = vsel %vm1177, %v700, 0.0
      %v1242 = vsel %vm1178, %v703, 0.0
      %v1243 = vsel %vm1179, %v708, 0.0
      %v1244 = vsel %vm1180, %v711, 0.0
      %v1245 = vsel %vm1181, %v716, 0.0
      %v1246 = vsel %vm1182, %v719, 0.0
      %v1247 = vsel %vm1183, %v724, 0.0
      %v1248 = vsel %vm1184, %v727, 0.0
      %v1249 = vsel %vm1185, %v732, 0.0
      %v1250 = vsel %vm1186, %v735, 0.0
      %v1251 = vsel %vm1187, %v740, 0.0
      %v1252 = vsel %vm1188, %v743, 0.0
      %v1253 = vsel %vm1189, %v748, 0.0
      %v1254 = vsel %vm1190, %v751, 0.0
      %v1255 = vsel %vm1191, %v756, 0.0
      %v1256 = vsel %vm1192, %v759, 0.0
      %v1257 = vsel %vm1193, %v764, 0.0
      %v1258 = vsel %vm1194, %v767, 0.0
      %v1259 = vsel %vm1195, %v772, 0.0
      %v1260 = vsel %vm1196, %v775, 0.0
      %v1261 = vsel %vm1197, %v780, 0.0
      %v1262 = vsel %vm1198, %v783, 0.0
      %v1263 = vsel %vm1199, %v788, 0.0
      %v1264 = vsel %vm1200, %v791, 0.0
      %v1265 = vsel %vm1201, %v796, 0.0
      %v1266 = vsel %vm1202, %v799, 0.0
      %v1267 = vsel %vm1203, %v804, 0.0
      %v1268 = vsel %vm1204, %v807, 0.0
      %v1269 = vsel %vm1205, %v812, 0.0
      %v1270 = vsel %vm1206, %v815, 0.0
      %v1271 = vsel %vm1207, %v820, 0.0
      %v1272 = vsel %vm1208, %v823, 0.0
      %v1273 = vsel %vm1209, %v828, 0.0
      %v1274 = vsel %vm1210, %v831, 0.0
      %v1275 = vsel %vm1211, %v836, 0.0
      %v1276 = vsel %vm1212, %v839, 0.0
      %v1277 = vsel %vm1213, %v844, 0.0
      %v1278 = vsel %vm1214, %v847, 0.0
      %v1279 = vsel %vm1215, %v852, 0.0
      %v1280 = vsel %vm1216, %v855, 0.0
      %v1281 = vsel %vm1217, %v860, 0.0
      %v1282 = vsel %vm1218, %v863, 0.0
      %v1283 = vsel %vm1219, %v868, 0.0
      %v1284 = vsel %vm1220, %v871, 0.0
      %v1285 = vsel %vm1221, %v876, 0.0
      %v1286 = vsel %vm1222, %v879, 0.0
      %v1287 = vsel %vm1223, %v884, 0.0
      %v1288 = vsel %vm1224, %v887, 0.0
      %v1289 = vsel %vm1225, %v892, 0.0
      %v1290 = vsel %vm1226, %v895, 0.0
      %v1291 = vsel %vm1227, %v900, 0.0
      %v1292 = vsel %vm1228, %v903, 0.0
      %1293 = vst [vmem:[%s248] sm:$0xff] %v1229
      %1294 = vst [vmem:[%s248 + $0x8] sm:$0xff] %v1230
      %1295 = vst [vmem:[%s248 + $0x10] sm:$0xff] %v1231
      %1296 = vst [vmem:[%s248 + $0x18] sm:$0xff] %v1232
      %1297 = vst [vmem:[%s248 + $0x20] sm:$0xff] %v1233
      %1298 = vst [vmem:[%s248 + $0x28] sm:$0xff] %v1234
      %1299 = vst [vmem:[%s248 + $0x30] sm:$0xff] %v1235
      %1300 = vst [vmem:[%s248 + $0x38] sm:$0xff] %v1236
      %1301 = vst [vmem:[%s248 + $0x40] sm:$0xff] %v1237
      %1302 = vst [vmem:[%s248 + $0x48] sm:$0xff] %v1238
      %1303 = vst [vmem:[%s248 + $0x50] sm:$0xff] %v1239
      %1304 = vst [vmem:[%s248 + $0x58] sm:$0xff] %v1240
      %1305 = vst [vmem:[%s248 + $0x60] sm:$0xff] %v1241
      %1306 = vst [vmem:[%s248 + $0x68] sm:$0xff] %v1242
      %1307 = vst [vmem:[%s248 + $0x70] sm:$0xff] %v1243
      %1308 = vst [vmem:[%s248 + $0x78] sm:$0xff] %v1244
      %1309 = vst [vmem:[%s248 + $0x80] sm:$0xff] %v1245
      %1310 = vst [vmem:[%s248 + $0x88] sm:$0xff] %v1246
      %1311 = vst [vmem:[%s248 + $0x90] sm:$0xff] %v1247
      %1312 = vst [vmem:[%s248 + $0x98] sm:$0xff] %v1248
      %1313 = vst [vmem:[%s248 + $0xa0] sm:$0xff] %v1249
      %1314 = vst [vmem:[%s248 + $0xa8] sm:$0xff] %v1250
      %1315 = vst [vmem:[%s248 + $0xb0] sm:$0xff] %v1251
      %1316 = vst [vmem:[%s248 + $0xb8] sm:$0xff] %v1252
      %1317 = vst [vmem:[%s248 + $0xc0] sm:$0xff] %v1253
      %1318 = vst [vmem:[%s248 + $0xc8] sm:$0xff] %v1254
      %1319 = vst [vmem:[%s248 + $0xd0] sm:$0xff] %v1255
      %1320 = vst [vmem:[%s248 + $0xd8] sm:$0xff] %v1256
      %1321 = vst [vmem:[%s248 + $0xe0] sm:$0xff] %v1257
      %1322 = vst [vmem:[%s248 + $0xe8] sm:$0xff] %v1258
      %1323 = vst [vmem:[%s248 + $0xf0] sm:$0xff] %v1259
      %1324 = vst [vmem:[%s248 + $0xf8] sm:$0xff] %v1260
      %1325 = vst [vmem:[%s248 + $0x100] sm:$0xff] %v1261
      %1326 = vst [vmem:[%s248 + $0x108] sm:$0xff] %v1262
      %1327 = vst [vmem:[%s248 + $0x110] sm:$0xff] %v1263
      %1328 = vst [vmem:[%s248 + $0x118] sm:$0xff] %v1264
      %1329 = vst [vmem:[%s248 + $0x120] sm:$0xff] %v1265
      %1330 = vst [vmem:[%s248 + $0x128] sm:$0xff] %v1266
      %1331 = vst [vmem:[%s248 + $0x130] sm:$0xff] %v1267
      %1332 = vst [vmem:[%s248 + $0x138] sm:$0xff] %v1268
      %1333 = vst [vmem:[%s248 + $0x140] sm:$0xff] %v1269
      %1334 = vst [vmem:[%s248 + $0x148] sm:$0xff] %v1270
      %1335 = vst [vmem:[%s248 + $0x150] sm:$0xff] %v1271
      %1336 = vst [vmem:[%s248 + $0x158] sm:$0xff] %v1272
      %1337 = vst [vmem:[%s248 + $0x160] sm:$0xff] %v1273
      %1338 = vst [vmem:[%s248 + $0x168] sm:$0xff] %v1274
      %1339 = vst [vmem:[%s248 + $0x170] sm:$0xff] %v1275
      %1340 = vst [vmem:[%s248 + $0x178] sm:$0xff] %v1276
      %1341 = vst [vmem:[%s248 + $0x180] sm:$0xff] %v1277
      %1342 = vst [vmem:[%s248 + $0x188] sm:$0xff] %v1278
      %1343 = vst [vmem:[%s248 + $0x190] sm:$0xff] %v1279
      %1344 = vst [vmem:[%s248 + $0x198] sm:$0xff] %v1280
      %1345 = vst [vmem:[%s248 + $0x1a0] sm:$0xff] %v1281
      %1346 = vst [vmem:[%s248 + $0x1a8] sm:$0xff] %v1282
      %1347 = vst [vmem:[%s248 + $0x1b0] sm:$0xff] %v1283
      %1348 = vst [vmem:[%s248 + $0x1b8] sm:$0xff] %v1284
      %1349 = vst [vmem:[%s248 + $0x1c0] sm:$0xff] %v1285
      %1350 = vst [vmem:[%s248 + $0x1c8] sm:$0xff] %v1286
      %1351 = vst [vmem:[%s248 + $0x1d0] sm:$0xff] %v1287
      %1352 = vst [vmem:[%s248 + $0x1d8] sm:$0xff] %v1288
      %1353 = vst [vmem:[%s248 + $0x1e0] sm:$0xff] %v1289
      %1354 = vst [vmem:[%s248 + $0x1e8] sm:$0xff] %v1290
      %1355 = vst [vmem:[%s248 + $0x1f0] sm:$0xff] %v1291
      %1356 = vst [vmem:[%s248 + $0x1f8] sm:$0xff] %v1292
      %p1357 = scmp.eq.s32.totalorder %s18, 0
      // Predicated region
      $region37: #{fcn_head_forward.4} parent=35 // pred_check
        %p1358 = pneg %p1357
      $region38: #{fcn_head_forward.4} parent=35 // pred_check_branch
        %1360 = sbr.rel (%p1358) target = $region40
      $region39: #{fcn_head_forward.4} parent=35 // pred_region
        %1361 = vst [vmem:[%s5] sm:$0x1] 0.0
        %1362 = vst [vmem:[%s6] sm:$0x1] 0.0
      $region40: #{fcn_head_forward.4} parent=35 // pred_fallthru
        _
      %v1363 = vld [vmem:[%s5] sm:$0x1]
      %v1364 = vadd.f32 %v1229, %v1230
      %v1365 = vadd.f32 %v1364, %v1231
      %v1366 = vadd.f32 %v1365, %v1232
      %v1367 = vadd.f32 %v1366, %v1233
      %v1368 = vadd.f32 %v1367, %v1234
      %v1369 = vadd.f32 %v1368, %v1235
      %v1370 = vadd.f32 %v1369, %v1236
      %v1371 = vadd.f32 %v1370, %v1237
      %v1372 = vadd.f32 %v1371, %v1238
      %v1373 = vadd.f32 %v1372, %v1239
      %v1374 = vadd.f32 %v1373, %v1240
      %v1375 = vadd.f32 %v1374, %v1241
      %v1376 = vadd.f32 %v1375, %v1242
      %v1377 = vadd.f32 %v1376, %v1243
      %v1378 = vadd.f32 %v1377, %v1244
      %v1379 = vadd.f32 %v1378, %v1245
      %v1380 = vadd.f32 %v1379, %v1246
      %v1381 = vadd.f32 %v1380, %v1247
      %v1382 = vadd.f32 %v1381, %v1248
      %v1383 = vadd.f32 %v1382, %v1249
      %v1384 = vadd.f32 %v1383, %v1250
      %v1385 = vadd.f32 %v1384, %v1251
      %v1386 = vadd.f32 %v1385, %v1252
      %v1387 = vadd.f32 %v1386, %v1253
      %v1388 = vadd.f32 %v1387, %v1254
      %v1389 = vadd.f32 %v1388, %v1255
      %v1390 = vadd.f32 %v1389, %v1256
      %v1391 = vadd.f32 %v1390, %v1257
      %v1392 = vadd.f32 %v1391, %v1258
      %v1393 = vadd.f32 %v1392, %v1259
      %v1394 = vadd.f32 %v1393, %v1260
      %v1395 = vadd.f32 %v1394, %v1261
      %v1396 = vadd.f32 %v1395, %v1262
      %v1397 = vadd.f32 %v1396, %v1263
      %v1398 = vadd.f32 %v1397, %v1264
      %v1399 = vadd.f32 %v1398, %v1265
      %v1400 = vadd.f32 %v1399, %v1266
      %v1401 = vadd.f32 %v1400, %v1267
      %v1402 = vadd.f32 %v1401, %v1268
      %v1403 = vadd.f32 %v1402, %v1269
      %v1404 = vadd.f32 %v1403, %v1270
      %v1405 = vadd.f32 %v1404, %v1271
      %v1406 = vadd.f32 %v1405, %v1272
      %v1407 = vadd.f32 %v1406, %v1273
      %v1408 = vadd.f32 %v1407, %v1274
      %v1409 = vadd.f32 %v1408, %v1275
      %v1410 = vadd.f32 %v1409, %v1276
      %v1411 = vadd.f32 %v1410, %v1277
      %v1412 = vadd.f32 %v1411, %v1278
      %v1413 = vadd.f32 %v1412, %v1279
      %v1414 = vadd.f32 %v1413, %v1280
      %v1415 = vadd.f32 %v1414, %v1281
      %v1416 = vadd.f32 %v1415, %v1282
      %v1417 = vadd.f32 %v1416, %v1283
      %v1418 = vadd.f32 %v1417, %v1284
      %v1419 = vadd.f32 %v1418, %v1285
      %v1420 = vadd.f32 %v1419, %v1286
      %v1421 = vadd.f32 %v1420, %v1287
      %v1422 = vadd.f32 %v1421, %v1288
      %v1423 = vadd.f32 %v1422, %v1289
      %v1424 = vadd.f32 %v1423, %v1290
      %v1425 = vadd.f32 %v1424, %v1291
      %v1426 = vadd.f32 %v1425, %v1292
      %v1427 = vrot.slane %v1426, 4
      %v1428 = vadd.f32 %v1426, %v1427
      %v1429 = vrot.slane %v1428, 2
      %v1430 = vadd.f32 %v1428, %v1429
      %v1431 = vrot.slane %v1430, 1
      %v1432 = vadd.f32 %v1430, %v1431
      %v1433 = vadd.f32 %v1363, %v1432
      %1434 = vst [vmem:[%s5] sm:$0x1] %v1433
      %v1435 = vld [vmem:[%s6] sm:$0x1]
      %v1436 = vmul.f32 %v1229, %v1229
      %v1437 = vmul.f32 %v1230, %v1230
      %v1438 = vmul.f32 %v1231, %v1231
      %v1439 = vmul.f32 %v1232, %v1232
      %v1440 = vmul.f32 %v1233, %v1233
      %v1441 = vmul.f32 %v1234, %v1234
      %v1442 = vmul.f32 %v1235, %v1235
      %v1443 = vmul.f32 %v1236, %v1236
      %v1444 = vmul.f32 %v1237, %v1237
      %v1445 = vmul.f32 %v1238, %v1238
      %v1446 = vmul.f32 %v1239, %v1239
      %v1447 = vmul.f32 %v1240, %v1240
      %v1448 = vmul.f32 %v1241, %v1241
      %v1449 = vmul.f32 %v1242, %v1242
      %v1450 = vmul.f32 %v1243, %v1243
      %v1451 = vmul.f32 %v1244, %v1244
      %v1452 = vmul.f32 %v1245, %v1245
      %v1453 = vmul.f32 %v1246, %v1246
      %v1454 = vmul.f32 %v1247, %v1247
      %v1455 = vmul.f32 %v1248, %v1248
      %v1456 = vmul.f32 %v1249, %v1249
      %v1457 = vmul.f32 %v1250, %v1250
      %v1458 = vmul.f32 %v1251, %v1251
      %v1459 = vmul.f32 %v1252, %v1252
      %v1460 = vmul.f32 %v1253, %v1253
      %v1461 = vmul.f32 %v1254, %v1254
      %v1462 = vmul.f32 %v1255, %v1255
      %v1463 = vmul.f32 %v1256, %v1256
      %v1464 = vmul.f32 %v1257, %v1257
      %v1465 = vmul.f32 %v1258, %v1258
      %v1466 = vmul.f32 %v1259, %v1259
      %v1467 = vmul.f32 %v1260, %v1260
      %v1468 = vmul.f32 %v1261, %v1261
      %v1469 = vmul.f32 %v1262, %v1262
      %v1470 = vmul.f32 %v1263, %v1263
      %v1471 = vmul.f32 %v1264, %v1264
      %v1472 = vmul.f32 %v1265, %v1265
      %v1473 = vmul.f32 %v1266, %v1266
      %v1474 = vmul.f32 %v1267, %v1267
      %v1475 = vmul.f32 %v1268, %v1268
      %v1476 = vmul.f32 %v1269, %v1269
      %v1477 = vmul.f32 %v1270, %v1270
      %v1478 = vmul.f32 %v1271, %v1271
      %v1479 = vmul.f32 %v1272, %v1272
      %v1480 = vmul.f32 %v1273, %v1273
      %v1481 = vmul.f32 %v1274, %v1274
      %v1482 = vmul.f32 %v1275, %v1275
      %v1483 = vmul.f32 %v1276, %v1276
      %v1484 = vmul.f32 %v1277, %v1277
      %v1485 = vmul.f32 %v1278, %v1278
      %v1486 = vmul.f32 %v1279, %v1279
      %v1487 = vmul.f32 %v1280, %v1280
      %v1488 = vmul.f32 %v1281, %v1281
      %v1489 = vmul.f32 %v1282, %v1282
      %v1490 = vmul.f32 %v1283, %v1283
      %v1491 = vmul.f32 %v1284, %v1284
      %v1492 = vmul.f32 %v1285, %v1285
      %v1493 = vmul.f32 %v1286, %v1286
      %v1494 = vmul.f32 %v1287, %v1287
      %v1495 = vmul.f32 %v1288, %v1288
      %v1496 = vmul.f32 %v1289, %v1289
      %v1497 = vmul.f32 %v1290, %v1290
      %v1498 = vmul.f32 %v1291, %v1291
      %v1499 = vmul.f32 %v1292, %v1292
      %v1500 = vadd.f32 %v1436, %v1437
      %v1501 = vadd.f32 %v1500, %v1438
      %v1502 = vadd.f32 %v1501, %v1439
      %v1503 = vadd.f32 %v1502, %v1440
      %v1504 = vadd.f32 %v1503, %v1441
      %v1505 = vadd.f32 %v1504, %v1442
      %v1506 = vadd.f32 %v1505, %v1443
      %v1507 = vadd.f32 %v1506, %v1444
      %v1508 = vadd.f32 %v1507, %v1445
      %v1509 = vadd.f32 %v1508, %v1446
      %v1510 = vadd.f32 %v1509, %v1447
      %v1511 = vadd.f32 %v1510, %v1448
      %v1512 = vadd.f32 %v1511, %v1449
      %v1513 = vadd.f32 %v1512, %v1450
      %v1514 = vadd.f32 %v1513, %v1451
      %v1515 = vadd.f32 %v1514, %v1452
      %v1516 = vadd.f32 %v1515, %v1453
      %v1517 = vadd.f32 %v1516, %v1454
      %v1518 = vadd.f32 %v1517, %v1455
      %v1519 = vadd.f32 %v1518, %v1456
      %v1520 = vadd.f32 %v1519, %v1457
      %v1521 = vadd.f32 %v1520, %v1458
      %v1522 = vadd.f32 %v1521, %v1459
      %v1523 = vadd.f32 %v1522, %v1460
      %v1524 = vadd.f32 %v1523, %v1461
      %v1525 = vadd.f32 %v1524, %v1462
      %v1526 = vadd.f32 %v1525, %v1463
      %v1527 = vadd.f32 %v1526, %v1464
      %v1528 = vadd.f32 %v1527, %v1465
      %v1529 = vadd.f32 %v1528, %v1466
      %v1530 = vadd.f32 %v1529, %v1467
      %v1531 = vadd.f32 %v1530, %v1468
      %v1532 = vadd.f32 %v1531, %v1469
      %v1533 = vadd.f32 %v1532, %v1470
      %v1534 = vadd.f32 %v1533, %v1471
      %v1535 = vadd.f32 %v1534, %v1472
      %v1536 = vadd.f32 %v1535, %v1473
      %v1537 = vadd.f32 %v1536, %v1474
      %v1538 = vadd.f32 %v1537, %v1475
      %v1539 = vadd.f32 %v1538, %v1476
      %v1540 = vadd.f32 %v1539, %v1477
      %v1541 = vadd.f32 %v1540, %v1478
      %v1542 = vadd.f32 %v1541, %v1479
      %v1543 = vadd.f32 %v1542, %v1480
      %v1544 = vadd.f32 %v1543, %v1481
      %v1545 = vadd.f32 %v1544, %v1482
      %v1546 = vadd.f32 %v1545, %v1483
      %v1547 = vadd.f32 %v1546, %v1484
      %v1548 = vadd.f32 %v1547, %v1485
      %v1549 = vadd.f32 %v1548, %v1486
      %v1550 = vadd.f32 %v1549, %v1487
      %v1551 = vadd.f32 %v1550, %v1488
      %v1552 = vadd.f32 %v1551, %v1489
      %v1553 = vadd.f32 %v1552, %v1490
      %v1554 = vadd.f32 %v1553, %v1491
      %v1555 = vadd.f32 %v1554, %v1492
      %v1556 = vadd.f32 %v1555, %v1493
      %v1557 = vadd.f32 %v1556, %v1494
      %v1558 = vadd.f32 %v1557, %v1495
      %v1559 = vadd.f32 %v1558, %v1496
      %v1560 = vadd.f32 %v1559, %v1497
      %v1561 = vadd.f32 %v1560, %v1498
      %v1562 = vadd.f32 %v1561, %v1499
      %v1563 = vrot.slane %v1562, 4
      %v1564 = vadd.f32 %v1562, %v1563
      %v1565 = vrot.slane %v1564, 2
      %v1566 = vadd.f32 %v1564, %v1565
      %v1567 = vrot.slane %v1566, 1
      %v1568 = vadd.f32 %v1566, %v1567
      %v1569 = vadd.f32 %v1435, %v1568
      %1570 = vst [vmem:[%s6] sm:$0x1] %v1569
      %s1571 = smul.u32 64, %s18
      %p1572 = scmp.lt.s32.totalorder %s1571, 127
      %s1573 = scalar_select %p1572, %s1571, 127
      %s1574 = smul.addr %s1573, 8
      %s1575 = scalar_lea.vmem %s4, %s1574
      // Predicated region
      $region41: #{fcn_head_forward.4} parent=35 // pred_check
        %p1576 = pneg %p125
      $region42: #{fcn_head_forward.4} parent=35 // pred_check_branch
        %1578 = sbr.rel (%p1576) target = $region44
      $region43: #{fcn_head_forward.4} parent=35 // pred_region
        %s1579 = smul.u32 64, %s18
      $region44: #{fcn_head_forward.4} parent=35 // pred_fallthru
        _
      // Predicated region
      $region45: #{fcn_head_forward.4} parent=35 // pred_check
        %p1580 = pneg %p146
      $region46: #{fcn_head_forward.4} parent=35 // pred_check_branch
        %1582 = sbr.rel (%p1580) target = $region48
      $region47: #{fcn_head_forward.4} parent=35 // pred_region
        _
      $region48: #{fcn_head_forward.4} parent=35 // pred_fallthru
        _
      // Predicated region
      $region49: #{fcn_head_forward.4} parent=35 // pred_check
        %p1583 = pneg %p167
      $region50: #{fcn_head_forward.4} parent=35 // pred_check_branch
        %1585 = sbr.rel (%p1583) target = $region52
      $region51: #{fcn_head_forward.4} parent=35 // pred_region
        _
      $region52: #{fcn_head_forward.4} parent=35 // pred_fallthru
        _
      // Predicated region
      $region53: #{fcn_head_forward.4} parent=35 // pred_check
        %p1586 = pneg %p146
      $region54: #{fcn_head_forward.4} parent=35 // pred_check_branch
        %1588 = sbr.rel (%p1586) target = $region56
      $region55: #{fcn_head_forward.4} parent=35 // pred_region
        _
      $region56: #{fcn_head_forward.4} parent=35 // pred_fallthru
        _
      // Predicated region
      $region57: #{fcn_head_forward.4} parent=35 // pred_check
        %p1589 = pneg %p167
      $region58: #{fcn_head_forward.4} parent=35 // pred_check_branch
        %1591 = sbr.rel (%p1589) target = $region60
      $region59: #{fcn_head_forward.4} parent=35 // pred_region
        _
      $region60: #{fcn_head_forward.4} parent=35 // pred_fallthru
        _
    $region36: #{fcn_head_forward.4} parent=5 // pred_fallthru
      _
    %p1592 = scmp.le.s32.totalorder 2, %s13
    // Predicated region
    $region61: #{fcn_head_forward.4} parent=5 // pred_check
      %p1593 = pneg %p1592
    $region62: #{fcn_head_forward.4} parent=5 // pred_check_branch
      %1595 = sbr.rel (%p1593) target = $region64
    $region63: #{fcn_head_forward.4} parent=5 // pred_region
      %s1596 = ssub.s32 %s13, 2
      // Predicated region
      $region65: #{fcn_head_forward.4} parent=63 // pred_check
        %p1597 = pneg %p131
      $region66: #{fcn_head_forward.4} parent=63 // pred_check_branch
        %1599 = sbr.rel (%p1597) target = $region68
      $region67: #{fcn_head_forward.4} parent=63 // pred_region
        %s1600 = smul.u32 64, %s19
        %p1601 = scmp.lt.s32.totalorder %s1600, 127
        %s1602 = scalar_select %p1601, %s1600, 127
        %s1603 = smul.addr %s1602, 8
        %s1604 = scalar_lea.vmem %s4, %s1603
      $region68: #{fcn_head_forward.4} parent=63 // pred_fallthru
        _
    $region64: #{fcn_head_forward.4} parent=5 // pred_fallthru
      _
  $region6: #{fcn_head_forward.4} parent=0 // loop_footer
    %s17 = sadd.s32 1, %s13
  $region7: #{fcn_head_forward.4} parent=0 // loop_footer_branch
    %12 = sbr.rel target = $region3
  $region8: #{fcn_head_forward.4} parent=0 // loop_exit
    _

</llo_original>
